<compile_context>
chip_gen: v7x
topology: tpu7x:2x2x1
jax: 0.10.0
libtpu: 0.0.40
codegen_flags: <defaults>
</compile_context>

<pallas_src>
import functools

import jax
import jax.numpy as jnp
from jax.experimental import pallas as pl
from jax.experimental.pallas import tpu as pltpu

EPS = 1e-5
_INV_SQRT2 = 0.7071067811865476


def _erf(z):
    """Abramowitz & Stegun 7.1.26 erf approximation (max abs err 1.5e-7).

    Only exp / mul / add / div / where, so it lowers on every Mosaic version;
    the resulting GELU error is < 1e-6, far inside the test tolerance."""
    p = 0.3275911
    a1, a2, a3, a4, a5 = (0.254829592, -0.284496736, 1.421413741,
                          -1.453152027, 1.061405429)
    az = jnp.abs(z)
    t = 1.0 / (1.0 + p * az)
    poly = ((((a5 * t + a4) * t + a3) * t + a2) * t + a1) * t
    e = 1.0 - poly * jnp.exp(-az * az)
    return jnp.where(z < 0.0, -e, e)


def _instnorm_gelu(h):
    """h: (C, HW) f32. InstanceNorm over the spatial (lane) axis — single-pass
    sum / sum-of-squares, biased variance — then exact-erf GELU."""
    inv_hw = 1.0 / h.shape[-1]
    s = jnp.sum(h, axis=-1, keepdims=True)          # (C, 1)  XLU reduce
    ss = jnp.sum(h * h, axis=-1, keepdims=True)     # (C, 1)
    mean = s * inv_hw
    var = jnp.maximum(ss * inv_hw - mean * mean, 0.0)
    inv_std = jax.lax.rsqrt(var + EPS)              # EUP
    hn = (h - mean) * inv_std
    return 0.5 * hn * (1.0 + _erf(hn * _INV_SQRT2))


def decoder_kernel(x_ref, w12, b12, w34, b34, w56, b56, x2_ref, x6_ref):
    # x_ref: (C_in, HW); w*: (Cout, Cin); b*: (Cout, 1); outputs: (C, HW)
    x = x_ref[...]
    h = jnp.dot(w12[...], x, preferred_element_type=jnp.float32) + b12[...]
    x2 = _instnorm_gelu(h)                     # conv1∘conv2 (folded) -> IN -> GELU
    x2_ref[...] = x2.astype(x2_ref.dtype)
    h = jnp.dot(w34[...], x2, preferred_element_type=jnp.float32) + b34[...]
    x4 = _instnorm_gelu(h)                     # conv3∘conv4 (folded) -> IN -> GELU
    h = jnp.dot(w56[...], x4, preferred_element_type=jnp.float32) + b56[...]
    x6_ref[...] = _instnorm_gelu(h).astype(x6_ref.dtype)  # conv5∘conv6 (folded)


def decoder_forward(x_nchw, params):
    """x_nchw: (N, C_in, H, W) float32.  Returns (x2, x6) in NCHW."""
    N, C_in, H, W = x_nchw.shape
    HW = H * W                                  # 256 here -> lane-dense stores
    x = x_nchw.reshape(N, C_in, HW)             # free reshape, no transpose

    (w1, b1), (w2, b2), (w3, b3), (w4, b4), (w5, b5), (w6, b6) = params
    # Fold the linear conv pairs: (xW1+b1)W2+b2 = x(W1W2) + (b1W2+b2).
    # One-time cost, constant-folded under jit when params are closed over.
    w12, b12 = w1 @ w2, b1 @ w2 + b2
    w34, b34 = w3 @ w4, b3 @ w4 + b4
    w56, b56 = w5 @ w6, b5 @ w6 + b6
    # Kernel is channels-first: y = W.T @ x + b_col.
    w12_t, b12_c = w12.T, b12.reshape(-1, 1)
    w34_t, b34_c = w34.T, b34.reshape(-1, 1)
    w56_t, b56_c = w56.T, b56.reshape(-1, 1)

    c2 = w12.shape[1]
    c6 = w56.shape[1]

    def full(a):
        # Grid-invariant whole-array block (block shape == full shape).
        return pl.BlockSpec(a.shape, lambda n: (0, 0))

    x2, x6 = pl.pallas_call(
        decoder_kernel,
        out_shape=(
            jax.ShapeDtypeStruct((N, c2, HW), jnp.float32),
            jax.ShapeDtypeStruct((N, c6, HW), jnp.float32),
        ),
        grid_spec=pltpu.PrefetchScalarGridSpec(
            num_scalar_prefetch=0,
            grid=(N,),
            in_specs=[
                pl.BlockSpec((None, C_in, HW), lambda n: (n, 0, 0)),
                full(w12_t), full(b12_c),
                full(w34_t), full(b34_c),
                full(w56_t), full(b56_c),
            ],
            out_specs=(
                pl.BlockSpec((None, c2, HW), lambda n: (n, 0, 0)),
                pl.BlockSpec((None, c6, HW), lambda n: (n, 0, 0)),
            ),
        ),
        compiler_params=pltpu.CompilerParams(
            dimension_semantics=("parallel",)),
    )(x, w12_t, b12_c, w34_t, b34_c, w56_t, b56_c)

    # (N, C, HW) -> NCHW: free reshapes, no transposes.
    return x2.reshape(N, c2, H, W), x6.reshape(N, c6, H, W)


def make_params(key, in_channel=32, out_channel=200):
    """Deterministic synthetic weights.  Weight stored as (Cin, Cout) = W.T."""
    dims = [(in_channel, 64), (64, 64), (64, 128), (128, 128),
            (128, out_channel), (out_channel, out_channel)]
    params = []
    for cin, cout in dims:
        kw, kb, key = jax.random.split(key, 3)
        scale = 1.0 / jnp.sqrt(jnp.float32(cin))
        w = jax.random.uniform(kw, (cin, cout), jnp.float32, -scale, scale)
        b = jax.random.uniform(kb, (1, cout), jnp.float32, -scale, scale)
        params.append((w, b))
    return params


def decoder_reference(x_nchw, params):
    """Pure-JAX reference matching the PyTorch forward (unfused, two-pass IN,
    exact-erf GELU)."""
    N, C, H, W = x_nchw.shape
    h = jnp.transpose(x_nchw, (0, 2, 3, 1)).reshape(N, H * W, C)

    def conv(h, w, b):
        return jnp.einsum('nsc,cd->nsd', h, w) + b

    def in_gelu(h):
        mean = jnp.mean(h, axis=1, keepdims=True)
        var = jnp.mean((h - mean) ** 2, axis=1, keepdims=True)
        hn = (h - mean) / jnp.sqrt(var + EPS)
        return jax.nn.gelu(hn, approximate=False)

    (w1, b1), (w2, b2), (w3, b3), (w4, b4), (w5, b5), (w6, b6) = params
    x1 = conv(h, w1, b1)
    x2 = in_gelu(conv(x1, w2, b2))
    x3 = conv(x2, w3, b3)
    x4 = in_gelu(conv(x3, w4, b4))
    x5 = conv(x4, w5, b5)
    x6 = in_gelu(conv(x5, w6, b6))

    def to_nchw(a):
        c = a.shape[-1]
        return jnp.transpose(a.reshape(N, H, W, c), (0, 3, 1, 2))

    return to_nchw(x2), to_nchw(x6)


if __name__ == "__main__":
    key = jax.random.PRNGKey(0)
    kx, kp = jax.random.split(key)

    N, C_in, H, W = 2, 32, 16, 16
    x = jax.random.normal(kx, (N, C_in, H, W), jnp.float32)
    params = make_params(kp, in_channel=C_in, out_channel=200)

    x2, x6 = jax.jit(functools.partial(decoder_forward, params=params))(x)
    jax.block_until_ready((x2, x6))

    r2, r6 = decoder_reference(x, params)
    assert x2.shape == (N, 64, H, W) and x6.shape == (N, 200, H, W)
    assert jnp.allclose(x2, r2, atol=2e-4, rtol=2e-4)
    assert jnp.allclose(x6, r6, atol=2e-4, rtol=2e-4)

    print("KERNEL_OK")
</pallas_src>

<mosaic_0001>
module attributes {stable_mosaic.version = 11 : i64} {
  func.func @decoder_kernel(%arg0: i32, %arg1: memref<1x32x256xf32, #tpu.memory_space<vmem>>, %arg2: memref<64x32xf32, #tpu.memory_space<vmem>>, %arg3: memref<64x1xf32, #tpu.memory_space<vmem>>, %arg4: memref<128x64xf32, #tpu.memory_space<vmem>>, %arg5: memref<128x1xf32, #tpu.memory_space<vmem>>, %arg6: memref<200x128xf32, #tpu.memory_space<vmem>>, %arg7: memref<200x1xf32, #tpu.memory_space<vmem>>, %arg8: memref<1x64x256xf32, #tpu.memory_space<vmem>>, %arg9: memref<1x200x256xf32, #tpu.memory_space<vmem>>) attributes {dimension_semantics = [#tpu.dimension_semantics<parallel>], iteration_bounds = array<i64: 2>, scalar_prefetch = 0 : i64, scratch_operands = 0 : i64, tpu.core_type = #tpu.core_type<tc>, window_params = [{transform_indices = @transform_0, window_bounds = array<i64: 1, 32, 256>}, {pipeline_mode = #tpu.pipeline_mode<synchronous>, transform_indices = @transform_1, window_bounds = array<i64: 64, 32>}, {pipeline_mode = #tpu.pipeline_mode<synchronous>, transform_indices = @transform_2, window_bounds = array<i64: 64, 1>}, {pipeline_mode = #tpu.pipeline_mode<synchronous>, transform_indices = @transform_3, window_bounds = array<i64: 128, 64>}, {pipeline_mode = #tpu.pipeline_mode<synchronous>, transform_indices = @transform_4, window_bounds = array<i64: 128, 1>}, {pipeline_mode = #tpu.pipeline_mode<synchronous>, transform_indices = @transform_5, window_bounds = array<i64: 200, 128>}, {pipeline_mode = #tpu.pipeline_mode<synchronous>, transform_indices = @transform_6, window_bounds = array<i64: 200, 1>}, {transform_indices = @transform_7, window_bounds = array<i64: 1, 64, 256>}, {transform_indices = @transform_8, window_bounds = array<i64: 1, 200, 256>}]} {
    %c0 = arith.constant 0 : index
    %c0_0 = arith.constant 0 : index
    %c0_1 = arith.constant 0 : index
    %0 = vector.load %arg1[%c0, %c0_0, %c0_1] : memref<1x32x256xf32, #tpu.memory_space<vmem>>, vector<1x32x256xf32>
    %1 = vector.shape_cast %0 : vector<1x32x256xf32> to vector<32x256xf32>
    %c0_2 = arith.constant 0 : index
    %c0_3 = arith.constant 0 : index
    %2 = vector.load %arg2[%c0_2, %c0_3] : memref<64x32xf32, #tpu.memory_space<vmem>>, vector<64x32xf32>
    %cst = arith.constant dense<0.000000e+00> : vector<64x256xf32>
    %3 = tpu.matmul %2, %1, %cst {dimension_numbers = #tpu.dot_dimension_numbers<[1], [0], [0], [1], [0, 0, 1, 1], [], []>} : vector<64x32xf32>, vector<32x256xf32>, vector<64x256xf32> -> vector<64x256xf32>
    %c0_4 = arith.constant 0 : index
    %c0_5 = arith.constant 0 : index
    %4 = vector.load %arg3[%c0_4, %c0_5] : memref<64x1xf32, #tpu.memory_space<vmem>>, vector<64x1xf32>
    %5 = vector.broadcast %4 : vector<64x1xf32> to vector<64x256xf32>
    %6 = arith.addf %3, %5 : vector<64x256xf32>
    %cst_6 = arith.constant dense<0.000000e+00> : vector<64xf32>
    %7 = vector.multi_reduction <add>, %6, %cst_6 [1] : vector<64x256xf32> to vector<64xf32>
    %8 = vector.shape_cast %7 : vector<64xf32> to vector<64x1xf32>
    %9 = arith.mulf %6, %6 : vector<64x256xf32>
    %cst_7 = arith.constant dense<0.000000e+00> : vector<64xf32>
    %10 = vector.multi_reduction <add>, %9, %cst_7 [1] : vector<64x256xf32> to vector<64xf32>
    %11 = vector.shape_cast %10 : vector<64xf32> to vector<64x1xf32>
    %cst_8 = arith.constant 3.906250e-03 : f32
    %12 = vector.broadcast %cst_8 : f32 to vector<64x1xf32>
    %13 = arith.mulf %8, %12 : vector<64x1xf32>
    %cst_9 = arith.constant 3.906250e-03 : f32
    %14 = vector.broadcast %cst_9 : f32 to vector<64x1xf32>
    %15 = arith.mulf %11, %14 : vector<64x1xf32>
    %16 = arith.mulf %13, %13 : vector<64x1xf32>
    %17 = arith.subf %15, %16 : vector<64x1xf32>
    %cst_10 = arith.constant 0.000000e+00 : f32
    %18 = vector.broadcast %cst_10 : f32 to vector<64x1xf32>
    %19 = arith.maximumf %17, %18 : vector<64x1xf32>
    %cst_11 = arith.constant 9.99999974E-6 : f32
    %20 = vector.broadcast %cst_11 : f32 to vector<64x1xf32>
    %21 = arith.addf %19, %20 : vector<64x1xf32>
    %22 = math.rsqrt %21 : vector<64x1xf32>
    %23 = vector.broadcast %13 : vector<64x1xf32> to vector<64x256xf32>
    %24 = arith.subf %6, %23 : vector<64x256xf32>
    %25 = vector.broadcast %22 : vector<64x1xf32> to vector<64x256xf32>
    %26 = arith.mulf %24, %25 : vector<64x256xf32>
    %cst_12 = arith.constant 5.000000e-01 : f32
    %27 = vector.broadcast %cst_12 : f32 to vector<64x256xf32>
    %28 = arith.mulf %27, %26 : vector<64x256xf32>
    %cst_13 = arith.constant 0.707106769 : f32
    %29 = vector.broadcast %cst_13 : f32 to vector<64x256xf32>
    %30 = arith.mulf %26, %29 : vector<64x256xf32>
    %31 = math.absf %30 : vector<64x256xf32>
    %cst_14 = arith.constant 0.327591091 : f32
    %32 = vector.broadcast %cst_14 : f32 to vector<64x256xf32>
    %33 = arith.mulf %32, %31 : vector<64x256xf32>
    %cst_15 = arith.constant 1.000000e+00 : f32
    %34 = vector.broadcast %cst_15 : f32 to vector<64x256xf32>
    %35 = arith.addf %34, %33 : vector<64x256xf32>
    %cst_16 = arith.constant 1.000000e+00 : f32
    %36 = vector.broadcast %cst_16 : f32 to vector<64x256xf32>
    %37 = arith.divf %36, %35 : vector<64x256xf32>
    %cst_17 = arith.constant 1.06140542 : f32
    %38 = vector.broadcast %cst_17 : f32 to vector<64x256xf32>
    %39 = arith.mulf %38, %37 : vector<64x256xf32>
    %cst_18 = arith.constant -1.45315206 : f32
    %40 = vector.broadcast %cst_18 : f32 to vector<64x256xf32>
    %41 = arith.addf %39, %40 : vector<64x256xf32>
    %42 = arith.mulf %41, %37 : vector<64x256xf32>
    %cst_19 = arith.constant 1.42141378 : f32
    %43 = vector.broadcast %cst_19 : f32 to vector<64x256xf32>
    %44 = arith.addf %42, %43 : vector<64x256xf32>
    %45 = arith.mulf %44, %37 : vector<64x256xf32>
    %cst_20 = arith.constant -0.284496725 : f32
    %46 = vector.broadcast %cst_20 : f32 to vector<64x256xf32>
    %47 = arith.addf %45, %46 : vector<64x256xf32>
    %48 = arith.mulf %47, %37 : vector<64x256xf32>
    %cst_21 = arith.constant 0.254829586 : f32
    %49 = vector.broadcast %cst_21 : f32 to vector<64x256xf32>
    %50 = arith.addf %48, %49 : vector<64x256xf32>
    %51 = arith.mulf %50, %37 : vector<64x256xf32>
    %cst_22 = arith.constant 0.000000e+00 : f32
    %52 = vector.broadcast %cst_22 : f32 to vector<64x256xf32>
    %53 = arith.subf %52, %31 : vector<64x256xf32>
    %54 = arith.mulf %53, %31 : vector<64x256xf32>
    %55 = math.exp %54 : vector<64x256xf32>
    %56 = arith.mulf %51, %55 : vector<64x256xf32>
    %cst_23 = arith.constant 1.000000e+00 : f32
    %57 = vector.broadcast %cst_23 : f32 to vector<64x256xf32>
    %58 = arith.subf %57, %56 : vector<64x256xf32>
    %cst_24 = arith.constant 0.000000e+00 : f32
    %59 = vector.broadcast %cst_24 : f32 to vector<64x256xf32>
    %60 = arith.cmpf olt, %30, %59 : vector<64x256xf32>
    %cst_25 = arith.constant 0.000000e+00 : f32
    %61 = vector.broadcast %cst_25 : f32 to vector<64x256xf32>
    %62 = arith.subf %61, %58 : vector<64x256xf32>
    %63 = arith.select %60, %62, %58 : vector<64x256xi1>, vector<64x256xf32>
    %cst_26 = arith.constant 1.000000e+00 : f32
    %64 = vector.broadcast %cst_26 : f32 to vector<64x256xf32>
    %65 = arith.addf %64, %63 : vector<64x256xf32>
    %66 = arith.mulf %28, %65 : vector<64x256xf32>
    %c0_27 = arith.constant 0 : index
    %c0_28 = arith.constant 0 : index
    %c0_29 = arith.constant 0 : index
    %67 = vector.load %arg8[%c0_27, %c0_28, %c0_29] : memref<1x64x256xf32, #tpu.memory_space<vmem>>, vector<1x64x256xf32>
    %68 = vector.shape_cast %67 : vector<1x64x256xf32> to vector<64x256xf32>
    %69 = vector.shape_cast %66 : vector<64x256xf32> to vector<1x64x256xf32>
    tpu.vector_store %arg8[%c0_27, %c0_28, %c0_29], %69 {strides = array<i32>} : memref<1x64x256xf32, #tpu.memory_space<vmem>>, vector<1x64x256xf32>,
    %c0_30 = arith.constant 0 : index
    %c0_31 = arith.constant 0 : index
    %70 = vector.load %arg4[%c0_30, %c0_31] : memref<128x64xf32, #tpu.memory_space<vmem>>, vector<128x64xf32>
    %cst_32 = arith.constant dense<0.000000e+00> : vector<128x256xf32>
    %71 = tpu.matmul %70, %66, %cst_32 {dimension_numbers = #tpu.dot_dimension_numbers<[1], [0], [0], [1], [0, 0, 1, 1], [], []>} : vector<128x64xf32>, vector<64x256xf32>, vector<128x256xf32> -> vector<128x256xf32>
    %c0_33 = arith.constant 0 : index
    %c0_34 = arith.constant 0 : index
    %72 = vector.load %arg5[%c0_33, %c0_34] : memref<128x1xf32, #tpu.memory_space<vmem>>, vector<128x1xf32>
    %73 = vector.broadcast %72 : vector<128x1xf32> to vector<128x256xf32>
    %74 = arith.addf %71, %73 : vector<128x256xf32>
    %cst_35 = arith.constant dense<0.000000e+00> : vector<128xf32>
    %75 = vector.multi_reduction <add>, %74, %cst_35 [1] : vector<128x256xf32> to vector<128xf32>
    %76 = vector.shape_cast %75 : vector<128xf32> to vector<128x1xf32>
    %77 = arith.mulf %74, %74 : vector<128x256xf32>
    %cst_36 = arith.constant dense<0.000000e+00> : vector<128xf32>
    %78 = vector.multi_reduction <add>, %77, %cst_36 [1] : vector<128x256xf32> to vector<128xf32>
    %79 = vector.shape_cast %78 : vector<128xf32> to vector<128x1xf32>
    %cst_37 = arith.constant 3.906250e-03 : f32
    %80 = vector.broadcast %cst_37 : f32 to vector<128x1xf32>
    %81 = arith.mulf %76, %80 : vector<128x1xf32>
    %cst_38 = arith.constant 3.906250e-03 : f32
    %82 = vector.broadcast %cst_38 : f32 to vector<128x1xf32>
    %83 = arith.mulf %79, %82 : vector<128x1xf32>
    %84 = arith.mulf %81, %81 : vector<128x1xf32>
    %85 = arith.subf %83, %84 : vector<128x1xf32>
    %cst_39 = arith.constant 0.000000e+00 : f32
    %86 = vector.broadcast %cst_39 : f32 to vector<128x1xf32>
    %87 = arith.maximumf %85, %86 : vector<128x1xf32>
    %cst_40 = arith.constant 9.99999974E-6 : f32
    %88 = vector.broadcast %cst_40 : f32 to vector<128x1xf32>
    %89 = arith.addf %87, %88 : vector<128x1xf32>
    %90 = math.rsqrt %89 : vector<128x1xf32>
    %91 = vector.broadcast %81 : vector<128x1xf32> to vector<128x256xf32>
    %92 = arith.subf %74, %91 : vector<128x256xf32>
    %93 = vector.broadcast %90 : vector<128x1xf32> to vector<128x256xf32>
    %94 = arith.mulf %92, %93 : vector<128x256xf32>
    %cst_41 = arith.constant 5.000000e-01 : f32
    %95 = vector.broadcast %cst_41 : f32 to vector<128x256xf32>
    %96 = arith.mulf %95, %94 : vector<128x256xf32>
    %cst_42 = arith.constant 0.707106769 : f32
    %97 = vector.broadcast %cst_42 : f32 to vector<128x256xf32>
    %98 = arith.mulf %94, %97 : vector<128x256xf32>
    %99 = math.absf %98 : vector<128x256xf32>
    %cst_43 = arith.constant 0.327591091 : f32
    %100 = vector.broadcast %cst_43 : f32 to vector<128x256xf32>
    %101 = arith.mulf %100, %99 : vector<128x256xf32>
    %cst_44 = arith.constant 1.000000e+00 : f32
    %102 = vector.broadcast %cst_44 : f32 to vector<128x256xf32>
    %103 = arith.addf %102, %101 : vector<128x256xf32>
    %cst_45 = arith.constant 1.000000e+00 : f32
    %104 = vector.broadcast %cst_45 : f32 to vector<128x256xf32>
    %105 = arith.divf %104, %103 : vector<128x256xf32>
    %cst_46 = arith.constant 1.06140542 : f32
    %106 = vector.broadcast %cst_46 : f32 to vector<128x256xf32>
    %107 = arith.mulf %106, %105 : vector<128x256xf32>
    %cst_47 = arith.constant -1.45315206 : f32
    %108 = vector.broadcast %cst_47 : f32 to vector<128x256xf32>
    %109 = arith.addf %107, %108 : vector<128x256xf32>
    %110 = arith.mulf %109, %105 : vector<128x256xf32>
    %cst_48 = arith.constant 1.42141378 : f32
    %111 = vector.broadcast %cst_48 : f32 to vector<128x256xf32>
    %112 = arith.addf %110, %111 : vector<128x256xf32>
    %113 = arith.mulf %112, %105 : vector<128x256xf32>
    %cst_49 = arith.constant -0.284496725 : f32
    %114 = vector.broadcast %cst_49 : f32 to vector<128x256xf32>
    %115 = arith.addf %113, %114 : vector<128x256xf32>
    %116 = arith.mulf %115, %105 : vector<128x256xf32>
    %cst_50 = arith.constant 0.254829586 : f32
    %117 = vector.broadcast %cst_50 : f32 to vector<128x256xf32>
    %118 = arith.addf %116, %117 : vector<128x256xf32>
    %119 = arith.mulf %118, %105 : vector<128x256xf32>
    %cst_51 = arith.constant 0.000000e+00 : f32
    %120 = vector.broadcast %cst_51 : f32 to vector<128x256xf32>
    %121 = arith.subf %120, %99 : vector<128x256xf32>
    %122 = arith.mulf %121, %99 : vector<128x256xf32>
    %123 = math.exp %122 : vector<128x256xf32>
    %124 = arith.mulf %119, %123 : vector<128x256xf32>
    %cst_52 = arith.constant 1.000000e+00 : f32
    %125 = vector.broadcast %cst_52 : f32 to vector<128x256xf32>
    %126 = arith.subf %125, %124 : vector<128x256xf32>
    %cst_53 = arith.constant 0.000000e+00 : f32
    %127 = vector.broadcast %cst_53 : f32 to vector<128x256xf32>
    %128 = arith.cmpf olt, %98, %127 : vector<128x256xf32>
    %cst_54 = arith.constant 0.000000e+00 : f32
    %129 = vector.broadcast %cst_54 : f32 to vector<128x256xf32>
    %130 = arith.subf %129, %126 : vector<128x256xf32>
    %131 = arith.select %128, %130, %126 : vector<128x256xi1>, vector<128x256xf32>
    %cst_55 = arith.constant 1.000000e+00 : f32
    %132 = vector.broadcast %cst_55 : f32 to vector<128x256xf32>
    %133 = arith.addf %132, %131 : vector<128x256xf32>
    %134 = arith.mulf %96, %133 : vector<128x256xf32>
    %c0_56 = arith.constant 0 : index
    %c0_57 = arith.constant 0 : index
    %135 = vector.load %arg6[%c0_56, %c0_57] : memref<200x128xf32, #tpu.memory_space<vmem>>, vector<200x128xf32>
    %cst_58 = arith.constant dense<0.000000e+00> : vector<200x256xf32>
    %136 = tpu.matmul %135, %134, %cst_58 {dimension_numbers = #tpu.dot_dimension_numbers<[1], [0], [0], [1], [0, 0, 1, 1], [], []>} : vector<200x128xf32>, vector<128x256xf32>, vector<200x256xf32> -> vector<200x256xf32>
    %c0_59 = arith.constant 0 : index
    %c0_60 = arith.constant 0 : index
    %137 = vector.load %arg7[%c0_59, %c0_60] : memref<200x1xf32, #tpu.memory_space<vmem>>, vector<200x1xf32>
    %138 = vector.broadcast %137 : vector<200x1xf32> to vector<200x256xf32>
    %139 = arith.addf %136, %138 : vector<200x256xf32>
    %cst_61 = arith.constant dense<0.000000e+00> : vector<200xf32>
    %140 = vector.multi_reduction <add>, %139, %cst_61 [1] : vector<200x256xf32> to vector<200xf32>
    %141 = vector.shape_cast %140 : vector<200xf32> to vector<200x1xf32>
    %142 = arith.mulf %139, %139 : vector<200x256xf32>
    %cst_62 = arith.constant dense<0.000000e+00> : vector<200xf32>
    %143 = vector.multi_reduction <add>, %142, %cst_62 [1] : vector<200x256xf32> to vector<200xf32>
    %144 = vector.shape_cast %143 : vector<200xf32> to vector<200x1xf32>
    %cst_63 = arith.constant 3.906250e-03 : f32
    %145 = vector.broadcast %cst_63 : f32 to vector<200x1xf32>
    %146 = arith.mulf %141, %145 : vector<200x1xf32>
    %cst_64 = arith.constant 3.906250e-03 : f32
    %147 = vector.broadcast %cst_64 : f32 to vector<200x1xf32>
    %148 = arith.mulf %144, %147 : vector<200x1xf32>
    %149 = arith.mulf %146, %146 : vector<200x1xf32>
    %150 = arith.subf %148, %149 : vector<200x1xf32>
    %cst_65 = arith.constant 0.000000e+00 : f32
    %151 = vector.broadcast %cst_65 : f32 to vector<200x1xf32>
    %152 = arith.maximumf %150, %151 : vector<200x1xf32>
    %cst_66 = arith.constant 9.99999974E-6 : f32
    %153 = vector.broadcast %cst_66 : f32 to vector<200x1xf32>
    %154 = arith.addf %152, %153 : vector<200x1xf32>
    %155 = math.rsqrt %154 : vector<200x1xf32>
    %156 = vector.broadcast %146 : vector<200x1xf32> to vector<200x256xf32>
    %157 = arith.subf %139, %156 : vector<200x256xf32>
    %158 = vector.broadcast %155 : vector<200x1xf32> to vector<200x256xf32>
    %159 = arith.mulf %157, %158 : vector<200x256xf32>
    %cst_67 = arith.constant 5.000000e-01 : f32
    %160 = vector.broadcast %cst_67 : f32 to vector<200x256xf32>
    %161 = arith.mulf %160, %159 : vector<200x256xf32>
    %cst_68 = arith.constant 0.707106769 : f32
    %162 = vector.broadcast %cst_68 : f32 to vector<200x256xf32>
    %163 = arith.mulf %159, %162 : vector<200x256xf32>
    %164 = math.absf %163 : vector<200x256xf32>
    %cst_69 = arith.constant 0.327591091 : f32
    %165 = vector.broadcast %cst_69 : f32 to vector<200x256xf32>
    %166 = arith.mulf %165, %164 : vector<200x256xf32>
    %cst_70 = arith.constant 1.000000e+00 : f32
    %167 = vector.broadcast %cst_70 : f32 to vector<200x256xf32>
    %168 = arith.addf %167, %166 : vector<200x256xf32>
    %cst_71 = arith.constant 1.000000e+00 : f32
    %169 = vector.broadcast %cst_71 : f32 to vector<200x256xf32>
    %170 = arith.divf %169, %168 : vector<200x256xf32>
    %cst_72 = arith.constant 1.06140542 : f32
    %171 = vector.broadcast %cst_72 : f32 to vector<200x256xf32>
    %172 = arith.mulf %171, %170 : vector<200x256xf32>
    %cst_73 = arith.constant -1.45315206 : f32
    %173 = vector.broadcast %cst_73 : f32 to vector<200x256xf32>
    %174 = arith.addf %172, %173 : vector<200x256xf32>
    %175 = arith.mulf %174, %170 : vector<200x256xf32>
    %cst_74 = arith.constant 1.42141378 : f32
    %176 = vector.broadcast %cst_74 : f32 to vector<200x256xf32>
    %177 = arith.addf %175, %176 : vector<200x256xf32>
    %178 = arith.mulf %177, %170 : vector<200x256xf32>
    %cst_75 = arith.constant -0.284496725 : f32
    %179 = vector.broadcast %cst_75 : f32 to vector<200x256xf32>
    %180 = arith.addf %178, %179 : vector<200x256xf32>
    %181 = arith.mulf %180, %170 : vector<200x256xf32>
    %cst_76 = arith.constant 0.254829586 : f32
    %182 = vector.broadcast %cst_76 : f32 to vector<200x256xf32>
    %183 = arith.addf %181, %182 : vector<200x256xf32>
    %184 = arith.mulf %183, %170 : vector<200x256xf32>
    %cst_77 = arith.constant 0.000000e+00 : f32
    %185 = vector.broadcast %cst_77 : f32 to vector<200x256xf32>
    %186 = arith.subf %185, %164 : vector<200x256xf32>
    %187 = arith.mulf %186, %164 : vector<200x256xf32>
    %188 = math.exp %187 : vector<200x256xf32>
    %189 = arith.mulf %184, %188 : vector<200x256xf32>
    %cst_78 = arith.constant 1.000000e+00 : f32
    %190 = vector.broadcast %cst_78 : f32 to vector<200x256xf32>
    %191 = arith.subf %190, %189 : vector<200x256xf32>
    %cst_79 = arith.constant 0.000000e+00 : f32
    %192 = vector.broadcast %cst_79 : f32 to vector<200x256xf32>
    %193 = arith.cmpf olt, %163, %192 : vector<200x256xf32>
    %cst_80 = arith.constant 0.000000e+00 : f32
    %194 = vector.broadcast %cst_80 : f32 to vector<200x256xf32>
    %195 = arith.subf %194, %191 : vector<200x256xf32>
    %196 = arith.select %193, %195, %191 : vector<200x256xi1>, vector<200x256xf32>
    %cst_81 = arith.constant 1.000000e+00 : f32
    %197 = vector.broadcast %cst_81 : f32 to vector<200x256xf32>
    %198 = arith.addf %197, %196 : vector<200x256xf32>
    %199 = arith.mulf %161, %198 : vector<200x256xf32>
    %c0_82 = arith.constant 0 : index
    %c0_83 = arith.constant 0 : index
    %c0_84 = arith.constant 0 : index
    %200 = vector.load %arg9[%c0_82, %c0_83, %c0_84] : memref<1x200x256xf32, #tpu.memory_space<vmem>>, vector<1x200x256xf32>
    %201 = vector.shape_cast %200 : vector<1x200x256xf32> to vector<200x256xf32>
    %202 = vector.shape_cast %199 : vector<200x256xf32> to vector<1x200x256xf32>
    tpu.vector_store %arg9[%c0_82, %c0_83, %c0_84], %202 {strides = array<i32>} : memref<1x200x256xf32, #tpu.memory_space<vmem>>, vector<1x200x256xf32>,
    return
  }
  func.func @transform_0(%arg0: i32) -> (i32, i32, i32) {
    %c0_i32 = arith.constant 0 : i32
    %c0_i32_0 = arith.constant 0 : i32
    %c0_i32_1 = arith.constant 0 : i32
    return %arg0, %c0_i32, %c0_i32_0 : i32, i32, i32
  }
  func.func @transform_1(%arg0: i32) -> (i32, i32) {
    %c0_i32 = arith.constant 0 : i32
    %c0_i32_0 = arith.constant 0 : i32
    %c0_i32_1 = arith.constant 0 : i32
    return %c0_i32, %c0_i32_0 : i32, i32
  }
  func.func @transform_2(%arg0: i32) -> (i32, i32) {
    %c0_i32 = arith.constant 0 : i32
    %c0_i32_0 = arith.constant 0 : i32
    %c0_i32_1 = arith.constant 0 : i32
    return %c0_i32, %c0_i32_0 : i32, i32
  }
  func.func @transform_3(%arg0: i32) -> (i32, i32) {
    %c0_i32 = arith.constant 0 : i32
    %c0_i32_0 = arith.constant 0 : i32
    %c0_i32_1 = arith.constant 0 : i32
    return %c0_i32, %c0_i32_0 : i32, i32
  }
  func.func @transform_4(%arg0: i32) -> (i32, i32) {
    %c0_i32 = arith.constant 0 : i32
    %c0_i32_0 = arith.constant 0 : i32
    %c0_i32_1 = arith.constant 0 : i32
    return %c0_i32, %c0_i32_0 : i32, i32
  }
  func.func @transform_5(%arg0: i32) -> (i32, i32) {
    %c0_i32 = arith.constant 0 : i32
    %c0_i32_0 = arith.constant 0 : i32
    %c0_i32_1 = arith.constant 0 : i32
    return %c0_i32, %c0_i32_0 : i32, i32
  }
  func.func @transform_6(%arg0: i32) -> (i32, i32) {
    %c0_i32 = arith.constant 0 : i32
    %c0_i32_0 = arith.constant 0 : i32
    %c0_i32_1 = arith.constant 0 : i32
    return %c0_i32, %c0_i32_0 : i32, i32
  }
  func.func @transform_7(%arg0: i32) -> (i32, i32, i32) {
    %c0_i32 = arith.constant 0 : i32
    %c0_i32_0 = arith.constant 0 : i32
    %c0_i32_1 = arith.constant 0 : i32
    return %arg0, %c0_i32, %c0_i32_0 : i32, i32, i32
  }
  func.func @transform_8(%arg0: i32) -> (i32, i32, i32) {
    %c0_i32 = arith.constant 0 : i32
    %c0_i32_0 = arith.constant 0 : i32
    %c0_i32_1 = arith.constant 0 : i32
    return %arg0, %c0_i32, %c0_i32_0 : i32, i32, i32
  }
}

</mosaic_0001>

<llo_original>
// kernel: decoder_forward.1
$region0: #{decoder_forward.1}
  #allocation0 [shape = 'u32[]', space=smem, size = 0x4, offset = 0x4, fixed_abs, tag = 'smem constant byte address 0x4 - core index']
  #allocation1 [shape = 'u32[144,128]{1,0:T(1,128)}', space=vmem, size = 0x12000, scoped, tag = 'internal scratch']
  %s0 = inlined_call_operand.vmem [shape: f32[2,32,256], index: 0, kind: input, shape index: {}]
  %s1 = inlined_call_operand.hbm [shape: f32[64,32], index: 1, kind: input, shape index: {}]
  %s2 = inlined_call_operand.vmem [shape: f32[64,1], index: 2, kind: input, shape index: {}]
  %s3 = inlined_call_operand.vmem [shape: f32[128,64], index: 3, kind: input, shape index: {}]
  %s4 = inlined_call_operand.hbm [shape: f32[128,1], index: 4, kind: input, shape index: {}]
  %s5 = inlined_call_operand.vmem [shape: f32[200,128], index: 5, kind: input, shape index: {}]
  %s6 = inlined_call_operand.vmem [shape: f32[200,1], index: 6, kind: input, shape index: {}]
  %s7 = inlined_call_operand.vmem [shape: f32[2,64,256], index: 7, kind: output, shape index: {0}]
  %s8 = inlined_call_operand.vmem [shape: f32[2,200,256], index: 8, kind: output, shape index: {1}]
  %9 = xla_tuple %s7, %s8
  %s10 = sld [smem:[#allocation0]]
  $region77: #{decoder_forward.1} parent=0
    _
  %s12 = ssub.s32 1, %s10
  %s13 = scalar_select 0, %s12, %s10
  $region1: #{decoder_forward.1} parent=0
    #allocation2 [shape = 'u8[32768]{0}', space=vmem, size = 0x8000, scoped, tag = 'input window, operand 1, single buffered']
    #allocation3 [shape = 's32[2]{0}', space=sflag, size = 0x8, scoped, tag = 'scoped memory for decoder_forward.1']
    #allocation4 [shape = 'u8[65536]{0}', space=vmem, size = 0x10000, scoped, tag = 'input window, operand 4, single buffered']
    #allocation5 [shape = 's32[1]{0}', space=sflag, size = 0x4, scoped, tag = 'scoped memory for decoder_forward.1']
    %14 = vsyncpa [#allocation3], 0
    %15 = vsyncpa [#allocation5], 0
    loop: start=0, step=1, limit=4
    $region2: #{decoder_forward.1} parent=1 // loop_pre_header
      _
    $region3: #{decoder_forward.1} parent=1 // loop_header
      %s17 = sphi 0, %s21
      %p18 = scmp.ge.s32.totalorder %s17, 4
      %s27 = sphi 0, %s29
      %s30 = sphi 0, %s27
      %s31 = sphi 0, %s30
      %s47 = sphi 0, %s31
      %s51 = sphi 0, %s51
      %s53 = sphi 0, %s51
      %s54 = sphi 0, %s53
      %s68 = sphi 0, %s54
      %s72 = sphi 0, %s72
      %s74 = sphi 0, %s72
      %s75 = sphi 0, %s74
      %s89 = sphi 0, %s75
      %s93 = sphi 0, %s93
      %s95 = sphi 0, %s93
      %s96 = sphi 0, %s95
      %s110 = sphi 0, %s96
      %s114 = sphi 0, %s114
      %s116 = sphi 0, %s114
      %s117 = sphi 0, %s116
      %s131 = sphi 0, %s117
      %s135 = sphi 0, %s135
      %s137 = sphi 0, %s135
      %s138 = sphi 0, %s137
      %s152 = sphi 0, %s138
      %s156 = sphi 0, %s156
      %s158 = sphi 0, %s156
      %s159 = sphi 0, %s158
      %s173 = sphi 0, %s159
      %s179 = sphi 0, %s181
      %s182 = sphi 0, %s179
      %s183 = sphi 0, %s182
      %s199 = sphi 0, %s183
      %s205 = sphi 0, %s207
      %s208 = sphi 0, %s205
      %s209 = sphi 0, %s208
      %s225 = sphi 0, %s209
    $region4: #{decoder_forward.1} parent=1 // loop_header_branch
      %20 = sbr.rel (%p18) target = $region8
    $region5: #{decoder_forward.1} parent=1 // loop_body
      %s22 = ssub.s32 %s17, 1
      %s23 = ssub.s32 %s17, 2
      %s24 = sadd.s32 %s17, 1
      %s25 = ssub.s32 %s17, %s24
      %p26 = scmp.eq.s32.totalorder %s25, 0
      %s28 = sadd.s32 %s27, 1
      %s29 = scalar_select %p26, %s27, %s28
      %p32 = pneg %p26
      %p33 = scmp.eq.s32.totalorder %s17, 1
      %p34 = por %p32, %p33
      %p35 = scmp.ne.s32.totalorder %s27, %s30
      %p36 = scmp.eq.s32.totalorder %s17, 0
      %p37 = por %p35, %p36
      %p38 = scmp.ne.s32.totalorder %s27, %s30
      %p39 = scmp.eq.s32.totalorder %s22, 1
      %p40 = por %p38, %p39
      %p41 = scmp.ne.s32.totalorder %s30, %s31
      %p42 = scmp.eq.s32.totalorder %s22, 0
      %p43 = por %p41, %p42
      %p44 = scmp.ne.s32.totalorder %s30, %s31
      %p45 = scmp.eq.s32.totalorder %s23, 1
      %p46 = por %p44, %p45
      %p48 = scmp.ne.s32.totalorder %s31, %s47
      %p49 = scmp.eq.s32.totalorder %s23, 0
      %p50 = por %p48, %p49
      %s52 = sadd.s32 %s51, 1
      %p55 = scmp.eq.s32.totalorder %s17, 1
      %p56 = scmp.ne.s32.totalorder %s51, %s53
      %p57 = scmp.eq.s32.totalorder %s17, 0
      %p58 = por %p56, %p57
      %p59 = scmp.ne.s32.totalorder %s51, %s53
      %p60 = scmp.eq.s32.totalorder %s22, 1
      %p61 = por %p59, %p60
      %p62 = scmp.ne.s32.totalorder %s53, %s54
      %p63 = scmp.eq.s32.totalorder %s22, 0
      %p64 = por %p62, %p63
      %p65 = scmp.ne.s32.totalorder %s53, %s54
      %p66 = scmp.eq.s32.totalorder %s23, 1
      %p67 = por %p65, %p66
      %p69 = scmp.ne.s32.totalorder %s54, %s68
      %p70 = scmp.eq.s32.totalorder %s23, 0
      %p71 = por %p69, %p70
      %s73 = sadd.s32 %s72, 1
      %p76 = scmp.eq.s32.totalorder %s17, 1
      %p77 = scmp.ne.s32.totalorder %s72, %s74
      %p78 = scmp.eq.s32.totalorder %s17, 0
      %p79 = por %p77, %p78
      %p80 = scmp.ne.s32.totalorder %s72, %s74
      %p81 = scmp.eq.s32.totalorder %s22, 1
      %p82 = por %p80, %p81
      %p83 = scmp.ne.s32.totalorder %s74, %s75
      %p84 = scmp.eq.s32.totalorder %s22, 0
      %p85 = por %p83, %p84
      %p86 = scmp.ne.s32.totalorder %s74, %s75
      %p87 = scmp.eq.s32.totalorder %s23, 1
      %p88 = por %p86, %p87
      %p90 = scmp.ne.s32.totalorder %s75, %s89
      %p91 = scmp.eq.s32.totalorder %s23, 0
      %p92 = por %p90, %p91
      %s94 = sadd.s32 %s93, 1
      %p97 = scmp.eq.s32.totalorder %s17, 1
      %p98 = scmp.ne.s32.totalorder %s93, %s95
      %p99 = scmp.eq.s32.totalorder %s17, 0
      %p100 = por %p98, %p99
      %p101 = scmp.ne.s32.totalorder %s93, %s95
      %p102 = scmp.eq.s32.totalorder %s22, 1
      %p103 = por %p101, %p102
      %p104 = scmp.ne.s32.totalorder %s95, %s96
      %p105 = scmp.eq.s32.totalorder %s22, 0
      %p106 = por %p104, %p105
      %p107 = scmp.ne.s32.totalorder %s95, %s96
      %p108 = scmp.eq.s32.totalorder %s23, 1
      %p109 = por %p107, %p108
      %p111 = scmp.ne.s32.totalorder %s96, %s110
      %p112 = scmp.eq.s32.totalorder %s23, 0
      %p113 = por %p111, %p112
      %s115 = sadd.s32 %s114, 1
      %p118 = scmp.eq.s32.totalorder %s17, 1
      %p119 = scmp.ne.s32.totalorder %s114, %s116
      %p120 = scmp.eq.s32.totalorder %s17, 0
      %p121 = por %p119, %p120
      %p122 = scmp.ne.s32.totalorder %s114, %s116
      %p123 = scmp.eq.s32.totalorder %s22, 1
      %p124 = por %p122, %p123
      %p125 = scmp.ne.s32.totalorder %s116, %s117
      %p126 = scmp.eq.s32.totalorder %s22, 0
      %p127 = por %p125, %p126
      %p128 = scmp.ne.s32.totalorder %s116, %s117
      %p129 = scmp.eq.s32.totalorder %s23, 1
      %p130 = por %p128, %p129
      %p132 = scmp.ne.s32.totalorder %s117, %s131
      %p133 = scmp.eq.s32.totalorder %s23, 0
      %p134 = por %p132, %p133
      %s136 = sadd.s32 %s135, 1
      %p139 = scmp.eq.s32.totalorder %s17, 1
      %p140 = scmp.ne.s32.totalorder %s135, %s137
      %p141 = scmp.eq.s32.totalorder %s17, 0
      %p142 = por %p140, %p141
      %p143 = scmp.ne.s32.totalorder %s135, %s137
      %p144 = scmp.eq.s32.totalorder %s22, 1
      %p145 = por %p143, %p144
      %p146 = scmp.ne.s32.totalorder %s137, %s138
      %p147 = scmp.eq.s32.totalorder %s22, 0
      %p148 = por %p146, %p147
      %p149 = scmp.ne.s32.totalorder %s137, %s138
      %p150 = scmp.eq.s32.totalorder %s23, 1
      %p151 = por %p149, %p150
      %p153 = scmp.ne.s32.totalorder %s138, %s152
      %p154 = scmp.eq.s32.totalorder %s23, 0
      %p155 = por %p153, %p154
      %s157 = sadd.s32 %s156, 1
      %p160 = scmp.eq.s32.totalorder %s17, 1
      %p161 = scmp.ne.s32.totalorder %s156, %s158
      %p162 = scmp.eq.s32.totalorder %s17, 0
      %p163 = por %p161, %p162
      %p164 = scmp.ne.s32.totalorder %s156, %s158
      %p165 = scmp.eq.s32.totalorder %s22, 1
      %p166 = por %p164, %p165
      %p167 = scmp.ne.s32.totalorder %s158, %s159
      %p168 = scmp.eq.s32.totalorder %s22, 0
      %p169 = por %p167, %p168
      %p170 = scmp.ne.s32.totalorder %s158, %s159
      %p171 = scmp.eq.s32.totalorder %s23, 1
      %p172 = por %p170, %p171
      %p174 = scmp.ne.s32.totalorder %s159, %s173
      %p175 = scmp.eq.s32.totalorder %s23, 0
      %p176 = por %p174, %p175
      %s177 = ssub.s32 %s17, %s24
      %p178 = scmp.eq.s32.totalorder %s177, 0
      %s180 = sadd.s32 %s179, 1
      %s181 = scalar_select %p178, %s179, %s180
      %p184 = pneg %p178
      %p185 = scmp.eq.s32.totalorder %s17, 1
      %p186 = por %p184, %p185
      %p187 = scmp.ne.s32.totalorder %s179, %s182
      %p188 = scmp.eq.s32.totalorder %s17, 0
      %p189 = por %p187, %p188
      %p190 = scmp.ne.s32.totalorder %s179, %s182
      %p191 = scmp.eq.s32.totalorder %s22, 1
      %p192 = por %p190, %p191
      %p193 = scmp.ne.s32.totalorder %s182, %s183
      %p194 = scmp.eq.s32.totalorder %s22, 0
      %p195 = por %p193, %p194
      %p196 = scmp.ne.s32.totalorder %s182, %s183
      %p197 = scmp.eq.s32.totalorder %s23, 1
      %p198 = por %p196, %p197
      %p200 = scmp.ne.s32.totalorder %s183, %s199
      %p201 = scmp.eq.s32.totalorder %s23, 0
      %p202 = por %p200, %p201
      %s203 = ssub.s32 %s17, %s24
      %p204 = scmp.eq.s32.totalorder %s203, 0
      %s206 = sadd.s32 %s205, 1
      %s207 = scalar_select %p204, %s205, %s206
      %p210 = pneg %p204
      %p211 = scmp.eq.s32.totalorder %s17, 1
      %p212 = por %p210, %p211
      %p213 = scmp.ne.s32.totalorder %s205, %s208
      %p214 = scmp.eq.s32.totalorder %s17, 0
      %p215 = por %p213, %p214
      %p216 = scmp.ne.s32.totalorder %s205, %s208
      %p217 = scmp.eq.s32.totalorder %s22, 1
      %p218 = por %p216, %p217
      %p219 = scmp.ne.s32.totalorder %s208, %s209
      %p220 = scmp.eq.s32.totalorder %s22, 0
      %p221 = por %p219, %p220
      %p222 = scmp.ne.s32.totalorder %s208, %s209
      %p223 = scmp.eq.s32.totalorder %s23, 1
      %p224 = por %p222, %p223
      %p226 = scmp.ne.s32.totalorder %s209, %s225
      %p227 = scmp.eq.s32.totalorder %s23, 0
      %p228 = por %p226, %p227
      %p229 = scmp.le.s32.totalorder 1, %s17
      %p230 = scmp.lt.s32.totalorder %s17, 3
      %p231 = pnand %p229, %p230
      %p232 = pneg %p231
      // Predicated region
      $region9: #{decoder_forward.1} parent=5 // pred_check
        _
      $region10: #{decoder_forward.1} parent=5 // pred_check_branch
        %234 = sbr.rel (%p231) target = $region12
      $region11: #{decoder_forward.1} parent=5 // pred_region
        %s235 = ssub.s32 %s17, 1
        // Predicated region
        $region13: #{decoder_forward.1} parent=11 // pred_check
          %p236 = pneg %p64
        $region14: #{decoder_forward.1} parent=11 // pred_check_branch
          %238 = sbr.rel (%p236) target = $region16
        $region15: #{decoder_forward.1} parent=11 // pred_region
          %s240 = ssub.s32 1024, 1024
          %241 = vsyncadd [#allocation3], %s240
          %s242 = sshll.u32 [#allocation2], 4
          %s243 = int_to_ptr.vmem [resolvable:$true] %s242
          %248 = dma.hbm_to_vmem [thread:$0]  %s1, 1024, %s243, [#allocation3], 128, 128, 8
        $region16: #{decoder_forward.1} parent=11 // pred_fallthru
          _
        // Predicated region
        $region17: #{decoder_forward.1} parent=11 // pred_check
          %p249 = pneg %p85
        $region18: #{decoder_forward.1} parent=11 // pred_check_branch
          %251 = sbr.rel (%p249) target = $region20
        $region19: #{decoder_forward.1} parent=11 // pred_region
          _
        $region20: #{decoder_forward.1} parent=11 // pred_fallthru
          _
        // Predicated region
        $region21: #{decoder_forward.1} parent=11 // pred_check
          %p252 = pneg %p106
        $region22: #{decoder_forward.1} parent=11 // pred_check_branch
          %254 = sbr.rel (%p252) target = $region24
        $region23: #{decoder_forward.1} parent=11 // pred_region
          _
        $region24: #{decoder_forward.1} parent=11 // pred_fallthru
          _
        // Predicated region
        $region25: #{decoder_forward.1} parent=11 // pred_check
          %p255 = pneg %p127
        $region26: #{decoder_forward.1} parent=11 // pred_check_branch
          %257 = sbr.rel (%p255) target = $region28
        $region27: #{decoder_forward.1} parent=11 // pred_region
          %s259 = ssub.s32 2048, 2048
          %260 = vsyncadd [#allocation5], %s259
          %s261 = sshll.u32 [#allocation4], 4
          %s262 = int_to_ptr.vmem [resolvable:$true] %s261
          %267 = dma.hbm_to_vmem [thread:$0]  %s4, 2048, %s262, [#allocation5], 128, 128, 8
        $region28: #{decoder_forward.1} parent=11 // pred_fallthru
          _
        // Predicated region
        $region29: #{decoder_forward.1} parent=11 // pred_check
          %p268 = pneg %p148
        $region30: #{decoder_forward.1} parent=11 // pred_check_branch
          %270 = sbr.rel (%p268) target = $region32
        $region31: #{decoder_forward.1} parent=11 // pred_region
          _
        $region32: #{decoder_forward.1} parent=11 // pred_fallthru
          _
        // Predicated region
        $region33: #{decoder_forward.1} parent=11 // pred_check
          %p271 = pneg %p169
        $region34: #{decoder_forward.1} parent=11 // pred_check_branch
          %273 = sbr.rel (%p271) target = $region36
        $region35: #{decoder_forward.1} parent=11 // pred_region
          _
        $region36: #{decoder_forward.1} parent=11 // pred_fallthru
          _
      $region12: #{decoder_forward.1} parent=5 // pred_fallthru
        _
      %p274 = scmp.lt.s32.totalorder %s17, 2
      // Predicated region
      $region37: #{decoder_forward.1} parent=5 // pred_check
        %p275 = pneg %p274
      $region38: #{decoder_forward.1} parent=5 // pred_check_branch
        %277 = sbr.rel (%p275) target = $region40
      $region39: #{decoder_forward.1} parent=5 // pred_region
        // Predicated region
        $region41: #{decoder_forward.1} parent=39 // pred_check
          %p278 = pneg %p37
        $region42: #{decoder_forward.1} parent=39 // pred_check_branch
          %280 = sbr.rel (%p278) target = $region44
        $region43: #{decoder_forward.1} parent=39 // pred_region
          %p281 = scmp.lt.s32.totalorder %s17, 1
          %s282 = scalar_select %p281, %s17, 1
          %s283 = smul.addr %s282, 8
          %s284 = smul.addr %s283, 8
          %s285 = scalar_lea.vmem %s0, %s284
        $region44: #{decoder_forward.1} parent=39 // pred_fallthru
          _
      $region40: #{decoder_forward.1} parent=5 // pred_fallthru
        _
      %p286 = scmp.le.s32.totalorder 1, %s17
      %p287 = scmp.lt.s32.totalorder %s17, 3
      %p288 = pnand %p286, %p287
      %p289 = pneg %p288
      // Predicated region
      $region45: #{decoder_forward.1} parent=5 // pred_check
        _
      $region46: #{decoder_forward.1} parent=5 // pred_check_branch
        %291 = sbr.rel (%p288) target = $region48
      $region47: #{decoder_forward.1} parent=5 // pred_region
        %s292 = ssub.s32 %s17, 1
        // Predicated region
        $region49: #{decoder_forward.1} parent=47 // pred_check
          %p293 = pneg %p64
        $region50: #{decoder_forward.1} parent=47 // pred_check_branch
          %295 = sbr.rel (%p293) target = $region52
        $region51: #{decoder_forward.1} parent=47 // pred_region
          %296 = dma.done [#allocation3], 1024
        $region52: #{decoder_forward.1} parent=47 // pred_fallthru
          _
        // Predicated region
        $region53: #{decoder_forward.1} parent=47 // pred_check
          %p297 = pneg %p127
        $region54: #{decoder_forward.1} parent=47 // pred_check_branch
          %299 = sbr.rel (%p297) target = $region56
        $region55: #{decoder_forward.1} parent=47 // pred_region
          %300 = dma.done [#allocation5], 2048
        $region56: #{decoder_forward.1} parent=47 // pred_fallthru
          _
        %p301 = scmp.lt.s32.totalorder %s22, 1
        %s302 = scalar_select %p301, %s22, 1
        %s303 = smul.addr %s302, 8
        %s304 = smul.addr %s303, 8
        %s305 = scalar_lea.vmem %s0, %s304
        %p306 = pneg %p43
        %p307 = pneg %p40
        %p308 = pneg %p64
        %p309 = pneg %p61
        %p310 = pneg %p85
        %p311 = pneg %p82
        %p312 = pneg %p106
        %p313 = pneg %p103
        %p314 = pneg %p127
        %p315 = pneg %p124
        %p316 = pneg %p148
        %p317 = pneg %p145
        %p318 = pneg %p169
        %p319 = pneg %p166
        %p320 = pneg %p195
        %p321 = pneg %p192
        %p322 = scmp.lt.s32.totalorder %s22, 1
        %s323 = scalar_select %p322, %s22, 1
        %s324 = smul.addr %s323, 16
        %s325 = smul.addr %s324, 8
        %s326 = scalar_lea.vmem %s7, %s325
        %p327 = pneg %p221
        %p328 = pneg %p218
        %p329 = scmp.lt.s32.totalorder %s22, 1
        %s330 = scalar_select %p329, %s22, 1
        %s331 = smul.addr %s330, 50
        %s332 = smul.addr %s331, 8
        %s333 = scalar_lea.vmem %s8, %s332
        %p334 = scmp.lt.s32.totalorder %s22, 1
        %s335 = scalar_select %p334, %s22, 1
        %s336 = smul.addr %s335, 8
        %s337 = smul.addr %s336, 8
        %s338 = scalar_lea.vmem %s0, %s337
        %p339 = scmp.lt.s32.totalorder %s22, 1
        %s340 = scalar_select %p339, %s22, 1
        %s341 = smul.addr %s340, 16
        %s342 = smul.addr %s341, 8
        %s343 = scalar_lea.vmem %s7, %s342
        %p344 = scmp.lt.s32.totalorder %s22, 1
        %s345 = scalar_select %p344, %s22, 1
        %s346 = smul.addr %s345, 50
        %s347 = smul.addr %s346, 8
        %s348 = scalar_lea.vmem %s8, %s347
        %v349 = vld [vmem:[%s338] sm:$0xff]
        %v350 = vld [vmem:[%s338 + $0x8] sm:$0xff]
        %v351 = vld [vmem:[%s338 + $0x10] sm:$0xff]
        %v352 = vld [vmem:[%s338 + $0x18] sm:$0xff]
        %v353 = vld [vmem:[%s338 + $0x20] sm:$0xff]
        %v354 = vld [vmem:[%s338 + $0x28] sm:$0xff]
        %v355 = vld [vmem:[%s338 + $0x30] sm:$0xff]
        %v356 = vld [vmem:[%s338 + $0x38] sm:$0xff]
        %v357 = vld [vmem:[#allocation2] sm:$0xff]
        %v358 = vld [vmem:[#allocation2 + $0x8] sm:$0xff]
        %v359 = vld [vmem:[#allocation2 + $0x10] sm:$0xff]
        %v360 = vld [vmem:[#allocation2 + $0x18] sm:$0xff]
        %v361 = vld [vmem:[#allocation2 + $0x20] sm:$0xff]
        %v362 = vld [vmem:[#allocation2 + $0x28] sm:$0xff]
        %v363 = vld [vmem:[#allocation2 + $0x30] sm:$0xff]
        %v364 = vld [vmem:[#allocation2 + $0x38] sm:$0xff]
        %v365 = vld [vmem:[%s2] sm:$0xff]
        %v366 = vld [vmem:[%s2 + $0x8] sm:$0xff]
        %v367 = vld [vmem:[%s2 + $0x10] sm:$0xff]
        %v368 = vld [vmem:[%s2 + $0x18] sm:$0xff]
        %v369 = vld [vmem:[%s2 + $0x20] sm:$0xff]
        %v370 = vld [vmem:[%s2 + $0x28] sm:$0xff]
        %v371 = vld [vmem:[%s2 + $0x30] sm:$0xff]
        %v372 = vld [vmem:[%s2 + $0x38] sm:$0xff]
        %374 = vset.pattern.permute.xlu0 0
        %375 = vperm.xlu0 %374, %v365
        %v376 = vpop.permute.xlu0 %375
        %379 = vset.pattern.permute.xlu0 0
        %380 = vperm.xlu0 %379, %v366
        %v381 = vpop.permute.xlu0 %380
        %384 = vset.pattern.permute.xlu0 0
        %385 = vperm.xlu0 %384, %v367
        %v386 = vpop.permute.xlu0 %385
        %389 = vset.pattern.permute.xlu0 0
        %390 = vperm.xlu0 %389, %v368
        %v391 = vpop.permute.xlu0 %390
        %394 = vset.pattern.permute.xlu0 0
        %395 = vperm.xlu0 %394, %v369
        %v396 = vpop.permute.xlu0 %395
        %399 = vset.pattern.permute.xlu0 0
        %400 = vperm.xlu0 %399, %v370
        %v401 = vpop.permute.xlu0 %400
        %404 = vset.pattern.permute.xlu0 0
        %405 = vperm.xlu0 %404, %v371
        %v406 = vpop.permute.xlu0 %405
        %409 = vset.pattern.permute.xlu0 0
        %410 = vperm.xlu0 %409, %v372
        %v411 = vpop.permute.xlu0 %410
        %vm413 = vcmask 261120
        %v415 = vsel %vm413, %v357, 0
        %v418 = vsel %vm413, %v358, 0
        %v421 = vsel %vm413, %v359, 0
        %v424 = vsel %vm413, %v360, 0
        %v427 = vsel %vm413, %v361, 0
        %v430 = vsel %vm413, %v362, 0
        %v433 = vsel %vm413, %v363, 0
        %v436 = vsel %vm413, %v364, 0
        %438 = vmatprep.subr.mxu0 %v350
        %439 = vmatpush1.msra.mxu0 %v349
        %440 = vmatprep.subr.mxu0 %v352
        %441 = vmatpush1.msra.mxu0 %v351
        %442 = vmatprep.subr.mxu0 %v354
        %443 = vmatpush1.msra.mxu0 %v353
        %444 = vmatprep.subr.mxu0 %v356
        %445 = vmatpush1.msra.mxu0 %v355
        %446 = vmatprep.subr.mxu0 0.0
        %447 = vmatpush1.msra.mxu0 0.0
        %448 = vmatprep.subr.mxu0 0.0
        %449 = vmatpush1.msra.mxu0 0.0
        %450 = vmatprep.subr.mxu0 0.0
        %451 = vmatpush1.msra.mxu0 0.0
        %452 = vmatprep.subr.mxu0 0.0
        %453 = vmatpush1.msra.mxu0 0.0
        %454 = vmatprep.subr.mxu0 0.0
        %455 = vmatpush1.msra.mxu0 0.0
        %456 = vmatprep.subr.mxu0 0.0
        %457 = vmatpush1.msra.mxu0 0.0
        %458 = vmatprep.subr.mxu0 0.0
        %459 = vmatpush1.msra.mxu0 0.0
        %460 = vmatprep.subr.mxu0 0.0
        %461 = vmatpush1.msra.mxu0 0.0
        %462 = vmatprep.subr.mxu0 0.0
        %463 = vmatpush1.msra.mxu0 0.0
        %464 = vmatprep.subr.mxu0 0.0
        %465 = vmatpush1.msra.mxu0 0.0
        %466 = vmatprep.subr.mxu0 0.0
        %467 = vmatpush1.msra.mxu0 0.0
        %468 = vmatprep.subr.mxu0 0.0
        %469 = vmatpush1.msra.mxu0 0.0
        %470 = vmatprep.subr.mxu0 0.0
        %471 = vmatpush1.msra.mxu0 0.0
        %472 = vmatprep.subr.mxu0 0.0
        %473 = vmatpush1.msra.mxu0 0.0
        %474 = vmatprep.subr.mxu0 0.0
        %475 = vmatpush1.msra.mxu0 0.0
        %476 = vmatprep.subr.mxu0 0.0
        %477 = vmatpush1.msra.mxu0 0.0
        %478 = vmatprep.subr.mxu0 0.0
        %479 = vmatpush1.msra.mxu0 0.0
        %480 = vmatprep.subr.mxu0 0.0
        %481 = vmatpush1.msra.mxu0 0.0
        %482 = vmatprep.subr.mxu0 0.0
        %483 = vmatpush1.msra.mxu0 0.0
        %484 = vmatprep.subr.mxu0 0.0
        %485 = vmatpush1.msra.mxu0 0.0
        %486 = vmatprep.subr.mxu0 0.0
        %487 = vmatpush1.msra.mxu0 0.0
        %488 = vmatprep.subr.mxu0 0.0
        %489 = vmatpush1.msra.mxu0 0.0
        %490 = vmatprep.subr.mxu0 0.0
        %491 = vmatpush1.msra.mxu0 0.0
        %492 = vmatprep.subr.mxu0 0.0
        %493 = vmatpush1.msra.mxu0 0.0
        %494 = vmatprep.subr.mxu0 0.0
        %495 = vmatpush1.msra.mxu0 0.0
        %496 = vmatprep.subr.mxu0 0.0
        %497 = vmatpush1.msra.mxu0 0.0
        %498 = vmatprep.subr.mxu0 0.0
        %499 = vmatpush1.msra.mxu0 0.0
        %500 = vmatprep.subr.mxu0 0.0
        %501 = vmatpush1.msra.mxu0 0.0
        %502 = vmatprep.mubr.f32.mxu0 0.0
        %503 = vmatmul.mubr.f32.gmra.mrb[0].mxu0 %v415
        %v504 = vpop.f32.mrb[0].mxu0
        %v505 = vadd.f32 %v376, %v504
        %v506 = vpop.f32.mrb[0].mxu0
        %v507 = vadd.f32 %v376, %v506
        %508 = vmatprep.mubr.f32.mxu0 0.0
        %509 = vmatmul.mubr.f32.gmra.mrb[0].mxu0 %v418
        %v510 = vpop.f32.mrb[0].mxu0
        %v511 = vadd.f32 %v381, %v510
        %v512 = vpop.f32.mrb[0].mxu0
        %v513 = vadd.f32 %v381, %v512
        %514 = vmatprep.mubr.f32.mxu0 0.0
        %515 = vmatmul.mubr.f32.gmra.mrb[0].mxu0 %v421
        %v516 = vpop.f32.mrb[0].mxu0
        %v517 = vadd.f32 %v386, %v516
        %v518 = vpop.f32.mrb[0].mxu0
        %v519 = vadd.f32 %v386, %v518
        %520 = vmatprep.mubr.f32.mxu0 0.0
        %521 = vmatmul.mubr.f32.gmra.mrb[0].mxu0 %v424
        %v522 = vpop.f32.mrb[0].mxu0
        %v523 = vadd.f32 %v391, %v522
        %v524 = vpop.f32.mrb[0].mxu0
        %v525 = vadd.f32 %v391, %v524
        %526 = vmatprep.mubr.f32.mxu0 0.0
        %527 = vmatmul.mubr.f32.gmra.mrb[0].mxu0 %v427
        %v528 = vpop.f32.mrb[0].mxu0
        %v529 = vadd.f32 %v396, %v528
        %v530 = vpop.f32.mrb[0].mxu0
        %v531 = vadd.f32 %v396, %v530
        %532 = vmatprep.mubr.f32.mxu0 0.0
        %533 = vmatmul.mubr.f32.gmra.mrb[0].mxu0 %v430
        %v534 = vpop.f32.mrb[0].mxu0
        %v535 = vadd.f32 %v401, %v534
        %v536 = vpop.f32.mrb[0].mxu0
        %v537 = vadd.f32 %v401, %v536
        %538 = vmatprep.mubr.f32.mxu0 0.0
        %539 = vmatmul.mubr.f32.gmra.mrb[0].mxu0 %v433
        %v540 = vpop.f32.mrb[0].mxu0
        %v541 = vadd.f32 %v406, %v540
        %v542 = vpop.f32.mrb[0].mxu0
        %v543 = vadd.f32 %v406, %v542
        %544 = vmatprep.mubr.f32.mxu0 0.0
        %545 = vmatmul.mubr.f32.gmra.mrb[0].mxu0 %v436
        %v546 = vpop.f32.mrb[0].mxu0
        %v547 = vadd.f32 %v411, %v546
        %v548 = vpop.f32.mrb[0].mxu0
        %v549 = vadd.f32 %v411, %v548
        %550 = vdwg.mxu0
        %v551 = vadd.f32 %v505, %v507
        %552 = vadd.xlane.f32.xlu0 %v551
        %v553 = vpop.xlane.xlu0 %552
        %v554 = vadd.f32 %v511, %v513
        %555 = vadd.xlane.f32.xlu0 %v554
        %v556 = vpop.xlane.xlu0 %555
        %v557 = vadd.f32 %v517, %v519
        %558 = vadd.xlane.f32.xlu0 %v557
        %v559 = vpop.xlane.xlu0 %558
        %v560 = vadd.f32 %v523, %v525
        %561 = vadd.xlane.f32.xlu0 %v560
        %v562 = vpop.xlane.xlu0 %561
        %v563 = vadd.f32 %v529, %v531
        %564 = vadd.xlane.f32.xlu0 %v563
        %v565 = vpop.xlane.xlu0 %564
        %v566 = vadd.f32 %v535, %v537
        %567 = vadd.xlane.f32.xlu0 %v566
        %v568 = vpop.xlane.xlu0 %567
        %v569 = vadd.f32 %v541, %v543
        %570 = vadd.xlane.f32.xlu0 %v569
        %v571 = vpop.xlane.xlu0 %570
        %v572 = vadd.f32 %v547, %v549
        %573 = vadd.xlane.f32.xlu0 %v572
        %v574 = vpop.xlane.xlu0 %573
        %v575 = vmul.f32 %v505, %v505
        %v576 = vmul.f32 %v507, %v507
        %v577 = vmul.f32 %v511, %v511
        %v578 = vmul.f32 %v513, %v513
        %v579 = vmul.f32 %v517, %v517
        %v580 = vmul.f32 %v519, %v519
        %v581 = vmul.f32 %v523, %v523
        %v582 = vmul.f32 %v525, %v525
        %v583 = vmul.f32 %v529, %v529
        %v584 = vmul.f32 %v531, %v531
        %v585 = vmul.f32 %v535, %v535
        %v586 = vmul.f32 %v537, %v537
        %v587 = vmul.f32 %v541, %v541
        %v588 = vmul.f32 %v543, %v543
        %v589 = vmul.f32 %v547, %v547
        %v590 = vmul.f32 %v549, %v549
        %v591 = vadd.f32 %v575, %v576
        %592 = vadd.xlane.f32.xlu0 %v591
        %v593 = vpop.xlane.xlu0 %592
        %v594 = vadd.f32 %v577, %v578
        %595 = vadd.xlane.f32.xlu0 %v594
        %v596 = vpop.xlane.xlu0 %595
        %v597 = vadd.f32 %v579, %v580
        %598 = vadd.xlane.f32.xlu0 %v597
        %v599 = vpop.xlane.xlu0 %598
        %v600 = vadd.f32 %v581, %v582
        %601 = vadd.xlane.f32.xlu0 %v600
        %v602 = vpop.xlane.xlu0 %601
        %v603 = vadd.f32 %v583, %v584
        %604 = vadd.xlane.f32.xlu0 %v603
        %v605 = vpop.xlane.xlu0 %604
        %v606 = vadd.f32 %v585, %v586
        %607 = vadd.xlane.f32.xlu0 %v606
        %v608 = vpop.xlane.xlu0 %607
        %v609 = vadd.f32 %v587, %v588
        %610 = vadd.xlane.f32.xlu0 %v609
        %v611 = vpop.xlane.xlu0 %610
        %v612 = vadd.f32 %v589, %v590
        %613 = vadd.xlane.f32.xlu0 %v612
        %v614 = vpop.xlane.xlu0 %613
        %v615 = vmul.f32 %v553, 0.00390625
        %v616 = vmul.f32 %v556, 0.00390625
        %v617 = vmul.f32 %v559, 0.00390625
        %v618 = vmul.f32 %v562, 0.00390625
        %v619 = vmul.f32 %v565, 0.00390625
        %v620 = vmul.f32 %v568, 0.00390625
        %v621 = vmul.f32 %v571, 0.00390625
        %v622 = vmul.f32 %v574, 0.00390625
        %v623 = vmul.f32 %v593, 0.00390625
        %v624 = vmul.f32 %v596, 0.00390625
        %v625 = vmul.f32 %v599, 0.00390625
        %v626 = vmul.f32 %v602, 0.00390625
        %v627 = vmul.f32 %v605, 0.00390625
        %v628 = vmul.f32 %v608, 0.00390625
        %v629 = vmul.f32 %v611, 0.00390625
        %v630 = vmul.f32 %v614, 0.00390625
        %v631 = vmul.f32 %v615, %v615
        %v632 = vmul.f32 %v616, %v616
        %v633 = vmul.f32 %v617, %v617
        %v634 = vmul.f32 %v618, %v618
        %v635 = vmul.f32 %v619, %v619
        %v636 = vmul.f32 %v620, %v620
        %v637 = vmul.f32 %v621, %v621
        %v638 = vmul.f32 %v622, %v622
        %v639 = vsub.f32 %v623, %v631
        %v640 = vsub.f32 %v624, %v632
        %v641 = vsub.f32 %v625, %v633
        %v642 = vsub.f32 %v626, %v634
        %v643 = vsub.f32 %v627, %v635
        %v644 = vsub.f32 %v628, %v636
        %v645 = vsub.f32 %v629, %v637
        %v646 = vsub.f32 %v630, %v638
        %v647 = vmax.f32 %v639, 0.0
        %v648 = vmax.f32 %v640, 0.0
        %v649 = vmax.f32 %v641, 0.0
        %v650 = vmax.f32 %v642, 0.0
        %v651 = vmax.f32 %v643, 0.0
        %v652 = vmax.f32 %v644, 0.0
        %v653 = vmax.f32 %v645, 0.0
        %v654 = vmax.f32 %v646, 0.0
        %v655 = vadd.f32 %v647, 1e-05
        %v656 = vadd.f32 %v648, 1e-05
        %v657 = vadd.f32 %v649, 1e-05
        %v658 = vadd.f32 %v650, 1e-05
        %v659 = vadd.f32 %v651, 1e-05
        %v660 = vadd.f32 %v652, 1e-05
        %v661 = vadd.f32 %v653, 1e-05
        %v662 = vadd.f32 %v654, 1e-05
        %v663 = vrsqrt.pop %v655
        %v664 = vrsqrt.pop %v656
        %v665 = vrsqrt.pop %v657
        %v666 = vrsqrt.pop %v658
        %v667 = vrsqrt.pop %v659
        %v668 = vrsqrt.pop %v660
        %v669 = vrsqrt.pop %v661
        %v670 = vrsqrt.pop %v662
        %v671 = vsub.f32 %v505, %v615
        %v672 = vsub.f32 %v507, %v615
        %v673 = vsub.f32 %v511, %v616
        %v674 = vsub.f32 %v513, %v616
        %v675 = vsub.f32 %v517, %v617
        %v676 = vsub.f32 %v519, %v617
        %v677 = vsub.f32 %v523, %v618
        %v678 = vsub.f32 %v525, %v618
        %v679 = vsub.f32 %v529, %v619
        %v680 = vsub.f32 %v531, %v619
        %v681 = vsub.f32 %v535, %v620
        %v682 = vsub.f32 %v537, %v620
        %v683 = vsub.f32 %v541, %v621
        %v684 = vsub.f32 %v543, %v621
        %v685 = vsub.f32 %v547, %v622
        %v686 = vsub.f32 %v549, %v622
        %v687 = vmul.f32 %v671, %v663
        %v688 = vmul.f32 %v672, %v663
        %v689 = vmul.f32 %v673, %v664
        %v690 = vmul.f32 %v674, %v664
        %v691 = vmul.f32 %v675, %v665
        %v692 = vmul.f32 %v676, %v665
        %v693 = vmul.f32 %v677, %v666
        %v694 = vmul.f32 %v678, %v666
        %v695 = vmul.f32 %v679, %v667
        %v696 = vmul.f32 %v680, %v667
        %v697 = vmul.f32 %v681, %v668
        %v698 = vmul.f32 %v682, %v668
        %v699 = vmul.f32 %v683, %v669
        %v700 = vmul.f32 %v684, %v669
        %v701 = vmul.f32 %v685, %v670
        %v702 = vmul.f32 %v686, %v670
        %v703 = vmul.f32 %v687, 0.5
        %v704 = vmul.f32 %v688, 0.5
        %v705 = vmul.f32 %v689, 0.5
        %v706 = vmul.f32 %v690, 0.5
        %v707 = vmul.f32 %v691, 0.5
        %v708 = vmul.f32 %v692, 0.5
        %v709 = vmul.f32 %v693, 0.5
        %v710 = vmul.f32 %v694, 0.5
        %v711 = vmul.f32 %v695, 0.5
        %v712 = vmul.f32 %v696, 0.5
        %v713 = vmul.f32 %v697, 0.5
        %v714 = vmul.f32 %v698, 0.5
        %v715 = vmul.f32 %v699, 0.5
        %v716 = vmul.f32 %v700, 0.5
        %v717 = vmul.f32 %v701, 0.5
        %v718 = vmul.f32 %v702, 0.5
        %v719 = vmul.f32 %v687, 0.70710677
        %v720 = vmul.f32 %v688, 0.70710677
        %v721 = vmul.f32 %v689, 0.70710677
        %v722 = vmul.f32 %v690, 0.70710677
        %v723 = vmul.f32 %v691, 0.70710677
        %v724 = vmul.f32 %v692, 0.70710677
        %v725 = vmul.f32 %v693, 0.70710677
        %v726 = vmul.f32 %v694, 0.70710677
        %v727 = vmul.f32 %v695, 0.70710677
        %v728 = vmul.f32 %v696, 0.70710677
        %v729 = vmul.f32 %v697, 0.70710677
        %v730 = vmul.f32 %v698, 0.70710677
        %v731 = vmul.f32 %v699, 0.70710677
        %v732 = vmul.f32 %v700, 0.70710677
        %v733 = vmul.f32 %v701, 0.70710677
        %v734 = vmul.f32 %v702, 0.70710677
        %v735 = vand.u32 2147483647, %v719
        %v736 = vand.u32 2147483647, %v720
        %v737 = vand.u32 2147483647, %v721
        %v738 = vand.u32 2147483647, %v722
        %v739 = vand.u32 2147483647, %v723
        %v740 = vand.u32 2147483647, %v724
        %v741 = vand.u32 2147483647, %v725
        %v742 = vand.u32 2147483647, %v726
        %v743 = vand.u32 2147483647, %v727
        %v744 = vand.u32 2147483647, %v728
        %v745 = vand.u32 2147483647, %v729
        %v746 = vand.u32 2147483647, %v730
        %v747 = vand.u32 2147483647, %v731
        %v748 = vand.u32 2147483647, %v732
        %v749 = vand.u32 2147483647, %v733
        %v750 = vand.u32 2147483647, %v734
        %v751 = vmul.f32 %v735, 0.3275911
        %v752 = vmul.f32 %v736, 0.3275911
        %v753 = vmul.f32 %v737, 0.3275911
        %v754 = vmul.f32 %v738, 0.3275911
        %v755 = vmul.f32 %v739, 0.3275911
        %v756 = vmul.f32 %v740, 0.3275911
        %v757 = vmul.f32 %v741, 0.3275911
        %v758 = vmul.f32 %v742, 0.3275911
        %v759 = vmul.f32 %v743, 0.3275911
        %v760 = vmul.f32 %v744, 0.3275911
        %v761 = vmul.f32 %v745, 0.3275911
        %v762 = vmul.f32 %v746, 0.3275911
        %v763 = vmul.f32 %v747, 0.3275911
        %v764 = vmul.f32 %v748, 0.3275911
        %v765 = vmul.f32 %v749, 0.3275911
        %v766 = vmul.f32 %v750, 0.3275911
        %v767 = vadd.f32 %v751, 1.0
        %v768 = vadd.f32 %v752, 1.0
        %v769 = vadd.f32 %v753, 1.0
        %v770 = vadd.f32 %v754, 1.0
        %v771 = vadd.f32 %v755, 1.0
        %v772 = vadd.f32 %v756, 1.0
        %v773 = vadd.f32 %v757, 1.0
        %v774 = vadd.f32 %v758, 1.0
        %v775 = vadd.f32 %v759, 1.0
        %v776 = vadd.f32 %v760, 1.0
        %v777 = vadd.f32 %v761, 1.0
        %v778 = vadd.f32 %v762, 1.0
        %v779 = vadd.f32 %v763, 1.0
        %v780 = vadd.f32 %v764, 1.0
        %v781 = vadd.f32 %v765, 1.0
        %v782 = vadd.f32 %v766, 1.0
        %v783 = vrcp.pop %v767
        %v784 = vmul.f32 1.0, %v783
        %v785 = vrcp.pop %v768
        %v786 = vmul.f32 1.0, %v785
        %v787 = vrcp.pop %v769
        %v788 = vmul.f32 1.0, %v787
        %v789 = vrcp.pop %v770
        %v790 = vmul.f32 1.0, %v789
        %v791 = vrcp.pop %v771
        %v792 = vmul.f32 1.0, %v791
        %v793 = vrcp.pop %v772
        %v794 = vmul.f32 1.0, %v793
        %v795 = vrcp.pop %v773
        %v796 = vmul.f32 1.0, %v795
        %v797 = vrcp.pop %v774
        %v798 = vmul.f32 1.0, %v797
        %v799 = vrcp.pop %v775
        %v800 = vmul.f32 1.0, %v799
        %v801 = vrcp.pop %v776
        %v802 = vmul.f32 1.0, %v801
        %v803 = vrcp.pop %v777
        %v804 = vmul.f32 1.0, %v803
        %v805 = vrcp.pop %v778
        %v806 = vmul.f32 1.0, %v805
        %v807 = vrcp.pop %v779
        %v808 = vmul.f32 1.0, %v807
        %v809 = vrcp.pop %v780
        %v810 = vmul.f32 1.0, %v809
        %v811 = vrcp.pop %v781
        %v812 = vmul.f32 1.0, %v811
        %v813 = vrcp.pop %v782
        %v814 = vmul.f32 1.0, %v813
        %v815 = vmul.f32 %v784, 1.0614054
        %v816 = vmul.f32 %v786, 1.0614054
        %v817 = vmul.f32 %v788, 1.0614054
        %v818 = vmul.f32 %v790, 1.0614054
        %v819 = vmul.f32 %v792, 1.0614054
        %v820 = vmul.f32 %v794, 1.0614054
        %v821 = vmul.f32 %v796, 1.0614054
        %v822 = vmul.f32 %v798, 1.0614054
        %v823 = vmul.f32 %v800, 1.0614054
        %v824 = vmul.f32 %v802, 1.0614054
        %v825 = vmul.f32 %v804, 1.0614054
        %v826 = vmul.f32 %v806, 1.0614054
        %v827 = vmul.f32 %v808, 1.0614054
        %v828 = vmul.f32 %v810, 1.0614054
        %v829 = vmul.f32 %v812, 1.0614054
        %v830 = vmul.f32 %v814, 1.0614054
        %v831 = vadd.f32 %v815, -1.4531521
        %v832 = vadd.f32 %v816, -1.4531521
        %v833 = vadd.f32 %v817, -1.4531521
        %v834 = vadd.f32 %v818, -1.4531521
        %v835 = vadd.f32 %v819, -1.4531521
        %v836 = vadd.f32 %v820, -1.4531521
        %v837 = vadd.f32 %v821, -1.4531521
        %v838 = vadd.f32 %v822, -1.4531521
        %v839 = vadd.f32 %v823, -1.4531521
        %v840 = vadd.f32 %v824, -1.4531521
        %v841 = vadd.f32 %v825, -1.4531521
        %v842 = vadd.f32 %v826, -1.4531521
        %v843 = vadd.f32 %v827, -1.4531521
        %v844 = vadd.f32 %v828, -1.4531521
        %v845 = vadd.f32 %v829, -1.4531521
        %v846 = vadd.f32 %v830, -1.4531521
        %v847 = vmul.f32 %v831, %v784
        %v848 = vmul.f32 %v832, %v786
        %v849 = vmul.f32 %v833, %v788
        %v850 = vmul.f32 %v834, %v790
        %v851 = vmul.f32 %v835, %v792
        %v852 = vmul.f32 %v836, %v794
        %v853 = vmul.f32 %v837, %v796
        %v854 = vmul.f32 %v838, %v798
        %v855 = vmul.f32 %v839, %v800
        %v856 = vmul.f32 %v840, %v802
        %v857 = vmul.f32 %v841, %v804
        %v858 = vmul.f32 %v842, %v806
        %v859 = vmul.f32 %v843, %v808
        %v860 = vmul.f32 %v844, %v810
        %v861 = vmul.f32 %v845, %v812
        %v862 = vmul.f32 %v846, %v814
        %v863 = vadd.f32 %v847, 1.4214138
        %v864 = vadd.f32 %v848, 1.4214138
        %v865 = vadd.f32 %v849, 1.4214138
        %v866 = vadd.f32 %v850, 1.4214138
        %v867 = vadd.f32 %v851, 1.4214138
        %v868 = vadd.f32 %v852, 1.4214138
        %v869 = vadd.f32 %v853, 1.4214138
        %v870 = vadd.f32 %v854, 1.4214138
        %v871 = vadd.f32 %v855, 1.4214138
        %v872 = vadd.f32 %v856, 1.4214138
        %v873 = vadd.f32 %v857, 1.4214138
        %v874 = vadd.f32 %v858, 1.4214138
        %v875 = vadd.f32 %v859, 1.4214138
        %v876 = vadd.f32 %v860, 1.4214138
        %v877 = vadd.f32 %v861, 1.4214138
        %v878 = vadd.f32 %v862, 1.4214138
        %v879 = vmul.f32 %v863, %v784
        %v880 = vmul.f32 %v864, %v786
        %v881 = vmul.f32 %v865, %v788
        %v882 = vmul.f32 %v866, %v790
        %v883 = vmul.f32 %v867, %v792
        %v884 = vmul.f32 %v868, %v794
        %v885 = vmul.f32 %v869, %v796
        %v886 = vmul.f32 %v870, %v798
        %v887 = vmul.f32 %v871, %v800
        %v888 = vmul.f32 %v872, %v802
        %v889 = vmul.f32 %v873, %v804
        %v890 = vmul.f32 %v874, %v806
        %v891 = vmul.f32 %v875, %v808
        %v892 = vmul.f32 %v876, %v810
        %v893 = vmul.f32 %v877, %v812
        %v894 = vmul.f32 %v878, %v814
        %v895 = vadd.f32 %v879, -0.28449672
        %v896 = vadd.f32 %v880, -0.28449672
        %v897 = vadd.f32 %v881, -0.28449672
        %v898 = vadd.f32 %v882, -0.28449672
        %v899 = vadd.f32 %v883, -0.28449672
        %v900 = vadd.f32 %v884, -0.28449672
        %v901 = vadd.f32 %v885, -0.28449672
        %v902 = vadd.f32 %v886, -0.28449672
        %v903 = vadd.f32 %v887, -0.28449672
        %v904 = vadd.f32 %v888, -0.28449672
        %v905 = vadd.f32 %v889, -0.28449672
        %v906 = vadd.f32 %v890, -0.28449672
        %v907 = vadd.f32 %v891, -0.28449672
        %v908 = vadd.f32 %v892, -0.28449672
        %v909 = vadd.f32 %v893, -0.28449672
        %v910 = vadd.f32 %v894, -0.28449672
        %v911 = vmul.f32 %v895, %v784
        %v912 = vmul.f32 %v896, %v786
        %v913 = vmul.f32 %v897, %v788
        %v914 = vmul.f32 %v898, %v790
        %v915 = vmul.f32 %v899, %v792
        %v916 = vmul.f32 %v900, %v794
        %v917 = vmul.f32 %v901, %v796
        %v918 = vmul.f32 %v902, %v798
        %v919 = vmul.f32 %v903, %v800
        %v920 = vmul.f32 %v904, %v802
        %v921 = vmul.f32 %v905, %v804
        %v922 = vmul.f32 %v906, %v806
        %v923 = vmul.f32 %v907, %v808
        %v924 = vmul.f32 %v908, %v810
        %v925 = vmul.f32 %v909, %v812
        %v926 = vmul.f32 %v910, %v814
        %v927 = vadd.f32 %v911, 0.2548296
        %v928 = vadd.f32 %v912, 0.2548296
        %v929 = vadd.f32 %v913, 0.2548296
        %v930 = vadd.f32 %v914, 0.2548296
        %v931 = vadd.f32 %v915, 0.2548296
        %v932 = vadd.f32 %v916, 0.2548296
        %v933 = vadd.f32 %v917, 0.2548296
        %v934 = vadd.f32 %v918, 0.2548296
        %v935 = vadd.f32 %v919, 0.2548296
        %v936 = vadd.f32 %v920, 0.2548296
        %v937 = vadd.f32 %v921, 0.2548296
        %v938 = vadd.f32 %v922, 0.2548296
        %v939 = vadd.f32 %v923, 0.2548296
        %v940 = vadd.f32 %v924, 0.2548296
        %v941 = vadd.f32 %v925, 0.2548296
        %v942 = vadd.f32 %v926, 0.2548296
        %v943 = vmul.f32 %v927, %v784
        %v944 = vmul.f32 %v928, %v786
        %v945 = vmul.f32 %v929, %v788
        %v946 = vmul.f32 %v930, %v790
        %v947 = vmul.f32 %v931, %v792
        %v948 = vmul.f32 %v932, %v794
        %v949 = vmul.f32 %v933, %v796
        %v950 = vmul.f32 %v934, %v798
        %v951 = vmul.f32 %v935, %v800
        %v952 = vmul.f32 %v936, %v802
        %v953 = vmul.f32 %v937, %v804
        %v954 = vmul.f32 %v938, %v806
        %v955 = vmul.f32 %v939, %v808
        %v956 = vmul.f32 %v940, %v810
        %v957 = vmul.f32 %v941, %v812
        %v958 = vmul.f32 %v942, %v814
        %v959 = vsub.f32 0.0, %v735
        %v960 = vsub.f32 0.0, %v736
        %v961 = vsub.f32 0.0, %v737
        %v962 = vsub.f32 0.0, %v738
        %v963 = vsub.f32 0.0, %v739
        %v964 = vsub.f32 0.0, %v740
        %v965 = vsub.f32 0.0, %v741
        %v966 = vsub.f32 0.0, %v742
        %v967 = vsub.f32 0.0, %v743
        %v968 = vsub.f32 0.0, %v744
        %v969 = vsub.f32 0.0, %v745
        %v970 = vsub.f32 0.0, %v746
        %v971 = vsub.f32 0.0, %v747
        %v972 = vsub.f32 0.0, %v748
        %v973 = vsub.f32 0.0, %v749
        %v974 = vsub.f32 0.0, %v750
        %v975 = vmul.f32 %v959, %v735
        %v976 = vmul.f32 %v960, %v736
        %v977 = vmul.f32 %v961, %v737
        %v978 = vmul.f32 %v962, %v738
        %v979 = vmul.f32 %v963, %v739
        %v980 = vmul.f32 %v964, %v740
        %v981 = vmul.f32 %v965, %v741
        %v982 = vmul.f32 %v966, %v742
        %v983 = vmul.f32 %v967, %v743
        %v984 = vmul.f32 %v968, %v744
        %v985 = vmul.f32 %v969, %v745
        %v986 = vmul.f32 %v970, %v746
        %v987 = vmul.f32 %v971, %v747
        %v988 = vmul.f32 %v972, %v748
        %v989 = vmul.f32 %v973, %v749
        %v990 = vmul.f32 %v974, %v750
        %v991 = vmul.f32 %v975, 1.442695
        %v992 = vpow.pop %v991
        %v993 = vmul.f32 %v976, 1.442695
        %v994 = vpow.pop %v993
        %v995 = vmul.f32 %v977, 1.442695
        %v996 = vpow.pop %v995
        %v997 = vmul.f32 %v978, 1.442695
        %v998 = vpow.pop %v997
        %v999 = vmul.f32 %v979, 1.442695
        %v1000 = vpow.pop %v999
        %v1001 = vmul.f32 %v980, 1.442695
        %v1002 = vpow.pop %v1001
        %v1003 = vmul.f32 %v981, 1.442695
        %v1004 = vpow.pop %v1003
        %v1005 = vmul.f32 %v982, 1.442695
        %v1006 = vpow.pop %v1005
        %v1007 = vmul.f32 %v983, 1.442695
        %v1008 = vpow.pop %v1007
        %v1009 = vmul.f32 %v984, 1.442695
        %v1010 = vpow.pop %v1009
        %v1011 = vmul.f32 %v985, 1.442695
        %v1012 = vpow.pop %v1011
        %v1013 = vmul.f32 %v986, 1.442695
        %v1014 = vpow.pop %v1013
        %v1015 = vmul.f32 %v987, 1.442695
        %v1016 = vpow.pop %v1015
        %v1017 = vmul.f32 %v988, 1.442695
        %v1018 = vpow.pop %v1017
        %v1019 = vmul.f32 %v989, 1.442695
        %v1020 = vpow.pop %v1019
        %v1021 = vmul.f32 %v990, 1.442695
        %v1022 = vpow.pop %v1021
        %v1023 = vmul.f32 %v943, %v992
        %v1024 = vmul.f32 %v944, %v994
        %v1025 = vmul.f32 %v945, %v996
        %v1026 = vmul.f32 %v946, %v998
        %v1027 = vmul.f32 %v947, %v1000
        %v1028 = vmul.f32 %v948, %v1002
        %v1029 = vmul.f32 %v949, %v1004
        %v1030 = vmul.f32 %v950, %v1006
        %v1031 = vmul.f32 %v951, %v1008
        %v1032 = vmul.f32 %v952, %v1010
        %v1033 = vmul.f32 %v953, %v1012
        %v1034 = vmul.f32 %v954, %v1014
        %v1035 = vmul.f32 %v955, %v1016
        %v1036 = vmul.f32 %v956, %v1018
        %v1037 = vmul.f32 %v957, %v1020
        %v1038 = vmul.f32 %v958, %v1022
        %v1039 = vsub.f32 1.0, %v1023
        %v1040 = vsub.f32 1.0, %v1024
        %v1041 = vsub.f32 1.0, %v1025
        %v1042 = vsub.f32 1.0, %v1026
        %v1043 = vsub.f32 1.0, %v1027
        %v1044 = vsub.f32 1.0, %v1028
        %v1045 = vsub.f32 1.0, %v1029
        %v1046 = vsub.f32 1.0, %v1030
        %v1047 = vsub.f32 1.0, %v1031
        %v1048 = vsub.f32 1.0, %v1032
        %v1049 = vsub.f32 1.0, %v1033
        %v1050 = vsub.f32 1.0, %v1034
        %v1051 = vsub.f32 1.0, %v1035
        %v1052 = vsub.f32 1.0, %v1036
        %v1053 = vsub.f32 1.0, %v1037
        %v1054 = vsub.f32 1.0, %v1038
        %vm1055 = vcmp.lt.f32.partialorder %v719, 0.0
        %vm1056 = vcmp.lt.f32.partialorder %v720, 0.0
        %vm1057 = vcmp.lt.f32.partialorder %v721, 0.0
        %vm1058 = vcmp.lt.f32.partialorder %v722, 0.0
        %vm1059 = vcmp.lt.f32.partialorder %v723, 0.0
        %vm1060 = vcmp.lt.f32.partialorder %v724, 0.0
        %vm1061 = vcmp.lt.f32.partialorder %v725, 0.0
        %vm1062 = vcmp.lt.f32.partialorder %v726, 0.0
        %vm1063 = vcmp.lt.f32.partialorder %v727, 0.0
        %vm1064 = vcmp.lt.f32.partialorder %v728, 0.0
        %vm1065 = vcmp.lt.f32.partialorder %v729, 0.0
        %vm1066 = vcmp.lt.f32.partialorder %v730, 0.0
        %vm1067 = vcmp.lt.f32.partialorder %v731, 0.0
        %vm1068 = vcmp.lt.f32.partialorder %v732, 0.0
        %vm1069 = vcmp.lt.f32.partialorder %v733, 0.0
        %vm1070 = vcmp.lt.f32.partialorder %v734, 0.0
        %v1071 = vsub.f32 0.0, %v1039
        %v1072 = vsub.f32 0.0, %v1040
        %v1073 = vsub.f32 0.0, %v1041
        %v1074 = vsub.f32 0.0, %v1042
        %v1075 = vsub.f32 0.0, %v1043
        %v1076 = vsub.f32 0.0, %v1044
        %v1077 = vsub.f32 0.0, %v1045
        %v1078 = vsub.f32 0.0, %v1046
        %v1079 = vsub.f32 0.0, %v1047
        %v1080 = vsub.f32 0.0, %v1048
        %v1081 = vsub.f32 0.0, %v1049
        %v1082 = vsub.f32 0.0, %v1050
        %v1083 = vsub.f32 0.0, %v1051
        %v1084 = vsub.f32 0.0, %v1052
        %v1085 = vsub.f32 0.0, %v1053
        %v1086 = vsub.f32 0.0, %v1054
        %v1087 = vsel %vm1055, %v1071, %v1039
        %v1088 = vsel %vm1056, %v1072, %v1040
        %v1089 = vsel %vm1057, %v1073, %v1041
        %v1090 = vsel %vm1058, %v1074, %v1042
        %v1091 = vsel %vm1059, %v1075, %v1043
        %v1092 = vsel %vm1060, %v1076, %v1044
        %v1093 = vsel %vm1061, %v1077, %v1045
        %v1094 = vsel %vm1062, %v1078, %v1046
        %v1095 = vsel %vm1063, %v1079, %v1047
        %v1096 = vsel %vm1064, %v1080, %v1048
        %v1097 = vsel %vm1065, %v1081, %v1049
        %v1098 = vsel %vm1066, %v1082, %v1050
        %v1099 = vsel %vm1067, %v1083, %v1051
        %v1100 = vsel %vm1068, %v1084, %v1052
        %v1101 = vsel %vm1069, %v1085, %v1053
        %v1102 = vsel %vm1070, %v1086, %v1054
        %v1103 = vadd.f32 %v1087, 1.0
        %v1104 = vadd.f32 %v1088, 1.0
        %v1105 = vadd.f32 %v1089, 1.0
        %v1106 = vadd.f32 %v1090, 1.0
        %v1107 = vadd.f32 %v1091, 1.0
        %v1108 = vadd.f32 %v1092, 1.0
        %v1109 = vadd.f32 %v1093, 1.0
        %v1110 = vadd.f32 %v1094, 1.0
        %v1111 = vadd.f32 %v1095, 1.0
        %v1112 = vadd.f32 %v1096, 1.0
        %v1113 = vadd.f32 %v1097, 1.0
        %v1114 = vadd.f32 %v1098, 1.0
        %v1115 = vadd.f32 %v1099, 1.0
        %v1116 = vadd.f32 %v1100, 1.0
        %v1117 = vadd.f32 %v1101, 1.0
        %v1118 = vadd.f32 %v1102, 1.0
        %v1119 = vmul.f32 %v703, %v1103
        %v1120 = vmul.f32 %v704, %v1104
        %v1121 = vmul.f32 %v705, %v1105
        %v1122 = vmul.f32 %v706, %v1106
        %v1123 = vmul.f32 %v707, %v1107
        %v1124 = vmul.f32 %v708, %v1108
        %v1125 = vmul.f32 %v709, %v1109
        %v1126 = vmul.f32 %v710, %v1110
        %v1127 = vmul.f32 %v711, %v1111
        %v1128 = vmul.f32 %v712, %v1112
        %v1129 = vmul.f32 %v713, %v1113
        %v1130 = vmul.f32 %v714, %v1114
        %v1131 = vmul.f32 %v715, %v1115
        %v1132 = vmul.f32 %v716, %v1116
        %v1133 = vmul.f32 %v717, %v1117
        %v1134 = vmul.f32 %v718, %v1118
        %1135 = vst [vmem:[%s343] sm:$0xff] %v1119
        %1136 = vst [vmem:[%s343 + $0x8] sm:$0xff] %v1120
        %1137 = vst [vmem:[%s343 + $0x10] sm:$0xff] %v1121
        %1138 = vst [vmem:[%s343 + $0x18] sm:$0xff] %v1122
        %1139 = vst [vmem:[%s343 + $0x20] sm:$0xff] %v1123
        %1140 = vst [vmem:[%s343 + $0x28] sm:$0xff] %v1124
        %1141 = vst [vmem:[%s343 + $0x30] sm:$0xff] %v1125
        %1142 = vst [vmem:[%s343 + $0x38] sm:$0xff] %v1126
        %1143 = vst [vmem:[%s343 + $0x40] sm:$0xff] %v1127
        %1144 = vst [vmem:[%s343 + $0x48] sm:$0xff] %v1128
        %1145 = vst [vmem:[%s343 + $0x50] sm:$0xff] %v1129
        %1146 = vst [vmem:[%s343 + $0x58] sm:$0xff] %v1130
        %1147 = vst [vmem:[%s343 + $0x60] sm:$0xff] %v1131
        %1148 = vst [vmem:[%s343 + $0x68] sm:$0xff] %v1132
        %1149 = vst [vmem:[%s343 + $0x70] sm:$0xff] %v1133
        %1150 = vst [vmem:[%s343 + $0x78] sm:$0xff] %v1134
        %v1151 = vld [vmem:[%s3] sm:$0xff]
        %v1152 = vld [vmem:[%s3 + $0x8] sm:$0xff]
        %v1153 = vld [vmem:[%s3 + $0x10] sm:$0xff]
        %v1154 = vld [vmem:[%s3 + $0x18] sm:$0xff]
        %v1155 = vld [vmem:[%s3 + $0x20] sm:$0xff]
        %v1156 = vld [vmem:[%s3 + $0x28] sm:$0xff]
        %v1157 = vld [vmem:[%s3 + $0x30] sm:$0xff]
        %v1158 = vld [vmem:[%s3 + $0x38] sm:$0xff]
        %v1159 = vld [vmem:[%s3 + $0x40] sm:$0xff]
        %v1160 = vld [vmem:[%s3 + $0x48] sm:$0xff]
        %v1161 = vld [vmem:[%s3 + $0x50] sm:$0xff]
        %v1162 = vld [vmem:[%s3 + $0x58] sm:$0xff]
        %v1163 = vld [vmem:[%s3 + $0x60] sm:$0xff]
        %v1164 = vld [vmem:[%s3 + $0x68] sm:$0xff]
        %v1165 = vld [vmem:[%s3 + $0x70] sm:$0xff]
        %v1166 = vld [vmem:[%s3 + $0x78] sm:$0xff]
        %v1167 = vld [vmem:[#allocation4] sm:$0xff]
        %v1168 = vld [vmem:[#allocation4 + $0x8] sm:$0xff]
        %v1169 = vld [vmem:[#allocation4 + $0x10] sm:$0xff]
        %v1170 = vld [vmem:[#allocation4 + $0x18] sm:$0xff]
        %v1171 = vld [vmem:[#allocation4 + $0x20] sm:$0xff]
        %v1172 = vld [vmem:[#allocation4 + $0x28] sm:$0xff]
        %v1173 = vld [vmem:[#allocation4 + $0x30] sm:$0xff]
        %v1174 = vld [vmem:[#allocation4 + $0x38] sm:$0xff]
        %v1175 = vld [vmem:[#allocation4 + $0x40] sm:$0xff]
        %v1176 = vld [vmem:[#allocation4 + $0x48] sm:$0xff]
        %v1177 = vld [vmem:[#allocation4 + $0x50] sm:$0xff]
        %v1178 = vld [vmem:[#allocation4 + $0x58] sm:$0xff]
        %v1179 = vld [vmem:[#allocation4 + $0x60] sm:$0xff]
        %v1180 = vld [vmem:[#allocation4 + $0x68] sm:$0xff]
        %v1181 = vld [vmem:[#allocation4 + $0x70] sm:$0xff]
        %v1182 = vld [vmem:[#allocation4 + $0x78] sm:$0xff]
        %1184 = vset.pattern.permute.xlu0 0
        %1185 = vperm.xlu0 %1184, %v1167
        %v1186 = vpop.permute.xlu0 %1185
        %1189 = vset.pattern.permute.xlu0 0
        %1190 = vperm.xlu0 %1189, %v1168
        %v1191 = vpop.permute.xlu0 %1190
        %1194 = vset.pattern.permute.xlu0 0
        %1195 = vperm.xlu0 %1194, %v1169
        %v1196 = vpop.permute.xlu0 %1195
        %1199 = vset.pattern.permute.xlu0 0
        %1200 = vperm.xlu0 %1199, %v1170
        %v1201 = vpop.permute.xlu0 %1200
        %1204 = vset.pattern.permute.xlu0 0
        %1205 = vperm.xlu0 %1204, %v1171
        %v1206 = vpop.permute.xlu0 %1205
        %1209 = vset.pattern.permute.xlu0 0
        %1210 = vperm.xlu0 %1209, %v1172
        %v1211 = vpop.permute.xlu0 %1210
        %1214 = vset.pattern.permute.xlu0 0
        %1215 = vperm.xlu0 %1214, %v1173
        %v1216 = vpop.permute.xlu0 %1215
        %1219 = vset.pattern.permute.xlu0 0
        %1220 = vperm.xlu0 %1219, %v1174
        %v1221 = vpop.permute.xlu0 %1220
        %1224 = vset.pattern.permute.xlu0 0
        %1225 = vperm.xlu0 %1224, %v1175
        %v1226 = vpop.permute.xlu0 %1225
        %1229 = vset.pattern.permute.xlu0 0
        %1230 = vperm.xlu0 %1229, %v1176
        %v1231 = vpop.permute.xlu0 %1230
        %1234 = vset.pattern.permute.xlu0 0
        %1235 = vperm.xlu0 %1234, %v1177
        %v1236 = vpop.permute.xlu0 %1235
        %1239 = vset.pattern.permute.xlu0 0
        %1240 = vperm.xlu0 %1239, %v1178
        %v1241 = vpop.permute.xlu0 %1240
        %1244 = vset.pattern.permute.xlu0 0
        %1245 = vperm.xlu0 %1244, %v1179
        %v1246 = vpop.permute.xlu0 %1245
        %1249 = vset.pattern.permute.xlu0 0
        %1250 = vperm.xlu0 %1249, %v1180
        %v1251 = vpop.permute.xlu0 %1250
        %1254 = vset.pattern.permute.xlu0 0
        %1255 = vperm.xlu0 %1254, %v1181
        %v1256 = vpop.permute.xlu0 %1255
        %1259 = vset.pattern.permute.xlu0 0
        %1260 = vperm.xlu0 %1259, %v1182
        %v1261 = vpop.permute.xlu0 %1260
        %vm1263 = vcmask 523264
        %v1265 = vsel %vm1263, %v1151, 0
        %v1268 = vsel %vm1263, %v1152, 0
        %v1271 = vsel %vm1263, %v1153, 0
        %v1274 = vsel %vm1263, %v1154, 0
        %v1277 = vsel %vm1263, %v1155, 0
        %v1280 = vsel %vm1263, %v1156, 0
        %v1283 = vsel %vm1263, %v1157, 0
        %v1286 = vsel %vm1263, %v1158, 0
        %v1289 = vsel %vm1263, %v1159, 0
        %v1292 = vsel %vm1263, %v1160, 0
        %v1295 = vsel %vm1263, %v1161, 0
        %v1298 = vsel %vm1263, %v1162, 0
        %v1301 = vsel %vm1263, %v1163, 0
        %v1304 = vsel %vm1263, %v1164, 0
        %v1307 = vsel %vm1263, %v1165, 0
        %v1310 = vsel %vm1263, %v1166, 0
        %1312 = vmatprep.subr.mxu0 %v1120
        %1313 = vmatpush1.msra.mxu0 %v1119
        %1314 = vmatprep.subr.mxu0 %v1122
        %1315 = vmatpush1.msra.mxu0 %v1121
        %1316 = vmatprep.subr.mxu0 %v1124
        %1317 = vmatpush1.msra.mxu0 %v1123
        %1318 = vmatprep.subr.mxu0 %v1126
        %1319 = vmatpush1.msra.mxu0 %v1125
        %1320 = vmatprep.subr.mxu0 %v1128
        %1321 = vmatpush1.msra.mxu0 %v1127
        %1322 = vmatprep.subr.mxu0 %v1130
        %1323 = vmatpush1.msra.mxu0 %v1129
        %1324 = vmatprep.subr.mxu0 %v1132
        %1325 = vmatpush1.msra.mxu0 %v1131
        %1326 = vmatprep.subr.mxu0 %v1134
        %1327 = vmatpush1.msra.mxu0 %v1133
        %1328 = vmatprep.subr.mxu0 0.0
        %1329 = vmatpush1.msra.mxu0 0.0
        %1330 = vmatprep.subr.mxu0 0.0
        %1331 = vmatpush1.msra.mxu0 0.0
        %1332 = vmatprep.subr.mxu0 0.0
        %1333 = vmatpush1.msra.mxu0 0.0
        %1334 = vmatprep.subr.mxu0 0.0
        %1335 = vmatpush1.msra.mxu0 0.0
        %1336 = vmatprep.subr.mxu0 0.0
        %1337 = vmatpush1.msra.mxu0 0.0
        %1338 = vmatprep.subr.mxu0 0.0
        %1339 = vmatpush1.msra.mxu0 0.0
        %1340 = vmatprep.subr.mxu0 0.0
        %1341 = vmatpush1.msra.mxu0 0.0
        %1342 = vmatprep.subr.mxu0 0.0
        %1343 = vmatpush1.msra.mxu0 0.0
        %1344 = vmatprep.subr.mxu0 0.0
        %1345 = vmatpush1.msra.mxu0 0.0
        %1346 = vmatprep.subr.mxu0 0.0
        %1347 = vmatpush1.msra.mxu0 0.0
        %1348 = vmatprep.subr.mxu0 0.0
        %1349 = vmatpush1.msra.mxu0 0.0
        %1350 = vmatprep.subr.mxu0 0.0
        %1351 = vmatpush1.msra.mxu0 0.0
        %1352 = vmatprep.subr.mxu0 0.0
        %1353 = vmatpush1.msra.mxu0 0.0
        %1354 = vmatprep.subr.mxu0 0.0
        %1355 = vmatpush1.msra.mxu0 0.0
        %1356 = vmatprep.subr.mxu0 0.0
        %1357 = vmatpush1.msra.mxu0 0.0
        %1358 = vmatprep.subr.mxu0 0.0
        %1359 = vmatpush1.msra.mxu0 0.0
        %1360 = vmatprep.subr.mxu0 0.0
        %1361 = vmatpush1.msra.mxu0 0.0
        %1362 = vmatprep.subr.mxu0 0.0
        %1363 = vmatpush1.msra.mxu0 0.0
        %1364 = vmatprep.subr.mxu0 0.0
        %1365 = vmatpush1.msra.mxu0 0.0
        %1366 = vmatprep.subr.mxu0 0.0
        %1367 = vmatpush1.msra.mxu0 0.0
        %1368 = vmatprep.subr.mxu0 0.0
        %1369 = vmatpush1.msra.mxu0 0.0
        %1370 = vmatprep.subr.mxu0 0.0
        %1371 = vmatpush1.msra.mxu0 0.0
        %1372 = vmatprep.subr.mxu0 0.0
        %1373 = vmatpush1.msra.mxu0 0.0
        %1374 = vmatprep.subr.mxu0 0.0
        %1375 = vmatpush1.msra.mxu0 0.0
        %1376 = vmatprep.mubr.f32.mxu0 0.0
        %1377 = vmatmul.mubr.f32.gmra.mrb[0].mxu0 %v1265
        %v1378 = vpop.f32.mrb[0].mxu0
        %v1379 = vadd.f32 %v1186, %v1378
        %v1380 = vpop.f32.mrb[0].mxu0
        %v1381 = vadd.f32 %v1186, %v1380
        %1382 = vmatprep.mubr.f32.mxu0 0.0
        %1383 = vmatmul.mubr.f32.gmra.mrb[0].mxu0 %v1268
        %v1384 = vpop.f32.mrb[0].mxu0
        %v1385 = vadd.f32 %v1191, %v1384
        %v1386 = vpop.f32.mrb[0].mxu0
        %v1387 = vadd.f32 %v1191, %v1386
        %1388 = vmatprep.mubr.f32.mxu0 0.0
        %1389 = vmatmul.mubr.f32.gmra.mrb[0].mxu0 %v1271
        %v1390 = vpop.f32.mrb[0].mxu0
        %v1391 = vadd.f32 %v1196, %v1390
        %v1392 = vpop.f32.mrb[0].mxu0
        %v1393 = vadd.f32 %v1196, %v1392
        %1394 = vmatprep.mubr.f32.mxu0 0.0
        %1395 = vmatmul.mubr.f32.gmra.mrb[0].mxu0 %v1274
        %v1396 = vpop.f32.mrb[0].mxu0
        %v1397 = vadd.f32 %v1201, %v1396
        %v1398 = vpop.f32.mrb[0].mxu0
        %v1399 = vadd.f32 %v1201, %v1398
        %1400 = vmatprep.mubr.f32.mxu0 0.0
        %1401 = vmatmul.mubr.f32.gmra.mrb[0].mxu0 %v1277
        %v1402 = vpop.f32.mrb[0].mxu0
        %v1403 = vadd.f32 %v1206, %v1402
        %v1404 = vpop.f32.mrb[0].mxu0
        %v1405 = vadd.f32 %v1206, %v1404
        %1406 = vmatprep.mubr.f32.mxu0 0.0
        %1407 = vmatmul.mubr.f32.gmra.mrb[0].mxu0 %v1280
        %v1408 = vpop.f32.mrb[0].mxu0
        %v1409 = vadd.f32 %v1211, %v1408
        %v1410 = vpop.f32.mrb[0].mxu0
        %v1411 = vadd.f32 %v1211, %v1410
        %1412 = vmatprep.mubr.f32.mxu0 0.0
        %1413 = vmatmul.mubr.f32.gmra.mrb[0].mxu0 %v1283
        %v1414 = vpop.f32.mrb[0].mxu0
        %v1415 = vadd.f32 %v1216, %v1414
        %v1416 = vpop.f32.mrb[0].mxu0
        %v1417 = vadd.f32 %v1216, %v1416
        %1418 = vmatprep.mubr.f32.mxu0 0.0
        %1419 = vmatmul.mubr.f32.gmra.mrb[0].mxu0 %v1286
        %v1420 = vpop.f32.mrb[0].mxu0
        %v1421 = vadd.f32 %v1221, %v1420
        %v1422 = vpop.f32.mrb[0].mxu0
        %v1423 = vadd.f32 %v1221, %v1422
        %1424 = vmatprep.mubr.f32.mxu0 0.0
        %1425 = vmatmul.mubr.f32.gmra.mrb[0].mxu0 %v1289
        %v1426 = vpop.f32.mrb[0].mxu0
        %v1427 = vadd.f32 %v1226, %v1426
        %v1428 = vpop.f32.mrb[0].mxu0
        %v1429 = vadd.f32 %v1226, %v1428
        %1430 = vmatprep.mubr.f32.mxu0 0.0
        %1431 = vmatmul.mubr.f32.gmra.mrb[0].mxu0 %v1292
        %v1432 = vpop.f32.mrb[0].mxu0
        %v1433 = vadd.f32 %v1231, %v1432
        %v1434 = vpop.f32.mrb[0].mxu0
        %v1435 = vadd.f32 %v1231, %v1434
        %1436 = vmatprep.mubr.f32.mxu0 0.0
        %1437 = vmatmul.mubr.f32.gmra.mrb[0].mxu0 %v1295
        %v1438 = vpop.f32.mrb[0].mxu0
        %v1439 = vadd.f32 %v1236, %v1438
        %v1440 = vpop.f32.mrb[0].mxu0
        %v1441 = vadd.f32 %v1236, %v1440
        %1442 = vmatprep.mubr.f32.mxu0 0.0
        %1443 = vmatmul.mubr.f32.gmra.mrb[0].mxu0 %v1298
        %v1444 = vpop.f32.mrb[0].mxu0
        %v1445 = vadd.f32 %v1241, %v1444
        %v1446 = vpop.f32.mrb[0].mxu0
        %v1447 = vadd.f32 %v1241, %v1446
        %1448 = vmatprep.mubr.f32.mxu0 0.0
        %1449 = vmatmul.mubr.f32.gmra.mrb[0].mxu0 %v1301
        %v1450 = vpop.f32.mrb[0].mxu0
        %v1451 = vadd.f32 %v1246, %v1450
        %v1452 = vpop.f32.mrb[0].mxu0
        %v1453 = vadd.f32 %v1246, %v1452
        %1454 = vmatprep.mubr.f32.mxu0 0.0
        %1455 = vmatmul.mubr.f32.gmra.mrb[0].mxu0 %v1304
        %v1456 = vpop.f32.mrb[0].mxu0
        %v1457 = vadd.f32 %v1251, %v1456
        %v1458 = vpop.f32.mrb[0].mxu0
        %v1459 = vadd.f32 %v1251, %v1458
        %1460 = vmatprep.mubr.f32.mxu0 0.0
        %1461 = vmatmul.mubr.f32.gmra.mrb[0].mxu0 %v1307
        %v1462 = vpop.f32.mrb[0].mxu0
        %v1463 = vadd.f32 %v1256, %v1462
        %v1464 = vpop.f32.mrb[0].mxu0
        %v1465 = vadd.f32 %v1256, %v1464
        %1466 = vmatprep.mubr.f32.mxu0 0.0
        %1467 = vmatmul.mubr.f32.gmra.mrb[0].mxu0 %v1310
        %v1468 = vpop.f32.mrb[0].mxu0
        %v1469 = vadd.f32 %v1261, %v1468
        %v1470 = vpop.f32.mrb[0].mxu0
        %v1471 = vadd.f32 %v1261, %v1470
        %1472 = vdwg.mxu0
        %v1473 = vadd.f32 %v1379, %v1381
        %1474 = vadd.xlane.f32.xlu0 %v1473
        %v1475 = vpop.xlane.xlu0 %1474
        %v1476 = vadd.f32 %v1385, %v1387
        %1477 = vadd.xlane.f32.xlu0 %v1476
        %v1478 = vpop.xlane.xlu0 %1477
        %v1479 = vadd.f32 %v1391, %v1393
        %1480 = vadd.xlane.f32.xlu0 %v1479
        %v1481 = vpop.xlane.xlu0 %1480
        %v1482 = vadd.f32 %v1397, %v1399
        %1483 = vadd.xlane.f32.xlu0 %v1482
        %v1484 = vpop.xlane.xlu0 %1483
        %v1485 = vadd.f32 %v1403, %v1405
        %1486 = vadd.xlane.f32.xlu0 %v1485
        %v1487 = vpop.xlane.xlu0 %1486
        %v1488 = vadd.f32 %v1409, %v1411
        %1489 = vadd.xlane.f32.xlu0 %v1488
        %v1490 = vpop.xlane.xlu0 %1489
        %v1491 = vadd.f32 %v1415, %v1417
        %1492 = vadd.xlane.f32.xlu0 %v1491
        %v1493 = vpop.xlane.xlu0 %1492
        %v1494 = vadd.f32 %v1421, %v1423
        %1495 = vadd.xlane.f32.xlu0 %v1494
        %v1496 = vpop.xlane.xlu0 %1495
        %v1497 = vadd.f32 %v1427, %v1429
        %1498 = vadd.xlane.f32.xlu0 %v1497
        %v1499 = vpop.xlane.xlu0 %1498
        %v1500 = vadd.f32 %v1433, %v1435
        %1501 = vadd.xlane.f32.xlu0 %v1500
        %v1502 = vpop.xlane.xlu0 %1501
        %v1503 = vadd.f32 %v1439, %v1441
        %1504 = vadd.xlane.f32.xlu0 %v1503
        %v1505 = vpop.xlane.xlu0 %1504
        %v1506 = vadd.f32 %v1445, %v1447
        %1507 = vadd.xlane.f32.xlu0 %v1506
        %v1508 = vpop.xlane.xlu0 %1507
        %v1509 = vadd.f32 %v1451, %v1453
        %1510 = vadd.xlane.f32.xlu0 %v1509
        %v1511 = vpop.xlane.xlu0 %1510
        %v1512 = vadd.f32 %v1457, %v1459
        %1513 = vadd.xlane.f32.xlu0 %v1512
        %v1514 = vpop.xlane.xlu0 %1513
        %v1515 = vadd.f32 %v1463, %v1465
        %1516 = vadd.xlane.f32.xlu0 %v1515
        %v1517 = vpop.xlane.xlu0 %1516
        %v1518 = vadd.f32 %v1469, %v1471
        %1519 = vadd.xlane.f32.xlu0 %v1518
        %v1520 = vpop.xlane.xlu0 %1519
        %v1521 = vmul.f32 %v1379, %v1379
        %v1522 = vmul.f32 %v1381, %v1381
        %v1523 = vmul.f32 %v1385, %v1385
        %v1524 = vmul.f32 %v1387, %v1387
        %v1525 = vmul.f32 %v1391, %v1391
        %v1526 = vmul.f32 %v1393, %v1393
        %v1527 = vmul.f32 %v1397, %v1397
        %v1528 = vmul.f32 %v1399, %v1399
        %v1529 = vmul.f32 %v1403, %v1403
        %v1530 = vmul.f32 %v1405, %v1405
        %v1531 = vmul.f32 %v1409, %v1409
        %v1532 = vmul.f32 %v1411, %v1411
        %v1533 = vmul.f32 %v1415, %v1415
        %v1534 = vmul.f32 %v1417, %v1417
        %v1535 = vmul.f32 %v1421, %v1421
        %v1536 = vmul.f32 %v1423, %v1423
        %v1537 = vmul.f32 %v1427, %v1427
        %v1538 = vmul.f32 %v1429, %v1429
        %v1539 = vmul.f32 %v1433, %v1433
        %v1540 = vmul.f32 %v1435, %v1435
        %v1541 = vmul.f32 %v1439, %v1439
        %v1542 = vmul.f32 %v1441, %v1441
        %v1543 = vmul.f32 %v1445, %v1445
        %v1544 = vmul.f32 %v1447, %v1447
        %v1545 = vmul.f32 %v1451, %v1451
        %v1546 = vmul.f32 %v1453, %v1453
        %v1547 = vmul.f32 %v1457, %v1457
        %v1548 = vmul.f32 %v1459, %v1459
        %v1549 = vmul.f32 %v1463, %v1463
        %v1550 = vmul.f32 %v1465, %v1465
        %v1551 = vmul.f32 %v1469, %v1469
        %v1552 = vmul.f32 %v1471, %v1471
        %v1553 = vadd.f32 %v1521, %v1522
        %1554 = vadd.xlane.f32.xlu0 %v1553
        %v1555 = vpop.xlane.xlu0 %1554
        %v1556 = vadd.f32 %v1523, %v1524
        %1557 = vadd.xlane.f32.xlu0 %v1556
        %v1558 = vpop.xlane.xlu0 %1557
        %v1559 = vadd.f32 %v1525, %v1526
        %1560 = vadd.xlane.f32.xlu0 %v1559
        %v1561 = vpop.xlane.xlu0 %1560
        %v1562 = vadd.f32 %v1527, %v1528
        %1563 = vadd.xlane.f32.xlu0 %v1562
        %v1564 = vpop.xlane.xlu0 %1563
        %v1565 = vadd.f32 %v1529, %v1530
        %1566 = vadd.xlane.f32.xlu0 %v1565
        %v1567 = vpop.xlane.xlu0 %1566
        %v1568 = vadd.f32 %v1531, %v1532
        %1569 = vadd.xlane.f32.xlu0 %v1568
        %v1570 = vpop.xlane.xlu0 %1569
        %v1571 = vadd.f32 %v1533, %v1534
        %1572 = vadd.xlane.f32.xlu0 %v1571
        %v1573 = vpop.xlane.xlu0 %1572
        %v1574 = vadd.f32 %v1535, %v1536
        %1575 = vadd.xlane.f32.xlu0 %v1574
        %v1576 = vpop.xlane.xlu0 %1575
        %v1577 = vadd.f32 %v1537, %v1538
        %1578 = vadd.xlane.f32.xlu0 %v1577
        %v1579 = vpop.xlane.xlu0 %1578
        %v1580 = vadd.f32 %v1539, %v1540
        %1581 = vadd.xlane.f32.xlu0 %v1580
        %v1582 = vpop.xlane.xlu0 %1581
        %v1583 = vadd.f32 %v1541, %v1542
        %1584 = vadd.xlane.f32.xlu0 %v1583
        %v1585 = vpop.xlane.xlu0 %1584
        %v1586 = vadd.f32 %v1543, %v1544
        %1587 = vadd.xlane.f32.xlu0 %v1586
        %v1588 = vpop.xlane.xlu0 %1587
        %v1589 = vadd.f32 %v1545, %v1546
        %1590 = vadd.xlane.f32.xlu0 %v1589
        %v1591 = vpop.xlane.xlu0 %1590
        %v1592 = vadd.f32 %v1547, %v1548
        %1593 = vadd.xlane.f32.xlu0 %v1592
        %v1594 = vpop.xlane.xlu0 %1593
        %v1595 = vadd.f32 %v1549, %v1550
        %1596 = vadd.xlane.f32.xlu0 %v1595
        %v1597 = vpop.xlane.xlu0 %1596
        %v1598 = vadd.f32 %v1551, %v1552
        %1599 = vadd.xlane.f32.xlu0 %v1598
        %v1600 = vpop.xlane.xlu0 %1599
        %v1601 = vmul.f32 %v1475, 0.00390625
        %v1602 = vmul.f32 %v1478, 0.00390625
        %v1603 = vmul.f32 %v1481, 0.00390625
        %v1604 = vmul.f32 %v1484, 0.00390625
        %v1605 = vmul.f32 %v1487, 0.00390625
        %v1606 = vmul.f32 %v1490, 0.00390625
        %v1607 = vmul.f32 %v1493, 0.00390625
        %v1608 = vmul.f32 %v1496, 0.00390625
        %v1609 = vmul.f32 %v1499, 0.00390625
        %v1610 = vmul.f32 %v1502, 0.00390625
        %v1611 = vmul.f32 %v1505, 0.00390625
        %v1612 = vmul.f32 %v1508, 0.00390625
        %v1613 = vmul.f32 %v1511, 0.00390625
        %v1614 = vmul.f32 %v1514, 0.00390625
        %v1615 = vmul.f32 %v1517, 0.00390625
        %v1616 = vmul.f32 %v1520, 0.00390625
        %v1617 = vmul.f32 %v1555, 0.00390625
        %v1618 = vmul.f32 %v1558, 0.00390625
        %v1619 = vmul.f32 %v1561, 0.00390625
        %v1620 = vmul.f32 %v1564, 0.00390625
        %v1621 = vmul.f32 %v1567, 0.00390625
        %v1622 = vmul.f32 %v1570, 0.00390625
        %v1623 = vmul.f32 %v1573, 0.00390625
        %v1624 = vmul.f32 %v1576, 0.00390625
        %v1625 = vmul.f32 %v1579, 0.00390625
        %v1626 = vmul.f32 %v1582, 0.00390625
        %v1627 = vmul.f32 %v1585, 0.00390625
        %v1628 = vmul.f32 %v1588, 0.00390625
        %v1629 = vmul.f32 %v1591, 0.00390625
        %v1630 = vmul.f32 %v1594, 0.00390625
        %v1631 = vmul.f32 %v1597, 0.00390625
        %v1632 = vmul.f32 %v1600, 0.00390625
        %v1633 = vmul.f32 %v1601, %v1601
        %v1634 = vmul.f32 %v1602, %v1602
        %v1635 = vmul.f32 %v1603, %v1603
        %v1636 = vmul.f32 %v1604, %v1604
        %v1637 = vmul.f32 %v1605, %v1605
        %v1638 = vmul.f32 %v1606, %v1606
        %v1639 = vmul.f32 %v1607, %v1607
        %v1640 = vmul.f32 %v1608, %v1608
        %v1641 = vmul.f32 %v1609, %v1609
        %v1642 = vmul.f32 %v1610, %v1610
        %v1643 = vmul.f32 %v1611, %v1611
        %v1644 = vmul.f32 %v1612, %v1612
        %v1645 = vmul.f32 %v1613, %v1613
        %v1646 = vmul.f32 %v1614, %v1614
        %v1647 = vmul.f32 %v1615, %v1615
        %v1648 = vmul.f32 %v1616, %v1616
        %v1649 = vsub.f32 %v1617, %v1633
        %v1650 = vsub.f32 %v1618, %v1634
        %v1651 = vsub.f32 %v1619, %v1635
        %v1652 = vsub.f32 %v1620, %v1636
        %v1653 = vsub.f32 %v1621, %v1637
        %v1654 = vsub.f32 %v1622, %v1638
        %v1655 = vsub.f32 %v1623, %v1639
        %v1656 = vsub.f32 %v1624, %v1640
        %v1657 = vsub.f32 %v1625, %v1641
        %v1658 = vsub.f32 %v1626, %v1642
        %v1659 = vsub.f32 %v1627, %v1643
        %v1660 = vsub.f32 %v1628, %v1644
        %v1661 = vsub.f32 %v1629, %v1645
        %v1662 = vsub.f32 %v1630, %v1646
        %v1663 = vsub.f32 %v1631, %v1647
        %v1664 = vsub.f32 %v1632, %v1648
        %v1665 = vmax.f32 %v1649, 0.0
        %v1666 = vmax.f32 %v1650, 0.0
        %v1667 = vmax.f32 %v1651, 0.0
        %v1668 = vmax.f32 %v1652, 0.0
        %v1669 = vmax.f32 %v1653, 0.0
        %v1670 = vmax.f32 %v1654, 0.0
        %v1671 = vmax.f32 %v1655, 0.0
        %v1672 = vmax.f32 %v1656, 0.0
        %v1673 = vmax.f32 %v1657, 0.0
        %v1674 = vmax.f32 %v1658, 0.0
        %v1675 = vmax.f32 %v1659, 0.0
        %v1676 = vmax.f32 %v1660, 0.0
        %v1677 = vmax.f32 %v1661, 0.0
        %v1678 = vmax.f32 %v1662, 0.0
        %v1679 = vmax.f32 %v1663, 0.0
        %v1680 = vmax.f32 %v1664, 0.0
        %v1681 = vadd.f32 %v1665, 1e-05
        %v1682 = vadd.f32 %v1666, 1e-05
        %v1683 = vadd.f32 %v1667, 1e-05
        %v1684 = vadd.f32 %v1668, 1e-05
        %v1685 = vadd.f32 %v1669, 1e-05
        %v1686 = vadd.f32 %v1670, 1e-05
        %v1687 = vadd.f32 %v1671, 1e-05
        %v1688 = vadd.f32 %v1672, 1e-05
        %v1689 = vadd.f32 %v1673, 1e-05
        %v1690 = vadd.f32 %v1674, 1e-05
        %v1691 = vadd.f32 %v1675, 1e-05
        %v1692 = vadd.f32 %v1676, 1e-05
        %v1693 = vadd.f32 %v1677, 1e-05
        %v1694 = vadd.f32 %v1678, 1e-05
        %v1695 = vadd.f32 %v1679, 1e-05
        %v1696 = vadd.f32 %v1680, 1e-05
        %v1697 = vrsqrt.pop %v1681
        %v1698 = vrsqrt.pop %v1682
        %v1699 = vrsqrt.pop %v1683
        %v1700 = vrsqrt.pop %v1684
        %v1701 = vrsqrt.pop %v1685
        %v1702 = vrsqrt.pop %v1686
        %v1703 = vrsqrt.pop %v1687
        %v1704 = vrsqrt.pop %v1688
        %v1705 = vrsqrt.pop %v1689
        %v1706 = vrsqrt.pop %v1690
        %v1707 = vrsqrt.pop %v1691
        %v1708 = vrsqrt.pop %v1692
        %v1709 = vrsqrt.pop %v1693
        %v1710 = vrsqrt.pop %v1694
        %v1711 = vrsqrt.pop %v1695
        %v1712 = vrsqrt.pop %v1696
        %v1713 = vsub.f32 %v1379, %v1601
        %v1714 = vsub.f32 %v1381, %v1601
        %v1715 = vsub.f32 %v1385, %v1602
        %v1716 = vsub.f32 %v1387, %v1602
        %v1717 = vsub.f32 %v1391, %v1603
        %v1718 = vsub.f32 %v1393, %v1603
        %v1719 = vsub.f32 %v1397, %v1604
        %v1720 = vsub.f32 %v1399, %v1604
        %v1721 = vsub.f32 %v1403, %v1605
        %v1722 = vsub.f32 %v1405, %v1605
        %v1723 = vsub.f32 %v1409, %v1606
        %v1724 = vsub.f32 %v1411, %v1606
        %v1725 = vsub.f32 %v1415, %v1607
        %v1726 = vsub.f32 %v1417, %v1607
        %v1727 = vsub.f32 %v1421, %v1608
        %v1728 = vsub.f32 %v1423, %v1608
        %v1729 = vsub.f32 %v1427, %v1609
        %v1730 = vsub.f32 %v1429, %v1609
        %v1731 = vsub.f32 %v1433, %v1610
        %v1732 = vsub.f32 %v1435, %v1610
        %v1733 = vsub.f32 %v1439, %v1611
        %v1734 = vsub.f32 %v1441, %v1611
        %v1735 = vsub.f32 %v1445, %v1612
        %v1736 = vsub.f32 %v1447, %v1612
        %v1737 = vsub.f32 %v1451, %v1613
        %v1738 = vsub.f32 %v1453, %v1613
        %v1739 = vsub.f32 %v1457, %v1614
        %v1740 = vsub.f32 %v1459, %v1614
        %v1741 = vsub.f32 %v1463, %v1615
        %v1742 = vsub.f32 %v1465, %v1615
        %v1743 = vsub.f32 %v1469, %v1616
        %v1744 = vsub.f32 %v1471, %v1616
        %v1745 = vmul.f32 %v1713, %v1697
        %v1746 = vmul.f32 %v1714, %v1697
        %v1747 = vmul.f32 %v1715, %v1698
        %v1748 = vmul.f32 %v1716, %v1698
        %v1749 = vmul.f32 %v1717, %v1699
        %v1750 = vmul.f32 %v1718, %v1699
        %v1751 = vmul.f32 %v1719, %v1700
        %v1752 = vmul.f32 %v1720, %v1700
        %v1753 = vmul.f32 %v1721, %v1701
        %v1754 = vmul.f32 %v1722, %v1701
        %v1755 = vmul.f32 %v1723, %v1702
        %v1756 = vmul.f32 %v1724, %v1702
        %v1757 = vmul.f32 %v1725, %v1703
        %v1758 = vmul.f32 %v1726, %v1703
        %v1759 = vmul.f32 %v1727, %v1704
        %v1760 = vmul.f32 %v1728, %v1704
        %v1761 = vmul.f32 %v1729, %v1705
        %v1762 = vmul.f32 %v1730, %v1705
        %v1763 = vmul.f32 %v1731, %v1706
        %v1764 = vmul.f32 %v1732, %v1706
        %v1765 = vmul.f32 %v1733, %v1707
        %v1766 = vmul.f32 %v1734, %v1707
        %v1767 = vmul.f32 %v1735, %v1708
        %v1768 = vmul.f32 %v1736, %v1708
        %v1769 = vmul.f32 %v1737, %v1709
        %v1770 = vmul.f32 %v1738, %v1709
        %v1771 = vmul.f32 %v1739, %v1710
        %v1772 = vmul.f32 %v1740, %v1710
        %v1773 = vmul.f32 %v1741, %v1711
        %v1774 = vmul.f32 %v1742, %v1711
        %v1775 = vmul.f32 %v1743, %v1712
        %v1776 = vmul.f32 %v1744, %v1712
        %v1777 = vmul.f32 %v1745, 0.5
        %v1778 = vmul.f32 %v1746, 0.5
        %v1779 = vmul.f32 %v1747, 0.5
        %v1780 = vmul.f32 %v1748, 0.5
        %v1781 = vmul.f32 %v1749, 0.5
        %v1782 = vmul.f32 %v1750, 0.5
        %v1783 = vmul.f32 %v1751, 0.5
        %v1784 = vmul.f32 %v1752, 0.5
        %v1785 = vmul.f32 %v1753, 0.5
        %v1786 = vmul.f32 %v1754, 0.5
        %v1787 = vmul.f32 %v1755, 0.5
        %v1788 = vmul.f32 %v1756, 0.5
        %v1789 = vmul.f32 %v1757, 0.5
        %v1790 = vmul.f32 %v1758, 0.5
        %v1791 = vmul.f32 %v1759, 0.5
        %v1792 = vmul.f32 %v1760, 0.5
        %v1793 = vmul.f32 %v1761, 0.5
        %v1794 = vmul.f32 %v1762, 0.5
        %v1795 = vmul.f32 %v1763, 0.5
        %v1796 = vmul.f32 %v1764, 0.5
        %v1797 = vmul.f32 %v1765, 0.5
        %v1798 = vmul.f32 %v1766, 0.5
        %v1799 = vmul.f32 %v1767, 0.5
        %v1800 = vmul.f32 %v1768, 0.5
        %v1801 = vmul.f32 %v1769, 0.5
        %v1802 = vmul.f32 %v1770, 0.5
        %v1803 = vmul.f32 %v1771, 0.5
        %v1804 = vmul.f32 %v1772, 0.5
        %v1805 = vmul.f32 %v1773, 0.5
        %v1806 = vmul.f32 %v1774, 0.5
        %v1807 = vmul.f32 %v1775, 0.5
        %v1808 = vmul.f32 %v1776, 0.5
        %v1809 = vmul.f32 %v1745, 0.70710677
        %v1810 = vmul.f32 %v1746, 0.70710677
        %v1811 = vmul.f32 %v1747, 0.70710677
        %v1812 = vmul.f32 %v1748, 0.70710677
        %v1813 = vmul.f32 %v1749, 0.70710677
        %v1814 = vmul.f32 %v1750, 0.70710677
        %v1815 = vmul.f32 %v1751, 0.70710677
        %v1816 = vmul.f32 %v1752, 0.70710677
        %v1817 = vmul.f32 %v1753, 0.70710677
        %v1818 = vmul.f32 %v1754, 0.70710677
        %v1819 = vmul.f32 %v1755, 0.70710677
        %v1820 = vmul.f32 %v1756, 0.70710677
        %v1821 = vmul.f32 %v1757, 0.70710677
        %v1822 = vmul.f32 %v1758, 0.70710677
        %v1823 = vmul.f32 %v1759, 0.70710677
        %v1824 = vmul.f32 %v1760, 0.70710677
        %v1825 = vmul.f32 %v1761, 0.70710677
        %v1826 = vmul.f32 %v1762, 0.70710677
        %v1827 = vmul.f32 %v1763, 0.70710677
        %v1828 = vmul.f32 %v1764, 0.70710677
        %v1829 = vmul.f32 %v1765, 0.70710677
        %v1830 = vmul.f32 %v1766, 0.70710677
        %v1831 = vmul.f32 %v1767, 0.70710677
        %v1832 = vmul.f32 %v1768, 0.70710677
        %v1833 = vmul.f32 %v1769, 0.70710677
        %v1834 = vmul.f32 %v1770, 0.70710677
        %v1835 = vmul.f32 %v1771, 0.70710677
        %v1836 = vmul.f32 %v1772, 0.70710677
        %v1837 = vmul.f32 %v1773, 0.70710677
        %v1838 = vmul.f32 %v1774, 0.70710677
        %v1839 = vmul.f32 %v1775, 0.70710677
        %v1840 = vmul.f32 %v1776, 0.70710677
        %v1841 = vand.u32 2147483647, %v1809
        %v1842 = vand.u32 2147483647, %v1810
        %v1843 = vand.u32 2147483647, %v1811
        %v1844 = vand.u32 2147483647, %v1812
        %v1845 = vand.u32 2147483647, %v1813
        %v1846 = vand.u32 2147483647, %v1814
        %v1847 = vand.u32 2147483647, %v1815
        %v1848 = vand.u32 2147483647, %v1816
        %v1849 = vand.u32 2147483647, %v1817
        %v1850 = vand.u32 2147483647, %v1818
        %v1851 = vand.u32 2147483647, %v1819
        %v1852 = vand.u32 2147483647, %v1820
        %v1853 = vand.u32 2147483647, %v1821
        %v1854 = vand.u32 2147483647, %v1822
        %v1855 = vand.u32 2147483647, %v1823
        %v1856 = vand.u32 2147483647, %v1824
        %v1857 = vand.u32 2147483647, %v1825
        %v1858 = vand.u32 2147483647, %v1826
        %v1859 = vand.u32 2147483647, %v1827
        %v1860 = vand.u32 2147483647, %v1828
        %v1861 = vand.u32 2147483647, %v1829
        %v1862 = vand.u32 2147483647, %v1830
        %v1863 = vand.u32 2147483647, %v1831
        %v1864 = vand.u32 2147483647, %v1832
        %v1865 = vand.u32 2147483647, %v1833
        %v1866 = vand.u32 2147483647, %v1834
        %v1867 = vand.u32 2147483647, %v1835
        %v1868 = vand.u32 2147483647, %v1836
        %v1869 = vand.u32 2147483647, %v1837
        %v1870 = vand.u32 2147483647, %v1838
        %v1871 = vand.u32 2147483647, %v1839
        %v1872 = vand.u32 2147483647, %v1840
        %v1873 = vmul.f32 %v1841, 0.3275911
        %v1874 = vmul.f32 %v1842, 0.3275911
        %v1875 = vmul.f32 %v1843, 0.3275911
        %v1876 = vmul.f32 %v1844, 0.3275911
        %v1877 = vmul.f32 %v1845, 0.3275911
        %v1878 = vmul.f32 %v1846, 0.3275911
        %v1879 = vmul.f32 %v1847, 0.3275911
        %v1880 = vmul.f32 %v1848, 0.3275911
        %v1881 = vmul.f32 %v1849, 0.3275911
        %v1882 = vmul.f32 %v1850, 0.3275911
        %v1883 = vmul.f32 %v1851, 0.3275911
        %v1884 = vmul.f32 %v1852, 0.3275911
        %v1885 = vmul.f32 %v1853, 0.3275911
        %v1886 = vmul.f32 %v1854, 0.3275911
        %v1887 = vmul.f32 %v1855, 0.3275911
        %v1888 = vmul.f32 %v1856, 0.3275911
        %v1889 = vmul.f32 %v1857, 0.3275911
        %v1890 = vmul.f32 %v1858, 0.3275911
        %v1891 = vmul.f32 %v1859, 0.3275911
        %v1892 = vmul.f32 %v1860, 0.3275911
        %v1893 = vmul.f32 %v1861, 0.3275911
        %v1894 = vmul.f32 %v1862, 0.3275911
        %v1895 = vmul.f32 %v1863, 0.3275911
        %v1896 = vmul.f32 %v1864, 0.3275911
        %v1897 = vmul.f32 %v1865, 0.3275911
        %v1898 = vmul.f32 %v1866, 0.3275911
        %v1899 = vmul.f32 %v1867, 0.3275911
        %v1900 = vmul.f32 %v1868, 0.3275911
        %v1901 = vmul.f32 %v1869, 0.3275911
        %v1902 = vmul.f32 %v1870, 0.3275911
        %v1903 = vmul.f32 %v1871, 0.3275911
        %v1904 = vmul.f32 %v1872, 0.3275911
        %v1905 = vadd.f32 %v1873, 1.0
        %v1906 = vadd.f32 %v1874, 1.0
        %v1907 = vadd.f32 %v1875, 1.0
        %v1908 = vadd.f32 %v1876, 1.0
        %v1909 = vadd.f32 %v1877, 1.0
        %v1910 = vadd.f32 %v1878, 1.0
        %v1911 = vadd.f32 %v1879, 1.0
        %v1912 = vadd.f32 %v1880, 1.0
        %v1913 = vadd.f32 %v1881, 1.0
        %v1914 = vadd.f32 %v1882, 1.0
        %v1915 = vadd.f32 %v1883, 1.0
        %v1916 = vadd.f32 %v1884, 1.0
        %v1917 = vadd.f32 %v1885, 1.0
        %v1918 = vadd.f32 %v1886, 1.0
        %v1919 = vadd.f32 %v1887, 1.0
        %v1920 = vadd.f32 %v1888, 1.0
        %v1921 = vadd.f32 %v1889, 1.0
        %v1922 = vadd.f32 %v1890, 1.0
        %v1923 = vadd.f32 %v1891, 1.0
        %v1924 = vadd.f32 %v1892, 1.0
        %v1925 = vadd.f32 %v1893, 1.0
        %v1926 = vadd.f32 %v1894, 1.0
        %v1927 = vadd.f32 %v1895, 1.0
        %v1928 = vadd.f32 %v1896, 1.0
        %v1929 = vadd.f32 %v1897, 1.0
        %v1930 = vadd.f32 %v1898, 1.0
        %v1931 = vadd.f32 %v1899, 1.0
        %v1932 = vadd.f32 %v1900, 1.0
        %v1933 = vadd.f32 %v1901, 1.0
        %v1934 = vadd.f32 %v1902, 1.0
        %v1935 = vadd.f32 %v1903, 1.0
        %v1936 = vadd.f32 %v1904, 1.0
        %v1937 = vrcp.pop %v1905
        %v1938 = vmul.f32 1.0, %v1937
        %v1939 = vrcp.pop %v1906
        %v1940 = vmul.f32 1.0, %v1939
        %v1941 = vrcp.pop %v1907
        %v1942 = vmul.f32 1.0, %v1941
        %v1943 = vrcp.pop %v1908
        %v1944 = vmul.f32 1.0, %v1943
        %v1945 = vrcp.pop %v1909
        %v1946 = vmul.f32 1.0, %v1945
        %v1947 = vrcp.pop %v1910
        %v1948 = vmul.f32 1.0, %v1947
        %v1949 = vrcp.pop %v1911
        %v1950 = vmul.f32 1.0, %v1949
        %v1951 = vrcp.pop %v1912
        %v1952 = vmul.f32 1.0, %v1951
        %v1953 = vrcp.pop %v1913
        %v1954 = vmul.f32 1.0, %v1953
        %v1955 = vrcp.pop %v1914
        %v1956 = vmul.f32 1.0, %v1955
        %v1957 = vrcp.pop %v1915
        %v1958 = vmul.f32 1.0, %v1957
        %v1959 = vrcp.pop %v1916
        %v1960 = vmul.f32 1.0, %v1959
        %v1961 = vrcp.pop %v1917
        %v1962 = vmul.f32 1.0, %v1961
        %v1963 = vrcp.pop %v1918
        %v1964 = vmul.f32 1.0, %v1963
        %v1965 = vrcp.pop %v1919
        %v1966 = vmul.f32 1.0, %v1965
        %v1967 = vrcp.pop %v1920
        %v1968 = vmul.f32 1.0, %v1967
        %v1969 = vrcp.pop %v1921
        %v1970 = vmul.f32 1.0, %v1969
        %v1971 = vrcp.pop %v1922
        %v1972 = vmul.f32 1.0, %v1971
        %v1973 = vrcp.pop %v1923
        %v1974 = vmul.f32 1.0, %v1973
        %v1975 = vrcp.pop %v1924
        %v1976 = vmul.f32 1.0, %v1975
        %v1977 = vrcp.pop %v1925
        %v1978 = vmul.f32 1.0, %v1977
        %v1979 = vrcp.pop %v1926
        %v1980 = vmul.f32 1.0, %v1979
        %v1981 = vrcp.pop %v1927
        %v1982 = vmul.f32 1.0, %v1981
        %v1983 = vrcp.pop %v1928
        %v1984 = vmul.f32 1.0, %v1983
        %v1985 = vrcp.pop %v1929
        %v1986 = vmul.f32 1.0, %v1985
        %v1987 = vrcp.pop %v1930
        %v1988 = vmul.f32 1.0, %v1987
        %v1989 = vrcp.pop %v1931
        %v1990 = vmul.f32 1.0, %v1989
        %v1991 = vrcp.pop %v1932
        %v1992 = vmul.f32 1.0, %v1991
        %v1993 = vrcp.pop %v1933
        %v1994 = vmul.f32 1.0, %v1993
        %v1995 = vrcp.pop %v1934
        %v1996 = vmul.f32 1.0, %v1995
        %v1997 = vrcp.pop %v1935
        %v1998 = vmul.f32 1.0, %v1997
        %v1999 = vrcp.pop %v1936
        %v2000 = vmul.f32 1.0, %v1999
        %v2001 = vmul.f32 %v1938, 1.0614054
        %v2002 = vmul.f32 %v1940, 1.0614054
        %v2003 = vmul.f32 %v1942, 1.0614054
        %v2004 = vmul.f32 %v1944, 1.0614054
        %v2005 = vmul.f32 %v1946, 1.0614054
        %v2006 = vmul.f32 %v1948, 1.0614054
        %v2007 = vmul.f32 %v1950, 1.0614054
        %v2008 = vmul.f32 %v1952, 1.0614054
        %v2009 = vmul.f32 %v1954, 1.0614054
        %v2010 = vmul.f32 %v1956, 1.0614054
        %v2011 = vmul.f32 %v1958, 1.0614054
        %v2012 = vmul.f32 %v1960, 1.0614054
        %v2013 = vmul.f32 %v1962, 1.0614054
        %v2014 = vmul.f32 %v1964, 1.0614054
        %v2015 = vmul.f32 %v1966, 1.0614054
        %v2016 = vmul.f32 %v1968, 1.0614054
        %v2017 = vmul.f32 %v1970, 1.0614054
        %v2018 = vmul.f32 %v1972, 1.0614054
        %v2019 = vmul.f32 %v1974, 1.0614054
        %v2020 = vmul.f32 %v1976, 1.0614054
        %v2021 = vmul.f32 %v1978, 1.0614054
        %v2022 = vmul.f32 %v1980, 1.0614054
        %v2023 = vmul.f32 %v1982, 1.0614054
        %v2024 = vmul.f32 %v1984, 1.0614054
        %v2025 = vmul.f32 %v1986, 1.0614054
        %v2026 = vmul.f32 %v1988, 1.0614054
        %v2027 = vmul.f32 %v1990, 1.0614054
        %v2028 = vmul.f32 %v1992, 1.0614054
        %v2029 = vmul.f32 %v1994, 1.0614054
        %v2030 = vmul.f32 %v1996, 1.0614054
        %v2031 = vmul.f32 %v1998, 1.0614054
        %v2032 = vmul.f32 %v2000, 1.0614054
        %v2033 = vadd.f32 %v2001, -1.4531521
        %v2034 = vadd.f32 %v2002, -1.4531521
        %v2035 = vadd.f32 %v2003, -1.4531521
        %v2036 = vadd.f32 %v2004, -1.4531521
        %v2037 = vadd.f32 %v2005, -1.4531521
        %v2038 = vadd.f32 %v2006, -1.4531521
        %v2039 = vadd.f32 %v2007, -1.4531521
        %v2040 = vadd.f32 %v2008, -1.4531521
        %v2041 = vadd.f32 %v2009, -1.4531521
        %v2042 = vadd.f32 %v2010, -1.4531521
        %v2043 = vadd.f32 %v2011, -1.4531521
        %v2044 = vadd.f32 %v2012, -1.4531521
        %v2045 = vadd.f32 %v2013, -1.4531521
        %v2046 = vadd.f32 %v2014, -1.4531521
        %v2047 = vadd.f32 %v2015, -1.4531521
        %v2048 = vadd.f32 %v2016, -1.4531521
        %v2049 = vadd.f32 %v2017, -1.4531521
        %v2050 = vadd.f32 %v2018, -1.4531521
        %v2051 = vadd.f32 %v2019, -1.4531521
        %v2052 = vadd.f32 %v2020, -1.4531521
        %v2053 = vadd.f32 %v2021, -1.4531521
        %v2054 = vadd.f32 %v2022, -1.4531521
        %v2055 = vadd.f32 %v2023, -1.4531521
        %v2056 = vadd.f32 %v2024, -1.4531521
        %v2057 = vadd.f32 %v2025, -1.4531521
        %v2058 = vadd.f32 %v2026, -1.4531521
        %v2059 = vadd.f32 %v2027, -1.4531521
        %v2060 = vadd.f32 %v2028, -1.4531521
        %v2061 = vadd.f32 %v2029, -1.4531521
        %v2062 = vadd.f32 %v2030, -1.4531521
        %v2063 = vadd.f32 %v2031, -1.4531521
        %v2064 = vadd.f32 %v2032, -1.4531521
        %v2065 = vmul.f32 %v2033, %v1938
        %v2066 = vmul.f32 %v2034, %v1940
        %v2067 = vmul.f32 %v2035, %v1942
        %v2068 = vmul.f32 %v2036, %v1944
        %v2069 = vmul.f32 %v2037, %v1946
        %v2070 = vmul.f32 %v2038, %v1948
        %v2071 = vmul.f32 %v2039, %v1950
        %v2072 = vmul.f32 %v2040, %v1952
        %v2073 = vmul.f32 %v2041, %v1954
        %v2074 = vmul.f32 %v2042, %v1956
        %v2075 = vmul.f32 %v2043, %v1958
        %v2076 = vmul.f32 %v2044, %v1960
        %v2077 = vmul.f32 %v2045, %v1962
        %v2078 = vmul.f32 %v2046, %v1964
        %v2079 = vmul.f32 %v2047, %v1966
        %v2080 = vmul.f32 %v2048, %v1968
        %v2081 = vmul.f32 %v2049, %v1970
        %v2082 = vmul.f32 %v2050, %v1972
        %v2083 = vmul.f32 %v2051, %v1974
        %v2084 = vmul.f32 %v2052, %v1976
        %v2085 = vmul.f32 %v2053, %v1978
        %v2086 = vmul.f32 %v2054, %v1980
        %v2087 = vmul.f32 %v2055, %v1982
        %v2088 = vmul.f32 %v2056, %v1984
        %v2089 = vmul.f32 %v2057, %v1986
        %v2090 = vmul.f32 %v2058, %v1988
        %v2091 = vmul.f32 %v2059, %v1990
        %v2092 = vmul.f32 %v2060, %v1992
        %v2093 = vmul.f32 %v2061, %v1994
        %v2094 = vmul.f32 %v2062, %v1996
        %v2095 = vmul.f32 %v2063, %v1998
        %v2096 = vmul.f32 %v2064, %v2000
        %v2097 = vadd.f32 %v2065, 1.4214138
        %v2098 = vadd.f32 %v2066, 1.4214138
        %v2099 = vadd.f32 %v2067, 1.4214138
        %v2100 = vadd.f32 %v2068, 1.4214138
        %v2101 = vadd.f32 %v2069, 1.4214138
        %v2102 = vadd.f32 %v2070, 1.4214138
        %v2103 = vadd.f32 %v2071, 1.4214138
        %v2104 = vadd.f32 %v2072, 1.4214138
        %v2105 = vadd.f32 %v2073, 1.4214138
        %v2106 = vadd.f32 %v2074, 1.4214138
        %v2107 = vadd.f32 %v2075, 1.4214138
        %v2108 = vadd.f32 %v2076, 1.4214138
        %v2109 = vadd.f32 %v2077, 1.4214138
        %v2110 = vadd.f32 %v2078, 1.4214138
        %v2111 = vadd.f32 %v2079, 1.4214138
        %v2112 = vadd.f32 %v2080, 1.4214138
        %v2113 = vadd.f32 %v2081, 1.4214138
        %v2114 = vadd.f32 %v2082, 1.4214138
        %v2115 = vadd.f32 %v2083, 1.4214138
        %v2116 = vadd.f32 %v2084, 1.4214138
        %v2117 = vadd.f32 %v2085, 1.4214138
        %v2118 = vadd.f32 %v2086, 1.4214138
        %v2119 = vadd.f32 %v2087, 1.4214138
        %v2120 = vadd.f32 %v2088, 1.4214138
        %v2121 = vadd.f32 %v2089, 1.4214138
        %v2122 = vadd.f32 %v2090, 1.4214138
        %v2123 = vadd.f32 %v2091, 1.4214138
        %v2124 = vadd.f32 %v2092, 1.4214138
        %v2125 = vadd.f32 %v2093, 1.4214138
        %v2126 = vadd.f32 %v2094, 1.4214138
        %v2127 = vadd.f32 %v2095, 1.4214138
        %v2128 = vadd.f32 %v2096, 1.4214138
        %v2129 = vmul.f32 %v2097, %v1938
        %v2130 = vmul.f32 %v2098, %v1940
        %v2131 = vmul.f32 %v2099, %v1942
        %v2132 = vmul.f32 %v2100, %v1944
        %v2133 = vmul.f32 %v2101, %v1946
        %v2134 = vmul.f32 %v2102, %v1948
        %v2135 = vmul.f32 %v2103, %v1950
        %v2136 = vmul.f32 %v2104, %v1952
        %v2137 = vmul.f32 %v2105, %v1954
        %v2138 = vmul.f32 %v2106, %v1956
        %v2139 = vmul.f32 %v2107, %v1958
        %v2140 = vmul.f32 %v2108, %v1960
        %v2141 = vmul.f32 %v2109, %v1962
        %v2142 = vmul.f32 %v2110, %v1964
        %v2143 = vmul.f32 %v2111, %v1966
        %v2144 = vmul.f32 %v2112, %v1968
        %v2145 = vmul.f32 %v2113, %v1970
        %v2146 = vmul.f32 %v2114, %v1972
        %v2147 = vmul.f32 %v2115, %v1974
        %v2148 = vmul.f32 %v2116, %v1976
        %v2149 = vmul.f32 %v2117, %v1978
        %v2150 = vmul.f32 %v2118, %v1980
        %v2151 = vmul.f32 %v2119, %v1982
        %v2152 = vmul.f32 %v2120, %v1984
        %v2153 = vmul.f32 %v2121, %v1986
        %v2154 = vmul.f32 %v2122, %v1988
        %v2155 = vmul.f32 %v2123, %v1990
        %v2156 = vmul.f32 %v2124, %v1992
        %v2157 = vmul.f32 %v2125, %v1994
        %v2158 = vmul.f32 %v2126, %v1996
        %v2159 = vmul.f32 %v2127, %v1998
        %v2160 = vmul.f32 %v2128, %v2000
        %v2161 = vadd.f32 %v2129, -0.28449672
        %v2162 = vadd.f32 %v2130, -0.28449672
        %v2163 = vadd.f32 %v2131, -0.28449672
        %v2164 = vadd.f32 %v2132, -0.28449672
        %v2165 = vadd.f32 %v2133, -0.28449672
        %v2166 = vadd.f32 %v2134, -0.28449672
        %v2167 = vadd.f32 %v2135, -0.28449672
        %v2168 = vadd.f32 %v2136, -0.28449672
        %v2169 = vadd.f32 %v2137, -0.28449672
        %v2170 = vadd.f32 %v2138, -0.28449672
        %v2171 = vadd.f32 %v2139, -0.28449672
        %v2172 = vadd.f32 %v2140, -0.28449672
        %v2173 = vadd.f32 %v2141, -0.28449672
        %v2174 = vadd.f32 %v2142, -0.28449672
        %v2175 = vadd.f32 %v2143, -0.28449672
        %v2176 = vadd.f32 %v2144, -0.28449672
        %v2177 = vadd.f32 %v2145, -0.28449672
        %v2178 = vadd.f32 %v2146, -0.28449672
        %v2179 = vadd.f32 %v2147, -0.28449672
        %v2180 = vadd.f32 %v2148, -0.28449672
        %v2181 = vadd.f32 %v2149, -0.28449672
        %v2182 = vadd.f32 %v2150, -0.28449672
        %v2183 = vadd.f32 %v2151, -0.28449672
        %v2184 = vadd.f32 %v2152, -0.28449672
        %v2185 = vadd.f32 %v2153, -0.28449672
        %v2186 = vadd.f32 %v2154, -0.28449672
        %v2187 = vadd.f32 %v2155, -0.28449672
        %v2188 = vadd.f32 %v2156, -0.28449672
        %v2189 = vadd.f32 %v2157, -0.28449672
        %v2190 = vadd.f32 %v2158, -0.28449672
        %v2191 = vadd.f32 %v2159, -0.28449672
        %v2192 = vadd.f32 %v2160, -0.28449672
        %v2193 = vmul.f32 %v2161, %v1938
        %v2194 = vmul.f32 %v2162, %v1940
        %v2195 = vmul.f32 %v2163, %v1942
        %v2196 = vmul.f32 %v2164, %v1944
        %v2197 = vmul.f32 %v2165, %v1946
        %v2198 = vmul.f32 %v2166, %v1948
        %v2199 = vmul.f32 %v2167, %v1950
        %v2200 = vmul.f32 %v2168, %v1952
        %v2201 = vmul.f32 %v2169, %v1954
        %v2202 = vmul.f32 %v2170, %v1956
        %v2203 = vmul.f32 %v2171, %v1958
        %v2204 = vmul.f32 %v2172, %v1960
        %v2205 = vmul.f32 %v2173, %v1962
        %v2206 = vmul.f32 %v2174, %v1964
        %v2207 = vmul.f32 %v2175, %v1966
        %v2208 = vmul.f32 %v2176, %v1968
        %v2209 = vmul.f32 %v2177, %v1970
        %v2210 = vmul.f32 %v2178, %v1972
        %v2211 = vmul.f32 %v2179, %v1974
        %v2212 = vmul.f32 %v2180, %v1976
        %v2213 = vmul.f32 %v2181, %v1978
        %v2214 = vmul.f32 %v2182, %v1980
        %v2215 = vmul.f32 %v2183, %v1982
        %v2216 = vmul.f32 %v2184, %v1984
        %v2217 = vmul.f32 %v2185, %v1986
        %v2218 = vmul.f32 %v2186, %v1988
        %v2219 = vmul.f32 %v2187, %v1990
        %v2220 = vmul.f32 %v2188, %v1992
        %v2221 = vmul.f32 %v2189, %v1994
        %v2222 = vmul.f32 %v2190, %v1996
        %v2223 = vmul.f32 %v2191, %v1998
        %v2224 = vmul.f32 %v2192, %v2000
        %v2225 = vadd.f32 %v2193, 0.2548296
        %v2226 = vadd.f32 %v2194, 0.2548296
        %v2227 = vadd.f32 %v2195, 0.2548296
        %v2228 = vadd.f32 %v2196, 0.2548296
        %v2229 = vadd.f32 %v2197, 0.2548296
        %v2230 = vadd.f32 %v2198, 0.2548296
        %v2231 = vadd.f32 %v2199, 0.2548296
        %v2232 = vadd.f32 %v2200, 0.2548296
        %v2233 = vadd.f32 %v2201, 0.2548296
        %v2234 = vadd.f32 %v2202, 0.2548296
        %v2235 = vadd.f32 %v2203, 0.2548296
        %v2236 = vadd.f32 %v2204, 0.2548296
        %v2237 = vadd.f32 %v2205, 0.2548296
        %v2238 = vadd.f32 %v2206, 0.2548296
        %v2239 = vadd.f32 %v2207, 0.2548296
        %v2240 = vadd.f32 %v2208, 0.2548296
        %v2241 = vadd.f32 %v2209, 0.2548296
        %v2242 = vadd.f32 %v2210, 0.2548296
        %v2243 = vadd.f32 %v2211, 0.2548296
        %v2244 = vadd.f32 %v2212, 0.2548296
        %v2245 = vadd.f32 %v2213, 0.2548296
        %v2246 = vadd.f32 %v2214, 0.2548296
        %v2247 = vadd.f32 %v2215, 0.2548296
        %v2248 = vadd.f32 %v2216, 0.2548296
        %v2249 = vadd.f32 %v2217, 0.2548296
        %v2250 = vadd.f32 %v2218, 0.2548296
        %v2251 = vadd.f32 %v2219, 0.2548296
        %v2252 = vadd.f32 %v2220, 0.2548296
        %v2253 = vadd.f32 %v2221, 0.2548296
        %v2254 = vadd.f32 %v2222, 0.2548296
        %v2255 = vadd.f32 %v2223, 0.2548296
        %v2256 = vadd.f32 %v2224, 0.2548296
        %v2257 = vmul.f32 %v2225, %v1938
        %v2258 = vmul.f32 %v2226, %v1940
        %v2259 = vmul.f32 %v2227, %v1942
        %v2260 = vmul.f32 %v2228, %v1944
        %v2261 = vmul.f32 %v2229, %v1946
        %v2262 = vmul.f32 %v2230, %v1948
        %v2263 = vmul.f32 %v2231, %v1950
        %v2264 = vmul.f32 %v2232, %v1952
        %v2265 = vmul.f32 %v2233, %v1954
        %v2266 = vmul.f32 %v2234, %v1956
        %v2267 = vmul.f32 %v2235, %v1958
        %v2268 = vmul.f32 %v2236, %v1960
        %v2269 = vmul.f32 %v2237, %v1962
        %v2270 = vmul.f32 %v2238, %v1964
        %v2271 = vmul.f32 %v2239, %v1966
        %v2272 = vmul.f32 %v2240, %v1968
        %v2273 = vmul.f32 %v2241, %v1970
        %v2274 = vmul.f32 %v2242, %v1972
        %v2275 = vmul.f32 %v2243, %v1974
        %v2276 = vmul.f32 %v2244, %v1976
        %v2277 = vmul.f32 %v2245, %v1978
        %v2278 = vmul.f32 %v2246, %v1980
        %v2279 = vmul.f32 %v2247, %v1982
        %v2280 = vmul.f32 %v2248, %v1984
        %v2281 = vmul.f32 %v2249, %v1986
        %v2282 = vmul.f32 %v2250, %v1988
        %v2283 = vmul.f32 %v2251, %v1990
        %v2284 = vmul.f32 %v2252, %v1992
        %v2285 = vmul.f32 %v2253, %v1994
        %v2286 = vmul.f32 %v2254, %v1996
        %v2287 = vmul.f32 %v2255, %v1998
        %v2288 = vmul.f32 %v2256, %v2000
        %v2289 = vsub.f32 0.0, %v1841
        %v2290 = vsub.f32 0.0, %v1842
        %v2291 = vsub.f32 0.0, %v1843
        %v2292 = vsub.f32 0.0, %v1844
        %v2293 = vsub.f32 0.0, %v1845
        %v2294 = vsub.f32 0.0, %v1846
        %v2295 = vsub.f32 0.0, %v1847
        %v2296 = vsub.f32 0.0, %v1848
        %v2297 = vsub.f32 0.0, %v1849
        %v2298 = vsub.f32 0.0, %v1850
        %v2299 = vsub.f32 0.0, %v1851
        %v2300 = vsub.f32 0.0, %v1852
        %v2301 = vsub.f32 0.0, %v1853
        %v2302 = vsub.f32 0.0, %v1854
        %v2303 = vsub.f32 0.0, %v1855
        %v2304 = vsub.f32 0.0, %v1856
        %v2305 = vsub.f32 0.0, %v1857
        %v2306 = vsub.f32 0.0, %v1858
        %v2307 = vsub.f32 0.0, %v1859
        %v2308 = vsub.f32 0.0, %v1860
        %v2309 = vsub.f32 0.0, %v1861
        %v2310 = vsub.f32 0.0, %v1862
        %v2311 = vsub.f32 0.0, %v1863
        %v2312 = vsub.f32 0.0, %v1864
        %v2313 = vsub.f32 0.0, %v1865
        %v2314 = vsub.f32 0.0, %v1866
        %v2315 = vsub.f32 0.0, %v1867
        %v2316 = vsub.f32 0.0, %v1868
        %v2317 = vsub.f32 0.0, %v1869
        %v2318 = vsub.f32 0.0, %v1870
        %v2319 = vsub.f32 0.0, %v1871
        %v2320 = vsub.f32 0.0, %v1872
        %v2321 = vmul.f32 %v2289, %v1841
        %v2322 = vmul.f32 %v2290, %v1842
        %v2323 = vmul.f32 %v2291, %v1843
        %v2324 = vmul.f32 %v2292, %v1844
        %v2325 = vmul.f32 %v2293, %v1845
        %v2326 = vmul.f32 %v2294, %v1846
        %v2327 = vmul.f32 %v2295, %v1847
        %v2328 = vmul.f32 %v2296, %v1848
        %v2329 = vmul.f32 %v2297, %v1849
        %v2330 = vmul.f32 %v2298, %v1850
        %v2331 = vmul.f32 %v2299, %v1851
        %v2332 = vmul.f32 %v2300, %v1852
        %v2333 = vmul.f32 %v2301, %v1853
        %v2334 = vmul.f32 %v2302, %v1854
        %v2335 = vmul.f32 %v2303, %v1855
        %v2336 = vmul.f32 %v2304, %v1856
        %v2337 = vmul.f32 %v2305, %v1857
        %v2338 = vmul.f32 %v2306, %v1858
        %v2339 = vmul.f32 %v2307, %v1859
        %v2340 = vmul.f32 %v2308, %v1860
        %v2341 = vmul.f32 %v2309, %v1861
        %v2342 = vmul.f32 %v2310, %v1862
        %v2343 = vmul.f32 %v2311, %v1863
        %v2344 = vmul.f32 %v2312, %v1864
        %v2345 = vmul.f32 %v2313, %v1865
        %v2346 = vmul.f32 %v2314, %v1866
        %v2347 = vmul.f32 %v2315, %v1867
        %v2348 = vmul.f32 %v2316, %v1868
        %v2349 = vmul.f32 %v2317, %v1869
        %v2350 = vmul.f32 %v2318, %v1870
        %v2351 = vmul.f32 %v2319, %v1871
        %v2352 = vmul.f32 %v2320, %v1872
        %v2353 = vmul.f32 %v2321, 1.442695
        %v2354 = vpow.pop %v2353
        %v2355 = vmul.f32 %v2322, 1.442695
        %v2356 = vpow.pop %v2355
        %v2357 = vmul.f32 %v2323, 1.442695
        %v2358 = vpow.pop %v2357
        %v2359 = vmul.f32 %v2324, 1.442695
        %v2360 = vpow.pop %v2359
        %v2361 = vmul.f32 %v2325, 1.442695
        %v2362 = vpow.pop %v2361
        %v2363 = vmul.f32 %v2326, 1.442695
        %v2364 = vpow.pop %v2363
        %v2365 = vmul.f32 %v2327, 1.442695
        %v2366 = vpow.pop %v2365
        %v2367 = vmul.f32 %v2328, 1.442695
        %v2368 = vpow.pop %v2367
        %v2369 = vmul.f32 %v2329, 1.442695
        %v2370 = vpow.pop %v2369
        %v2371 = vmul.f32 %v2330, 1.442695
        %v2372 = vpow.pop %v2371
        %v2373 = vmul.f32 %v2331, 1.442695
        %v2374 = vpow.pop %v2373
        %v2375 = vmul.f32 %v2332, 1.442695
        %v2376 = vpow.pop %v2375
        %v2377 = vmul.f32 %v2333, 1.442695
        %v2378 = vpow.pop %v2377
        %v2379 = vmul.f32 %v2334, 1.442695
        %v2380 = vpow.pop %v2379
        %v2381 = vmul.f32 %v2335, 1.442695
        %v2382 = vpow.pop %v2381
        %v2383 = vmul.f32 %v2336, 1.442695
        %v2384 = vpow.pop %v2383
        %v2385 = vmul.f32 %v2337, 1.442695
        %v2386 = vpow.pop %v2385
        %v2387 = vmul.f32 %v2338, 1.442695
        %v2388 = vpow.pop %v2387
        %v2389 = vmul.f32 %v2339, 1.442695
        %v2390 = vpow.pop %v2389
        %v2391 = vmul.f32 %v2340, 1.442695
        %v2392 = vpow.pop %v2391
        %v2393 = vmul.f32 %v2341, 1.442695
        %v2394 = vpow.pop %v2393
        %v2395 = vmul.f32 %v2342, 1.442695
        %v2396 = vpow.pop %v2395
        %v2397 = vmul.f32 %v2343, 1.442695
        %v2398 = vpow.pop %v2397
        %v2399 = vmul.f32 %v2344, 1.442695
        %v2400 = vpow.pop %v2399
        %v2401 = vmul.f32 %v2345, 1.442695
        %v2402 = vpow.pop %v2401
        %v2403 = vmul.f32 %v2346, 1.442695
        %v2404 = vpow.pop %v2403
        %v2405 = vmul.f32 %v2347, 1.442695
        %v2406 = vpow.pop %v2405
        %v2407 = vmul.f32 %v2348, 1.442695
        %v2408 = vpow.pop %v2407
        %v2409 = vmul.f32 %v2349, 1.442695
        %v2410 = vpow.pop %v2409
        %v2411 = vmul.f32 %v2350, 1.442695
        %v2412 = vpow.pop %v2411
        %v2413 = vmul.f32 %v2351, 1.442695
        %v2414 = vpow.pop %v2413
        %v2415 = vmul.f32 %v2352, 1.442695
        %v2416 = vpow.pop %v2415
        %v2417 = vmul.f32 %v2257, %v2354
        %v2418 = vmul.f32 %v2258, %v2356
        %v2419 = vmul.f32 %v2259, %v2358
        %v2420 = vmul.f32 %v2260, %v2360
        %v2421 = vmul.f32 %v2261, %v2362
        %v2422 = vmul.f32 %v2262, %v2364
        %v2423 = vmul.f32 %v2263, %v2366
        %v2424 = vmul.f32 %v2264, %v2368
        %v2425 = vmul.f32 %v2265, %v2370
        %v2426 = vmul.f32 %v2266, %v2372
        %v2427 = vmul.f32 %v2267, %v2374
        %v2428 = vmul.f32 %v2268, %v2376
        %v2429 = vmul.f32 %v2269, %v2378
        %v2430 = vmul.f32 %v2270, %v2380
        %v2431 = vmul.f32 %v2271, %v2382
        %v2432 = vmul.f32 %v2272, %v2384
        %v2433 = vmul.f32 %v2273, %v2386
        %v2434 = vmul.f32 %v2274, %v2388
        %v2435 = vmul.f32 %v2275, %v2390
        %v2436 = vmul.f32 %v2276, %v2392
        %v2437 = vmul.f32 %v2277, %v2394
        %v2438 = vmul.f32 %v2278, %v2396
        %v2439 = vmul.f32 %v2279, %v2398
        %v2440 = vmul.f32 %v2280, %v2400
        %v2441 = vmul.f32 %v2281, %v2402
        %v2442 = vmul.f32 %v2282, %v2404
        %v2443 = vmul.f32 %v2283, %v2406
        %v2444 = vmul.f32 %v2284, %v2408
        %v2445 = vmul.f32 %v2285, %v2410
        %v2446 = vmul.f32 %v2286, %v2412
        %v2447 = vmul.f32 %v2287, %v2414
        %v2448 = vmul.f32 %v2288, %v2416
        %v2449 = vsub.f32 1.0, %v2417
        %v2450 = vsub.f32 1.0, %v2418
        %v2451 = vsub.f32 1.0, %v2419
        %v2452 = vsub.f32 1.0, %v2420
        %v2453 = vsub.f32 1.0, %v2421
        %v2454 = vsub.f32 1.0, %v2422
        %v2455 = vsub.f32 1.0, %v2423
        %v2456 = vsub.f32 1.0, %v2424
        %v2457 = vsub.f32 1.0, %v2425
        %v2458 = vsub.f32 1.0, %v2426
        %v2459 = vsub.f32 1.0, %v2427
        %v2460 = vsub.f32 1.0, %v2428
        %v2461 = vsub.f32 1.0, %v2429
        %v2462 = vsub.f32 1.0, %v2430
        %v2463 = vsub.f32 1.0, %v2431
        %v2464 = vsub.f32 1.0, %v2432
        %v2465 = vsub.f32 1.0, %v2433
        %v2466 = vsub.f32 1.0, %v2434
        %v2467 = vsub.f32 1.0, %v2435
        %v2468 = vsub.f32 1.0, %v2436
        %v2469 = vsub.f32 1.0, %v2437
        %v2470 = vsub.f32 1.0, %v2438
        %v2471 = vsub.f32 1.0, %v2439
        %v2472 = vsub.f32 1.0, %v2440
        %v2473 = vsub.f32 1.0, %v2441
        %v2474 = vsub.f32 1.0, %v2442
        %v2475 = vsub.f32 1.0, %v2443
        %v2476 = vsub.f32 1.0, %v2444
        %v2477 = vsub.f32 1.0, %v2445
        %v2478 = vsub.f32 1.0, %v2446
        %v2479 = vsub.f32 1.0, %v2447
        %v2480 = vsub.f32 1.0, %v2448
        %vm2481 = vcmp.lt.f32.partialorder %v1809, 0.0
        %vm2482 = vcmp.lt.f32.partialorder %v1810, 0.0
        %vm2483 = vcmp.lt.f32.partialorder %v1811, 0.0
        %vm2484 = vcmp.lt.f32.partialorder %v1812, 0.0
        %vm2485 = vcmp.lt.f32.partialorder %v1813, 0.0
        %vm2486 = vcmp.lt.f32.partialorder %v1814, 0.0
        %vm2487 = vcmp.lt.f32.partialorder %v1815, 0.0
        %vm2488 = vcmp.lt.f32.partialorder %v1816, 0.0
        %vm2489 = vcmp.lt.f32.partialorder %v1817, 0.0
        %vm2490 = vcmp.lt.f32.partialorder %v1818, 0.0
        %vm2491 = vcmp.lt.f32.partialorder %v1819, 0.0
        %vm2492 = vcmp.lt.f32.partialorder %v1820, 0.0
        %vm2493 = vcmp.lt.f32.partialorder %v1821, 0.0
        %vm2494 = vcmp.lt.f32.partialorder %v1822, 0.0
        %vm2495 = vcmp.lt.f32.partialorder %v1823, 0.0
        %vm2496 = vcmp.lt.f32.partialorder %v1824, 0.0
        %vm2497 = vcmp.lt.f32.partialorder %v1825, 0.0
        %vm2498 = vcmp.lt.f32.partialorder %v1826, 0.0
        %vm2499 = vcmp.lt.f32.partialorder %v1827, 0.0
        %vm2500 = vcmp.lt.f32.partialorder %v1828, 0.0
        %vm2501 = vcmp.lt.f32.partialorder %v1829, 0.0
        %vm2502 = vcmp.lt.f32.partialorder %v1830, 0.0
        %vm2503 = vcmp.lt.f32.partialorder %v1831, 0.0
        %vm2504 = vcmp.lt.f32.partialorder %v1832, 0.0
        %vm2505 = vcmp.lt.f32.partialorder %v1833, 0.0
        %vm2506 = vcmp.lt.f32.partialorder %v1834, 0.0
        %vm2507 = vcmp.lt.f32.partialorder %v1835, 0.0
        %vm2508 = vcmp.lt.f32.partialorder %v1836, 0.0
        %vm2509 = vcmp.lt.f32.partialorder %v1837, 0.0
        %vm2510 = vcmp.lt.f32.partialorder %v1838, 0.0
        %vm2511 = vcmp.lt.f32.partialorder %v1839, 0.0
        %vm2512 = vcmp.lt.f32.partialorder %v1840, 0.0
        %v2513 = vsub.f32 0.0, %v2449
        %v2514 = vsub.f32 0.0, %v2450
        %v2515 = vsub.f32 0.0, %v2451
        %v2516 = vsub.f32 0.0, %v2452
        %v2517 = vsub.f32 0.0, %v2453
        %v2518 = vsub.f32 0.0, %v2454
        %v2519 = vsub.f32 0.0, %v2455
        %v2520 = vsub.f32 0.0, %v2456
        %v2521 = vsub.f32 0.0, %v2457
        %v2522 = vsub.f32 0.0, %v2458
        %v2523 = vsub.f32 0.0, %v2459
        %v2524 = vsub.f32 0.0, %v2460
        %v2525 = vsub.f32 0.0, %v2461
        %v2526 = vsub.f32 0.0, %v2462
        %v2527 = vsub.f32 0.0, %v2463
        %v2528 = vsub.f32 0.0, %v2464
        %v2529 = vsub.f32 0.0, %v2465
        %v2530 = vsub.f32 0.0, %v2466
        %v2531 = vsub.f32 0.0, %v2467
        %v2532 = vsub.f32 0.0, %v2468
        %v2533 = vsub.f32 0.0, %v2469
        %v2534 = vsub.f32 0.0, %v2470
        %v2535 = vsub.f32 0.0, %v2471
        %v2536 = vsub.f32 0.0, %v2472
        %v2537 = vsub.f32 0.0, %v2473
        %v2538 = vsub.f32 0.0, %v2474
        %v2539 = vsub.f32 0.0, %v2475
        %v2540 = vsub.f32 0.0, %v2476
        %v2541 = vsub.f32 0.0, %v2477
        %v2542 = vsub.f32 0.0, %v2478
        %v2543 = vsub.f32 0.0, %v2479
        %v2544 = vsub.f32 0.0, %v2480
        %v2545 = vsel %vm2481, %v2513, %v2449
        %v2546 = vsel %vm2482, %v2514, %v2450
        %v2547 = vsel %vm2483, %v2515, %v2451
        %v2548 = vsel %vm2484, %v2516, %v2452
        %v2549 = vsel %vm2485, %v2517, %v2453
        %v2550 = vsel %vm2486, %v2518, %v2454
        %v2551 = vsel %vm2487, %v2519, %v2455
        %v2552 = vsel %vm2488, %v2520, %v2456
        %v2553 = vsel %vm2489, %v2521, %v2457
        %v2554 = vsel %vm2490, %v2522, %v2458
        %v2555 = vsel %vm2491, %v2523, %v2459
        %v2556 = vsel %vm2492, %v2524, %v2460
        %v2557 = vsel %vm2493, %v2525, %v2461
        %v2558 = vsel %vm2494, %v2526, %v2462
        %v2559 = vsel %vm2495, %v2527, %v2463
        %v2560 = vsel %vm2496, %v2528, %v2464
        %v2561 = vsel %vm2497, %v2529, %v2465
        %v2562 = vsel %vm2498, %v2530, %v2466
        %v2563 = vsel %vm2499, %v2531, %v2467
        %v2564 = vsel %vm2500, %v2532, %v2468
        %v2565 = vsel %vm2501, %v2533, %v2469
        %v2566 = vsel %vm2502, %v2534, %v2470
        %v2567 = vsel %vm2503, %v2535, %v2471
        %v2568 = vsel %vm2504, %v2536, %v2472
        %v2569 = vsel %vm2505, %v2537, %v2473
        %v2570 = vsel %vm2506, %v2538, %v2474
        %v2571 = vsel %vm2507, %v2539, %v2475
        %v2572 = vsel %vm2508, %v2540, %v2476
        %v2573 = vsel %vm2509, %v2541, %v2477
        %v2574 = vsel %vm2510, %v2542, %v2478
        %v2575 = vsel %vm2511, %v2543, %v2479
        %v2576 = vsel %vm2512, %v2544, %v2480
        %v2577 = vadd.f32 %v2545, 1.0
        %v2578 = vadd.f32 %v2546, 1.0
        %v2579 = vadd.f32 %v2547, 1.0
        %v2580 = vadd.f32 %v2548, 1.0
        %v2581 = vadd.f32 %v2549, 1.0
        %v2582 = vadd.f32 %v2550, 1.0
        %v2583 = vadd.f32 %v2551, 1.0
        %v2584 = vadd.f32 %v2552, 1.0
        %v2585 = vadd.f32 %v2553, 1.0
        %v2586 = vadd.f32 %v2554, 1.0
        %v2587 = vadd.f32 %v2555, 1.0
        %v2588 = vadd.f32 %v2556, 1.0
        %v2589 = vadd.f32 %v2557, 1.0
        %v2590 = vadd.f32 %v2558, 1.0
        %v2591 = vadd.f32 %v2559, 1.0
        %v2592 = vadd.f32 %v2560, 1.0
        %v2593 = vadd.f32 %v2561, 1.0
        %v2594 = vadd.f32 %v2562, 1.0
        %v2595 = vadd.f32 %v2563, 1.0
        %v2596 = vadd.f32 %v2564, 1.0
        %v2597 = vadd.f32 %v2565, 1.0
        %v2598 = vadd.f32 %v2566, 1.0
        %v2599 = vadd.f32 %v2567, 1.0
        %v2600 = vadd.f32 %v2568, 1.0
        %v2601 = vadd.f32 %v2569, 1.0
        %v2602 = vadd.f32 %v2570, 1.0
        %v2603 = vadd.f32 %v2571, 1.0
        %v2604 = vadd.f32 %v2572, 1.0
        %v2605 = vadd.f32 %v2573, 1.0
        %v2606 = vadd.f32 %v2574, 1.0
        %v2607 = vadd.f32 %v2575, 1.0
        %v2608 = vadd.f32 %v2576, 1.0
        %v2609 = vmul.f32 %v1777, %v2577
        %v2610 = vmul.f32 %v1778, %v2578
        %v2611 = vmul.f32 %v1779, %v2579
        %v2612 = vmul.f32 %v1780, %v2580
        %v2613 = vmul.f32 %v1781, %v2581
        %v2614 = vmul.f32 %v1782, %v2582
        %v2615 = vmul.f32 %v1783, %v2583
        %v2616 = vmul.f32 %v1784, %v2584
        %v2617 = vmul.f32 %v1785, %v2585
        %v2618 = vmul.f32 %v1786, %v2586
        %v2619 = vmul.f32 %v1787, %v2587
        %v2620 = vmul.f32 %v1788, %v2588
        %v2621 = vmul.f32 %v1789, %v2589
        %v2622 = vmul.f32 %v1790, %v2590
        %v2623 = vmul.f32 %v1791, %v2591
        %v2624 = vmul.f32 %v1792, %v2592
        %v2625 = vmul.f32 %v1793, %v2593
        %v2626 = vmul.f32 %v1794, %v2594
        %v2627 = vmul.f32 %v1795, %v2595
        %v2628 = vmul.f32 %v1796, %v2596
        %v2629 = vmul.f32 %v1797, %v2597
        %v2630 = vmul.f32 %v1798, %v2598
        %v2631 = vmul.f32 %v1799, %v2599
        %v2632 = vmul.f32 %v1800, %v2600
        %v2633 = vmul.f32 %v1801, %v2601
        %v2634 = vmul.f32 %v1802, %v2602
        %v2635 = vmul.f32 %v1803, %v2603
        %v2636 = vmul.f32 %v1804, %v2604
        %v2637 = vmul.f32 %v1805, %v2605
        %v2638 = vmul.f32 %v1806, %v2606
        %v2639 = vmul.f32 %v1807, %v2607
        %v2640 = vmul.f32 %v1808, %v2608
        %v2641 = vld [vmem:[%s5] sm:$0xff]
        %v2642 = vld [vmem:[%s5 + $0x8] sm:$0xff]
        %v2643 = vld [vmem:[%s5 + $0x10] sm:$0xff]
        %v2644 = vld [vmem:[%s5 + $0x18] sm:$0xff]
        %v2645 = vld [vmem:[%s5 + $0x20] sm:$0xff]
        %v2646 = vld [vmem:[%s5 + $0x28] sm:$0xff]
        %v2647 = vld [vmem:[%s5 + $0x30] sm:$0xff]
        %v2648 = vld [vmem:[%s5 + $0x38] sm:$0xff]
        %v2649 = vld [vmem:[%s5 + $0x40] sm:$0xff]
        %v2650 = vld [vmem:[%s5 + $0x48] sm:$0xff]
        %v2651 = vld [vmem:[%s5 + $0x50] sm:$0xff]
        %v2652 = vld [vmem:[%s5 + $0x58] sm:$0xff]
        %v2653 = vld [vmem:[%s5 + $0x60] sm:$0xff]
        %v2654 = vld [vmem:[%s5 + $0x68] sm:$0xff]
        %v2655 = vld [vmem:[%s5 + $0x70] sm:$0xff]
        %v2656 = vld [vmem:[%s5 + $0x78] sm:$0xff]
        %v2657 = vld [vmem:[%s5 + $0x80] sm:$0xff]
        %v2658 = vld [vmem:[%s5 + $0x88] sm:$0xff]
        %v2659 = vld [vmem:[%s5 + $0x90] sm:$0xff]
        %v2660 = vld [vmem:[%s5 + $0x98] sm:$0xff]
        %v2661 = vld [vmem:[%s5 + $0xa0] sm:$0xff]
        %v2662 = vld [vmem:[%s5 + $0xa8] sm:$0xff]
        %v2663 = vld [vmem:[%s5 + $0xb0] sm:$0xff]
        %v2664 = vld [vmem:[%s5 + $0xb8] sm:$0xff]
        %v2665 = vld [vmem:[%s5 + $0xc0] sm:$0xff]
        %v2666 = vld [vmem:[%s6] sm:$0xff]
        %v2667 = vld [vmem:[%s6 + $0x8] sm:$0xff]
        %v2668 = vld [vmem:[%s6 + $0x10] sm:$0xff]
        %v2669 = vld [vmem:[%s6 + $0x18] sm:$0xff]
        %v2670 = vld [vmem:[%s6 + $0x20] sm:$0xff]
        %v2671 = vld [vmem:[%s6 + $0x28] sm:$0xff]
        %v2672 = vld [vmem:[%s6 + $0x30] sm:$0xff]
        %v2673 = vld [vmem:[%s6 + $0x38] sm:$0xff]
        %v2674 = vld [vmem:[%s6 + $0x40] sm:$0xff]
        %v2675 = vld [vmem:[%s6 + $0x48] sm:$0xff]
        %v2676 = vld [vmem:[%s6 + $0x50] sm:$0xff]
        %v2677 = vld [vmem:[%s6 + $0x58] sm:$0xff]
        %v2678 = vld [vmem:[%s6 + $0x60] sm:$0xff]
        %v2679 = vld [vmem:[%s6 + $0x68] sm:$0xff]
        %v2680 = vld [vmem:[%s6 + $0x70] sm:$0xff]
        %v2681 = vld [vmem:[%s6 + $0x78] sm:$0xff]
        %v2682 = vld [vmem:[%s6 + $0x80] sm:$0xff]
        %v2683 = vld [vmem:[%s6 + $0x88] sm:$0xff]
        %v2684 = vld [vmem:[%s6 + $0x90] sm:$0xff]
        %v2685 = vld [vmem:[%s6 + $0x98] sm:$0xff]
        %v2686 = vld [vmem:[%s6 + $0xa0] sm:$0xff]
        %v2687 = vld [vmem:[%s6 + $0xa8] sm:$0xff]
        %v2688 = vld [vmem:[%s6 + $0xb0] sm:$0xff]
        %v2689 = vld [vmem:[%s6 + $0xb8] sm:$0xff]
        %v2690 = vld [vmem:[%s6 + $0xc0] sm:$0xff]
        %2692 = vset.pattern.permute.xlu0 0
        %2693 = vperm.xlu0 %2692, %v2666
        %v2694 = vpop.permute.xlu0 %2693
        %2697 = vset.pattern.permute.xlu0 0
        %2698 = vperm.xlu0 %2697, %v2667
        %v2699 = vpop.permute.xlu0 %2698
        %2702 = vset.pattern.permute.xlu0 0
        %2703 = vperm.xlu0 %2702, %v2668
        %v2704 = vpop.permute.xlu0 %2703
        %2707 = vset.pattern.permute.xlu0 0
        %2708 = vperm.xlu0 %2707, %v2669
        %v2709 = vpop.permute.xlu0 %2708
        %2712 = vset.pattern.permute.xlu0 0
        %2713 = vperm.xlu0 %2712, %v2670
        %v2714 = vpop.permute.xlu0 %2713
        %2717 = vset.pattern.permute.xlu0 0
        %2718 = vperm.xlu0 %2717, %v2671
        %v2719 = vpop.permute.xlu0 %2718
        %2722 = vset.pattern.permute.xlu0 0
        %2723 = vperm.xlu0 %2722, %v2672
        %v2724 = vpop.permute.xlu0 %2723
        %2727 = vset.pattern.permute.xlu0 0
        %2728 = vperm.xlu0 %2727, %v2673
        %v2729 = vpop.permute.xlu0 %2728
        %2732 = vset.pattern.permute.xlu0 0
        %2733 = vperm.xlu0 %2732, %v2674
        %v2734 = vpop.permute.xlu0 %2733
        %2737 = vset.pattern.permute.xlu0 0
        %2738 = vperm.xlu0 %2737, %v2675
        %v2739 = vpop.permute.xlu0 %2738
        %2742 = vset.pattern.permute.xlu0 0
        %2743 = vperm.xlu0 %2742, %v2676
        %v2744 = vpop.permute.xlu0 %2743
        %2747 = vset.pattern.permute.xlu0 0
        %2748 = vperm.xlu0 %2747, %v2677
        %v2749 = vpop.permute.xlu0 %2748
        %2752 = vset.pattern.permute.xlu0 0
        %2753 = vperm.xlu0 %2752, %v2678
        %v2754 = vpop.permute.xlu0 %2753
        %2757 = vset.pattern.permute.xlu0 0
        %2758 = vperm.xlu0 %2757, %v2679
        %v2759 = vpop.permute.xlu0 %2758
        %2762 = vset.pattern.permute.xlu0 0
        %2763 = vperm.xlu0 %2762, %v2680
        %v2764 = vpop.permute.xlu0 %2763
        %2767 = vset.pattern.permute.xlu0 0
        %2768 = vperm.xlu0 %2767, %v2681
        %v2769 = vpop.permute.xlu0 %2768
        %2772 = vset.pattern.permute.xlu0 0
        %2773 = vperm.xlu0 %2772, %v2682
        %v2774 = vpop.permute.xlu0 %2773
        %2777 = vset.pattern.permute.xlu0 0
        %2778 = vperm.xlu0 %2777, %v2683
        %v2779 = vpop.permute.xlu0 %2778
        %2782 = vset.pattern.permute.xlu0 0
        %2783 = vperm.xlu0 %2782, %v2684
        %v2784 = vpop.permute.xlu0 %2783
        %2787 = vset.pattern.permute.xlu0 0
        %2788 = vperm.xlu0 %2787, %v2685
        %v2789 = vpop.permute.xlu0 %2788
        %2792 = vset.pattern.permute.xlu0 0
        %2793 = vperm.xlu0 %2792, %v2686
        %v2794 = vpop.permute.xlu0 %2793
        %2797 = vset.pattern.permute.xlu0 0
        %2798 = vperm.xlu0 %2797, %v2687
        %v2799 = vpop.permute.xlu0 %2798
        %2802 = vset.pattern.permute.xlu0 0
        %2803 = vperm.xlu0 %2802, %v2688
        %v2804 = vpop.permute.xlu0 %2803
        %2807 = vset.pattern.permute.xlu0 0
        %2808 = vperm.xlu0 %2807, %v2689
        %v2809 = vpop.permute.xlu0 %2808
        %2812 = vset.pattern.permute.xlu0 0
        %2813 = vperm.xlu0 %2812, %v2690
        %v2814 = vpop.permute.xlu0 %2813
        %2816 = vmatprep.subr.mxu0 %v2610
        %2817 = vmatpush1.msra.mxu0 %v2609
        %2818 = vmatprep.subr.mxu0 %v2612
        %2819 = vmatpush1.msra.mxu0 %v2611
        %2820 = vmatprep.subr.mxu0 %v2614
        %2821 = vmatpush1.msra.mxu0 %v2613
        %2822 = vmatprep.subr.mxu0 %v2616
        %2823 = vmatpush1.msra.mxu0 %v2615
        %2824 = vmatprep.subr.mxu0 %v2618
        %2825 = vmatpush1.msra.mxu0 %v2617
        %2826 = vmatprep.subr.mxu0 %v2620
        %2827 = vmatpush1.msra.mxu0 %v2619
        %2828 = vmatprep.subr.mxu0 %v2622
        %2829 = vmatpush1.msra.mxu0 %v2621
        %2830 = vmatprep.subr.mxu0 %v2624
        %2831 = vmatpush1.msra.mxu0 %v2623
        %2832 = vmatprep.subr.mxu0 %v2626
        %2833 = vmatpush1.msra.mxu0 %v2625
        %2834 = vmatprep.subr.mxu0 %v2628
        %2835 = vmatpush1.msra.mxu0 %v2627
        %2836 = vmatprep.subr.mxu0 %v2630
        %2837 = vmatpush1.msra.mxu0 %v2629
        %2838 = vmatprep.subr.mxu0 %v2632
        %2839 = vmatpush1.msra.mxu0 %v2631
        %2840 = vmatprep.subr.mxu0 %v2634
        %2841 = vmatpush1.msra.mxu0 %v2633
        %2842 = vmatprep.subr.mxu0 %v2636
        %2843 = vmatpush1.msra.mxu0 %v2635
        %2844 = vmatprep.subr.mxu0 %v2638
        %2845 = vmatpush1.msra.mxu0 %v2637
        %2846 = vmatprep.subr.mxu0 %v2640
        %2847 = vmatpush1.msra.mxu0 %v2639
        %2848 = vmatprep.subr.mxu0 0.0
        %2849 = vmatpush1.msra.mxu0 0.0
        %2850 = vmatprep.subr.mxu0 0.0
        %2851 = vmatpush1.msra.mxu0 0.0
        %2852 = vmatprep.subr.mxu0 0.0
        %2853 = vmatpush1.msra.mxu0 0.0
        %2854 = vmatprep.subr.mxu0 0.0
        %2855 = vmatpush1.msra.mxu0 0.0
        %2856 = vmatprep.subr.mxu0 0.0
        %2857 = vmatpush1.msra.mxu0 0.0
        %2858 = vmatprep.subr.mxu0 0.0
        %2859 = vmatpush1.msra.mxu0 0.0
        %2860 = vmatprep.subr.mxu0 0.0
        %2861 = vmatpush1.msra.mxu0 0.0
        %2862 = vmatprep.subr.mxu0 0.0
        %2863 = vmatpush1.msra.mxu0 0.0
        %2864 = vmatprep.subr.mxu0 0.0
        %2865 = vmatpush1.msra.mxu0 0.0
        %2866 = vmatprep.subr.mxu0 0.0
        %2867 = vmatpush1.msra.mxu0 0.0
        %2868 = vmatprep.subr.mxu0 0.0
        %2869 = vmatpush1.msra.mxu0 0.0
        %2870 = vmatprep.subr.mxu0 0.0
        %2871 = vmatpush1.msra.mxu0 0.0
        %2872 = vmatprep.subr.mxu0 0.0
        %2873 = vmatpush1.msra.mxu0 0.0
        %2874 = vmatprep.subr.mxu0 0.0
        %2875 = vmatpush1.msra.mxu0 0.0
        %2876 = vmatprep.subr.mxu0 0.0
        %2877 = vmatpush1.msra.mxu0 0.0
        %2878 = vmatprep.subr.mxu0 0.0
        %2879 = vmatpush1.msra.mxu0 0.0
        %2880 = vmatprep.mubr.f32.mxu0 0.0
        %2881 = vmatmul.mubr.f32.gmra.mrb[0].mxu0 %v2641
        %v2882 = vpop.f32.mrb[0].mxu0
        %v2883 = vadd.f32 %v2694, %v2882
        %v2884 = vpop.f32.mrb[0].mxu0
        %v2885 = vadd.f32 %v2694, %v2884
        %2886 = vmatprep.mubr.f32.mxu0 0.0
        %2887 = vmatmul.mubr.f32.gmra.mrb[0].mxu0 %v2642
        %v2888 = vpop.f32.mrb[0].mxu0
        %v2889 = vadd.f32 %v2699, %v2888
        %v2890 = vpop.f32.mrb[0].mxu0
        %v2891 = vadd.f32 %v2699, %v2890
        %2892 = vmatprep.mubr.f32.mxu0 0.0
        %2893 = vmatmul.mubr.f32.gmra.mrb[0].mxu0 %v2643
        %v2894 = vpop.f32.mrb[0].mxu0
        %v2895 = vadd.f32 %v2704, %v2894
        %v2896 = vpop.f32.mrb[0].mxu0
        %v2897 = vadd.f32 %v2704, %v2896
        %2898 = vmatprep.mubr.f32.mxu0 0.0
        %2899 = vmatmul.mubr.f32.gmra.mrb[0].mxu0 %v2644
        %v2900 = vpop.f32.mrb[0].mxu0
        %v2901 = vadd.f32 %v2709, %v2900
        %v2902 = vpop.f32.mrb[0].mxu0
        %v2903 = vadd.f32 %v2709, %v2902
        %2904 = vmatprep.mubr.f32.mxu0 0.0
        %2905 = vmatmul.mubr.f32.gmra.mrb[0].mxu0 %v2645
        %v2906 = vpop.f32.mrb[0].mxu0
        %v2907 = vadd.f32 %v2714, %v2906
        %v2908 = vpop.f32.mrb[0].mxu0
        %v2909 = vadd.f32 %v2714, %v2908
        %2910 = vmatprep.mubr.f32.mxu0 0.0
        %2911 = vmatmul.mubr.f32.gmra.mrb[0].mxu0 %v2646
        %v2912 = vpop.f32.mrb[0].mxu0
        %v2913 = vadd.f32 %v2719, %v2912
        %v2914 = vpop.f32.mrb[0].mxu0
        %v2915 = vadd.f32 %v2719, %v2914
        %2916 = vmatprep.mubr.f32.mxu0 0.0
        %2917 = vmatmul.mubr.f32.gmra.mrb[0].mxu0 %v2647
        %v2918 = vpop.f32.mrb[0].mxu0
        %v2919 = vadd.f32 %v2724, %v2918
        %v2920 = vpop.f32.mrb[0].mxu0
        %v2921 = vadd.f32 %v2724, %v2920
        %2922 = vmatprep.mubr.f32.mxu0 0.0
        %2923 = vmatmul.mubr.f32.gmra.mrb[0].mxu0 %v2648
        %v2924 = vpop.f32.mrb[0].mxu0
        %v2925 = vadd.f32 %v2729, %v2924
        %v2926 = vpop.f32.mrb[0].mxu0
        %v2927 = vadd.f32 %v2729, %v2926
        %2928 = vmatprep.mubr.f32.mxu0 0.0
        %2929 = vmatmul.mubr.f32.gmra.mrb[0].mxu0 %v2649
        %v2930 = vpop.f32.mrb[0].mxu0
        %v2931 = vadd.f32 %v2734, %v2930
        %v2932 = vpop.f32.mrb[0].mxu0
        %v2933 = vadd.f32 %v2734, %v2932
        %2934 = vmatprep.mubr.f32.mxu0 0.0
        %2935 = vmatmul.mubr.f32.gmra.mrb[0].mxu0 %v2650
        %v2936 = vpop.f32.mrb[0].mxu0
        %v2937 = vadd.f32 %v2739, %v2936
        %v2938 = vpop.f32.mrb[0].mxu0
        %v2939 = vadd.f32 %v2739, %v2938
        %2940 = vmatprep.mubr.f32.mxu0 0.0
        %2941 = vmatmul.mubr.f32.gmra.mrb[0].mxu0 %v2651
        %v2942 = vpop.f32.mrb[0].mxu0
        %v2943 = vadd.f32 %v2744, %v2942
        %v2944 = vpop.f32.mrb[0].mxu0
        %v2945 = vadd.f32 %v2744, %v2944
        %2946 = vmatprep.mubr.f32.mxu0 0.0
        %2947 = vmatmul.mubr.f32.gmra.mrb[0].mxu0 %v2652
        %v2948 = vpop.f32.mrb[0].mxu0
        %v2949 = vadd.f32 %v2749, %v2948
        %v2950 = vpop.f32.mrb[0].mxu0
        %v2951 = vadd.f32 %v2749, %v2950
        %2952 = vmatprep.mubr.f32.mxu0 0.0
        %2953 = vmatmul.mubr.f32.gmra.mrb[0].mxu0 %v2653
        %v2954 = vpop.f32.mrb[0].mxu0
        %v2955 = vadd.f32 %v2754, %v2954
        %v2956 = vpop.f32.mrb[0].mxu0
        %v2957 = vadd.f32 %v2754, %v2956
        %2958 = vmatprep.mubr.f32.mxu0 0.0
        %2959 = vmatmul.mubr.f32.gmra.mrb[0].mxu0 %v2654
        %v2960 = vpop.f32.mrb[0].mxu0
        %v2961 = vadd.f32 %v2759, %v2960
        %v2962 = vpop.f32.mrb[0].mxu0
        %v2963 = vadd.f32 %v2759, %v2962
        %2964 = vmatprep.mubr.f32.mxu0 0.0
        %2965 = vmatmul.mubr.f32.gmra.mrb[0].mxu0 %v2655
        %v2966 = vpop.f32.mrb[0].mxu0
        %v2967 = vadd.f32 %v2764, %v2966
        %v2968 = vpop.f32.mrb[0].mxu0
        %v2969 = vadd.f32 %v2764, %v2968
        %2970 = vmatprep.mubr.f32.mxu0 0.0
        %2971 = vmatmul.mubr.f32.gmra.mrb[0].mxu0 %v2656
        %v2972 = vpop.f32.mrb[0].mxu0
        %v2973 = vadd.f32 %v2769, %v2972
        %v2974 = vpop.f32.mrb[0].mxu0
        %v2975 = vadd.f32 %v2769, %v2974
        %2976 = vmatprep.mubr.f32.mxu0 0.0
        %2977 = vmatmul.mubr.f32.gmra.mrb[0].mxu0 %v2657
        %v2978 = vpop.f32.mrb[0].mxu0
        %v2979 = vadd.f32 %v2774, %v2978
        %v2980 = vpop.f32.mrb[0].mxu0
        %v2981 = vadd.f32 %v2774, %v2980
        %2982 = vmatprep.mubr.f32.mxu0 0.0
        %2983 = vmatmul.mubr.f32.gmra.mrb[0].mxu0 %v2658
        %v2984 = vpop.f32.mrb[0].mxu0
        %v2985 = vadd.f32 %v2779, %v2984
        %v2986 = vpop.f32.mrb[0].mxu0
        %v2987 = vadd.f32 %v2779, %v2986
        %2988 = vmatprep.mubr.f32.mxu0 0.0
        %2989 = vmatmul.mubr.f32.gmra.mrb[0].mxu0 %v2659
        %v2990 = vpop.f32.mrb[0].mxu0
        %v2991 = vadd.f32 %v2784, %v2990
        %v2992 = vpop.f32.mrb[0].mxu0
        %v2993 = vadd.f32 %v2784, %v2992
        %2994 = vmatprep.mubr.f32.mxu0 0.0
        %2995 = vmatmul.mubr.f32.gmra.mrb[0].mxu0 %v2660
        %v2996 = vpop.f32.mrb[0].mxu0
        %v2997 = vadd.f32 %v2789, %v2996
        %v2998 = vpop.f32.mrb[0].mxu0
        %v2999 = vadd.f32 %v2789, %v2998
        %3000 = vmatprep.mubr.f32.mxu0 0.0
        %3001 = vmatmul.mubr.f32.gmra.mrb[0].mxu0 %v2661
        %v3002 = vpop.f32.mrb[0].mxu0
        %v3003 = vadd.f32 %v2794, %v3002
        %v3004 = vpop.f32.mrb[0].mxu0
        %v3005 = vadd.f32 %v2794, %v3004
        %3006 = vmatprep.mubr.f32.mxu0 0.0
        %3007 = vmatmul.mubr.f32.gmra.mrb[0].mxu0 %v2662
        %v3008 = vpop.f32.mrb[0].mxu0
        %v3009 = vadd.f32 %v2799, %v3008
        %v3010 = vpop.f32.mrb[0].mxu0
        %v3011 = vadd.f32 %v2799, %v3010
        %3012 = vmatprep.mubr.f32.mxu0 0.0
        %3013 = vmatmul.mubr.f32.gmra.mrb[0].mxu0 %v2663
        %v3014 = vpop.f32.mrb[0].mxu0
        %v3015 = vadd.f32 %v2804, %v3014
        %v3016 = vpop.f32.mrb[0].mxu0
        %v3017 = vadd.f32 %v2804, %v3016
        %3018 = vmatprep.mubr.f32.mxu0 0.0
        %3019 = vmatmul.mubr.f32.gmra.mrb[0].mxu0 %v2664
        %v3020 = vpop.f32.mrb[0].mxu0
        %v3021 = vadd.f32 %v2809, %v3020
        %v3022 = vpop.f32.mrb[0].mxu0
        %v3023 = vadd.f32 %v2809, %v3022
        %3024 = vmatprep.mubr.f32.mxu0 0.0
        %3025 = vmatmul.mubr.f32.gmra.mrb[0].mxu0 %v2665
        %v3026 = vpop.f32.mrb[0].mxu0
        %v3027 = vadd.f32 %v2814, %v3026
        %v3028 = vpop.f32.mrb[0].mxu0
        %v3029 = vadd.f32 %v2814, %v3028
        %3030 = vdwg.mxu0
        %v3031 = vadd.f32 %v2883, %v2885
        %3032 = vadd.xlane.f32.xlu0 %v3031
        %v3033 = vpop.xlane.xlu0 %3032
        %v3034 = vadd.f32 %v2889, %v2891
        %3035 = vadd.xlane.f32.xlu0 %v3034
        %v3036 = vpop.xlane.xlu0 %3035
        %v3037 = vadd.f32 %v2895, %v2897
        %3038 = vadd.xlane.f32.xlu0 %v3037
        %v3039 = vpop.xlane.xlu0 %3038
        %v3040 = vadd.f32 %v2901, %v2903
        %3041 = vadd.xlane.f32.xlu0 %v3040
        %v3042 = vpop.xlane.xlu0 %3041
        %v3043 = vadd.f32 %v2907, %v2909
        %3044 = vadd.xlane.f32.xlu0 %v3043
        %v3045 = vpop.xlane.xlu0 %3044
        %v3046 = vadd.f32 %v2913, %v2915
        %3047 = vadd.xlane.f32.xlu0 %v3046
        %v3048 = vpop.xlane.xlu0 %3047
        %v3049 = vadd.f32 %v2919, %v2921
        %3050 = vadd.xlane.f32.xlu0 %v3049
        %v3051 = vpop.xlane.xlu0 %3050
        %v3052 = vadd.f32 %v2925, %v2927
        %3053 = vadd.xlane.f32.xlu0 %v3052
        %v3054 = vpop.xlane.xlu0 %3053
        %v3055 = vadd.f32 %v2931, %v2933
        %3056 = vadd.xlane.f32.xlu0 %v3055
        %v3057 = vpop.xlane.xlu0 %3056
        %v3058 = vadd.f32 %v2937, %v2939
        %3059 = vadd.xlane.f32.xlu0 %v3058
        %v3060 = vpop.xlane.xlu0 %3059
        %v3061 = vadd.f32 %v2943, %v2945
        %3062 = vadd.xlane.f32.xlu0 %v3061
        %v3063 = vpop.xlane.xlu0 %3062
        %v3064 = vadd.f32 %v2949, %v2951
        %3065 = vadd.xlane.f32.xlu0 %v3064
        %v3066 = vpop.xlane.xlu0 %3065
        %v3067 = vadd.f32 %v2955, %v2957
        %3068 = vadd.xlane.f32.xlu0 %v3067
        %v3069 = vpop.xlane.xlu0 %3068
        %v3070 = vadd.f32 %v2961, %v2963
        %3071 = vadd.xlane.f32.xlu0 %v3070
        %v3072 = vpop.xlane.xlu0 %3071
        %v3073 = vadd.f32 %v2967, %v2969
        %3074 = vadd.xlane.f32.xlu0 %v3073
        %v3075 = vpop.xlane.xlu0 %3074
        %v3076 = vadd.f32 %v2973, %v2975
        %3077 = vadd.xlane.f32.xlu0 %v3076
        %v3078 = vpop.xlane.xlu0 %3077
        %v3079 = vadd.f32 %v2979, %v2981
        %3080 = vadd.xlane.f32.xlu0 %v3079
        %v3081 = vpop.xlane.xlu0 %3080
        %v3082 = vadd.f32 %v2985, %v2987
        %3083 = vadd.xlane.f32.xlu0 %v3082
        %v3084 = vpop.xlane.xlu0 %3083
        %v3085 = vadd.f32 %v2991, %v2993
        %3086 = vadd.xlane.f32.xlu0 %v3085
        %v3087 = vpop.xlane.xlu0 %3086
        %v3088 = vadd.f32 %v2997, %v2999
        %3089 = vadd.xlane.f32.xlu0 %v3088
        %v3090 = vpop.xlane.xlu0 %3089
        %v3091 = vadd.f32 %v3003, %v3005
        %3092 = vadd.xlane.f32.xlu0 %v3091
        %v3093 = vpop.xlane.xlu0 %3092
        %v3094 = vadd.f32 %v3009, %v3011
        %3095 = vadd.xlane.f32.xlu0 %v3094
        %v3096 = vpop.xlane.xlu0 %3095
        %v3097 = vadd.f32 %v3015, %v3017
        %3098 = vadd.xlane.f32.xlu0 %v3097
        %v3099 = vpop.xlane.xlu0 %3098
        %v3100 = vadd.f32 %v3021, %v3023
        %3101 = vadd.xlane.f32.xlu0 %v3100
        %v3102 = vpop.xlane.xlu0 %3101
        %v3103 = vadd.f32 %v3027, %v3029
        %3104 = vadd.xlane.f32.xlu0 %v3103
        %v3105 = vpop.xlane.xlu0 %3104
        %v3106 = vmul.f32 %v2883, %v2883
        %v3107 = vmul.f32 %v2885, %v2885
        %v3108 = vmul.f32 %v2889, %v2889
        %v3109 = vmul.f32 %v2891, %v2891
        %v3110 = vmul.f32 %v2895, %v2895
        %v3111 = vmul.f32 %v2897, %v2897
        %v3112 = vmul.f32 %v2901, %v2901
        %v3113 = vmul.f32 %v2903, %v2903
        %v3114 = vmul.f32 %v2907, %v2907
        %v3115 = vmul.f32 %v2909, %v2909
        %v3116 = vmul.f32 %v2913, %v2913
        %v3117 = vmul.f32 %v2915, %v2915
        %v3118 = vmul.f32 %v2919, %v2919
        %v3119 = vmul.f32 %v2921, %v2921
        %v3120 = vmul.f32 %v2925, %v2925
        %v3121 = vmul.f32 %v2927, %v2927
        %v3122 = vmul.f32 %v2931, %v2931
        %v3123 = vmul.f32 %v2933, %v2933
        %v3124 = vmul.f32 %v2937, %v2937
        %v3125 = vmul.f32 %v2939, %v2939
        %v3126 = vmul.f32 %v2943, %v2943
        %v3127 = vmul.f32 %v2945, %v2945
        %v3128 = vmul.f32 %v2949, %v2949
        %v3129 = vmul.f32 %v2951, %v2951
        %v3130 = vmul.f32 %v2955, %v2955
        %v3131 = vmul.f32 %v2957, %v2957
        %v3132 = vmul.f32 %v2961, %v2961
        %v3133 = vmul.f32 %v2963, %v2963
        %v3134 = vmul.f32 %v2967, %v2967
        %v3135 = vmul.f32 %v2969, %v2969
        %v3136 = vmul.f32 %v2973, %v2973
        %v3137 = vmul.f32 %v2975, %v2975
        %v3138 = vmul.f32 %v2979, %v2979
        %v3139 = vmul.f32 %v2981, %v2981
        %v3140 = vmul.f32 %v2985, %v2985
        %v3141 = vmul.f32 %v2987, %v2987
        %v3142 = vmul.f32 %v2991, %v2991
        %v3143 = vmul.f32 %v2993, %v2993
        %v3144 = vmul.f32 %v2997, %v2997
        %v3145 = vmul.f32 %v2999, %v2999
        %v3146 = vmul.f32 %v3003, %v3003
        %v3147 = vmul.f32 %v3005, %v3005
        %v3148 = vmul.f32 %v3009, %v3009
        %v3149 = vmul.f32 %v3011, %v3011
        %v3150 = vmul.f32 %v3015, %v3015
        %v3151 = vmul.f32 %v3017, %v3017
        %v3152 = vmul.f32 %v3021, %v3021
        %v3153 = vmul.f32 %v3023, %v3023
        %v3154 = vmul.f32 %v3027, %v3027
        %v3155 = vmul.f32 %v3029, %v3029
        %v3156 = vadd.f32 %v3106, %v3107
        %3157 = vadd.xlane.f32.xlu0 %v3156
        %v3158 = vpop.xlane.xlu0 %3157
        %v3159 = vadd.f32 %v3108, %v3109
        %3160 = vadd.xlane.f32.xlu0 %v3159
        %v3161 = vpop.xlane.xlu0 %3160
        %v3162 = vadd.f32 %v3110, %v3111
        %3163 = vadd.xlane.f32.xlu0 %v3162
        %v3164 = vpop.xlane.xlu0 %3163
        %v3165 = vadd.f32 %v3112, %v3113
        %3166 = vadd.xlane.f32.xlu0 %v3165
        %v3167 = vpop.xlane.xlu0 %3166
        %v3168 = vadd.f32 %v3114, %v3115
        %3169 = vadd.xlane.f32.xlu0 %v3168
        %v3170 = vpop.xlane.xlu0 %3169
        %v3171 = vadd.f32 %v3116, %v3117
        %3172 = vadd.xlane.f32.xlu0 %v3171
        %v3173 = vpop.xlane.xlu0 %3172
        %v3174 = vadd.f32 %v3118, %v3119
        %3175 = vadd.xlane.f32.xlu0 %v3174
        %v3176 = vpop.xlane.xlu0 %3175
        %v3177 = vadd.f32 %v3120, %v3121
        %3178 = vadd.xlane.f32.xlu0 %v3177
        %v3179 = vpop.xlane.xlu0 %3178
        %v3180 = vadd.f32 %v3122, %v3123
        %3181 = vadd.xlane.f32.xlu0 %v3180
        %v3182 = vpop.xlane.xlu0 %3181
        %v3183 = vadd.f32 %v3124, %v3125
        %3184 = vadd.xlane.f32.xlu0 %v3183
        %v3185 = vpop.xlane.xlu0 %3184
        %v3186 = vadd.f32 %v3126, %v3127
        %3187 = vadd.xlane.f32.xlu0 %v3186
        %v3188 = vpop.xlane.xlu0 %3187
        %v3189 = vadd.f32 %v3128, %v3129
        %3190 = vadd.xlane.f32.xlu0 %v3189
        %v3191 = vpop.xlane.xlu0 %3190
        %v3192 = vadd.f32 %v3130, %v3131
        %3193 = vadd.xlane.f32.xlu0 %v3192
        %v3194 = vpop.xlane.xlu0 %3193
        %v3195 = vadd.f32 %v3132, %v3133
        %3196 = vadd.xlane.f32.xlu0 %v3195
        %v3197 = vpop.xlane.xlu0 %3196
        %v3198 = vadd.f32 %v3134, %v3135
        %3199 = vadd.xlane.f32.xlu0 %v3198
        %v3200 = vpop.xlane.xlu0 %3199
        %v3201 = vadd.f32 %v3136, %v3137
        %3202 = vadd.xlane.f32.xlu0 %v3201
        %v3203 = vpop.xlane.xlu0 %3202
        %v3204 = vadd.f32 %v3138, %v3139
        %3205 = vadd.xlane.f32.xlu0 %v3204
        %v3206 = vpop.xlane.xlu0 %3205
        %v3207 = vadd.f32 %v3140, %v3141
        %3208 = vadd.xlane.f32.xlu0 %v3207
        %v3209 = vpop.xlane.xlu0 %3208
        %v3210 = vadd.f32 %v3142, %v3143
        %3211 = vadd.xlane.f32.xlu0 %v3210
        %v3212 = vpop.xlane.xlu0 %3211
        %v3213 = vadd.f32 %v3144, %v3145
        %3214 = vadd.xlane.f32.xlu0 %v3213
        %v3215 = vpop.xlane.xlu0 %3214
        %v3216 = vadd.f32 %v3146, %v3147
        %3217 = vadd.xlane.f32.xlu0 %v3216
        %v3218 = vpop.xlane.xlu0 %3217
        %v3219 = vadd.f32 %v3148, %v3149
        %3220 = vadd.xlane.f32.xlu0 %v3219
        %v3221 = vpop.xlane.xlu0 %3220
        %v3222 = vadd.f32 %v3150, %v3151
        %3223 = vadd.xlane.f32.xlu0 %v3222
        %v3224 = vpop.xlane.xlu0 %3223
        %v3225 = vadd.f32 %v3152, %v3153
        %3226 = vadd.xlane.f32.xlu0 %v3225
        %v3227 = vpop.xlane.xlu0 %3226
        %v3228 = vadd.f32 %v3154, %v3155
        %3229 = vadd.xlane.f32.xlu0 %v3228
        %v3230 = vpop.xlane.xlu0 %3229
        %v3231 = vmul.f32 %v3033, 0.00390625
        %v3232 = vmul.f32 %v3036, 0.00390625
        %v3233 = vmul.f32 %v3039, 0.00390625
        %v3234 = vmul.f32 %v3042, 0.00390625
        %v3235 = vmul.f32 %v3045, 0.00390625
        %v3236 = vmul.f32 %v3048, 0.00390625
        %v3237 = vmul.f32 %v3051, 0.00390625
        %v3238 = vmul.f32 %v3054, 0.00390625
        %v3239 = vmul.f32 %v3057, 0.00390625
        %v3240 = vmul.f32 %v3060, 0.00390625
        %v3241 = vmul.f32 %v3063, 0.00390625
        %v3242 = vmul.f32 %v3066, 0.00390625
        %v3243 = vmul.f32 %v3069, 0.00390625
        %v3244 = vmul.f32 %v3072, 0.00390625
        %v3245 = vmul.f32 %v3075, 0.00390625
        %v3246 = vmul.f32 %v3078, 0.00390625
        %v3247 = vmul.f32 %v3081, 0.00390625
        %v3248 = vmul.f32 %v3084, 0.00390625
        %v3249 = vmul.f32 %v3087, 0.00390625
        %v3250 = vmul.f32 %v3090, 0.00390625
        %v3251 = vmul.f32 %v3093, 0.00390625
        %v3252 = vmul.f32 %v3096, 0.00390625
        %v3253 = vmul.f32 %v3099, 0.00390625
        %v3254 = vmul.f32 %v3102, 0.00390625
        %v3255 = vmul.f32 %v3105, 0.00390625
        %v3256 = vmul.f32 %v3158, 0.00390625
        %v3257 = vmul.f32 %v3161, 0.00390625
        %v3258 = vmul.f32 %v3164, 0.00390625
        %v3259 = vmul.f32 %v3167, 0.00390625
        %v3260 = vmul.f32 %v3170, 0.00390625
        %v3261 = vmul.f32 %v3173, 0.00390625
        %v3262 = vmul.f32 %v3176, 0.00390625
        %v3263 = vmul.f32 %v3179, 0.00390625
        %v3264 = vmul.f32 %v3182, 0.00390625
        %v3265 = vmul.f32 %v3185, 0.00390625
        %v3266 = vmul.f32 %v3188, 0.00390625
        %v3267 = vmul.f32 %v3191, 0.00390625
        %v3268 = vmul.f32 %v3194, 0.00390625
        %v3269 = vmul.f32 %v3197, 0.00390625
        %v3270 = vmul.f32 %v3200, 0.00390625
        %v3271 = vmul.f32 %v3203, 0.00390625
        %v3272 = vmul.f32 %v3206, 0.00390625
        %v3273 = vmul.f32 %v3209, 0.00390625
        %v3274 = vmul.f32 %v3212, 0.00390625
        %v3275 = vmul.f32 %v3215, 0.00390625
        %v3276 = vmul.f32 %v3218, 0.00390625
        %v3277 = vmul.f32 %v3221, 0.00390625
        %v3278 = vmul.f32 %v3224, 0.00390625
        %v3279 = vmul.f32 %v3227, 0.00390625
        %v3280 = vmul.f32 %v3230, 0.00390625
        %v3281 = vmul.f32 %v3231, %v3231
        %v3282 = vmul.f32 %v3232, %v3232
        %v3283 = vmul.f32 %v3233, %v3233
        %v3284 = vmul.f32 %v3234, %v3234
        %v3285 = vmul.f32 %v3235, %v3235
        %v3286 = vmul.f32 %v3236, %v3236
        %v3287 = vmul.f32 %v3237, %v3237
        %v3288 = vmul.f32 %v3238, %v3238
        %v3289 = vmul.f32 %v3239, %v3239
        %v3290 = vmul.f32 %v3240, %v3240
        %v3291 = vmul.f32 %v3241, %v3241
        %v3292 = vmul.f32 %v3242, %v3242
        %v3293 = vmul.f32 %v3243, %v3243
        %v3294 = vmul.f32 %v3244, %v3244
        %v3295 = vmul.f32 %v3245, %v3245
        %v3296 = vmul.f32 %v3246, %v3246
        %v3297 = vmul.f32 %v3247, %v3247
        %v3298 = vmul.f32 %v3248, %v3248
        %v3299 = vmul.f32 %v3249, %v3249
        %v3300 = vmul.f32 %v3250, %v3250
        %v3301 = vmul.f32 %v3251, %v3251
        %v3302 = vmul.f32 %v3252, %v3252
        %v3303 = vmul.f32 %v3253, %v3253
        %v3304 = vmul.f32 %v3254, %v3254
        %v3305 = vmul.f32 %v3255, %v3255
        %v3306 = vsub.f32 %v3256, %v3281
        %v3307 = vsub.f32 %v3257, %v3282
        %v3308 = vsub.f32 %v3258, %v3283
        %v3309 = vsub.f32 %v3259, %v3284
        %v3310 = vsub.f32 %v3260, %v3285
        %v3311 = vsub.f32 %v3261, %v3286
        %v3312 = vsub.f32 %v3262, %v3287
        %v3313 = vsub.f32 %v3263, %v3288
        %v3314 = vsub.f32 %v3264, %v3289
        %v3315 = vsub.f32 %v3265, %v3290
        %v3316 = vsub.f32 %v3266, %v3291
        %v3317 = vsub.f32 %v3267, %v3292
        %v3318 = vsub.f32 %v3268, %v3293
        %v3319 = vsub.f32 %v3269, %v3294
        %v3320 = vsub.f32 %v3270, %v3295
        %v3321 = vsub.f32 %v3271, %v3296
        %v3322 = vsub.f32 %v3272, %v3297
        %v3323 = vsub.f32 %v3273, %v3298
        %v3324 = vsub.f32 %v3274, %v3299
        %v3325 = vsub.f32 %v3275, %v3300
        %v3326 = vsub.f32 %v3276, %v3301
        %v3327 = vsub.f32 %v3277, %v3302
        %v3328 = vsub.f32 %v3278, %v3303
        %v3329 = vsub.f32 %v3279, %v3304
        %v3330 = vsub.f32 %v3280, %v3305
        %v3331 = vmax.f32 %v3306, 0.0
        %v3332 = vmax.f32 %v3307, 0.0
        %v3333 = vmax.f32 %v3308, 0.0
        %v3334 = vmax.f32 %v3309, 0.0
        %v3335 = vmax.f32 %v3310, 0.0
        %v3336 = vmax.f32 %v3311, 0.0
        %v3337 = vmax.f32 %v3312, 0.0
        %v3338 = vmax.f32 %v3313, 0.0
        %v3339 = vmax.f32 %v3314, 0.0
        %v3340 = vmax.f32 %v3315, 0.0
        %v3341 = vmax.f32 %v3316, 0.0
        %v3342 = vmax.f32 %v3317, 0.0
        %v3343 = vmax.f32 %v3318, 0.0
        %v3344 = vmax.f32 %v3319, 0.0
        %v3345 = vmax.f32 %v3320, 0.0
        %v3346 = vmax.f32 %v3321, 0.0
        %v3347 = vmax.f32 %v3322, 0.0
        %v3348 = vmax.f32 %v3323, 0.0
        %v3349 = vmax.f32 %v3324, 0.0
        %v3350 = vmax.f32 %v3325, 0.0
        %v3351 = vmax.f32 %v3326, 0.0
        %v3352 = vmax.f32 %v3327, 0.0
        %v3353 = vmax.f32 %v3328, 0.0
        %v3354 = vmax.f32 %v3329, 0.0
        %v3355 = vmax.f32 %v3330, 0.0
        %v3356 = vadd.f32 %v3331, 1e-05
        %v3357 = vadd.f32 %v3332, 1e-05
        %v3358 = vadd.f32 %v3333, 1e-05
        %v3359 = vadd.f32 %v3334, 1e-05
        %v3360 = vadd.f32 %v3335, 1e-05
        %v3361 = vadd.f32 %v3336, 1e-05
        %v3362 = vadd.f32 %v3337, 1e-05
        %v3363 = vadd.f32 %v3338, 1e-05
        %v3364 = vadd.f32 %v3339, 1e-05
        %v3365 = vadd.f32 %v3340, 1e-05
        %v3366 = vadd.f32 %v3341, 1e-05
        %v3367 = vadd.f32 %v3342, 1e-05
        %v3368 = vadd.f32 %v3343, 1e-05
        %v3369 = vadd.f32 %v3344, 1e-05
        %v3370 = vadd.f32 %v3345, 1e-05
        %v3371 = vadd.f32 %v3346, 1e-05
        %v3372 = vadd.f32 %v3347, 1e-05
        %v3373 = vadd.f32 %v3348, 1e-05
        %v3374 = vadd.f32 %v3349, 1e-05
        %v3375 = vadd.f32 %v3350, 1e-05
        %v3376 = vadd.f32 %v3351, 1e-05
        %v3377 = vadd.f32 %v3352, 1e-05
        %v3378 = vadd.f32 %v3353, 1e-05
        %v3379 = vadd.f32 %v3354, 1e-05
        %v3380 = vadd.f32 %v3355, 1e-05
        %v3381 = vrsqrt.pop %v3356
        %v3382 = vrsqrt.pop %v3357
        %v3383 = vrsqrt.pop %v3358
        %v3384 = vrsqrt.pop %v3359
        %v3385 = vrsqrt.pop %v3360
        %v3386 = vrsqrt.pop %v3361
        %v3387 = vrsqrt.pop %v3362
        %v3388 = vrsqrt.pop %v3363
        %v3389 = vrsqrt.pop %v3364
        %v3390 = vrsqrt.pop %v3365
        %v3391 = vrsqrt.pop %v3366
        %v3392 = vrsqrt.pop %v3367
        %v3393 = vrsqrt.pop %v3368
        %v3394 = vrsqrt.pop %v3369
        %v3395 = vrsqrt.pop %v3370
        %v3396 = vrsqrt.pop %v3371
        %v3397 = vrsqrt.pop %v3372
        %v3398 = vrsqrt.pop %v3373
        %v3399 = vrsqrt.pop %v3374
        %v3400 = vrsqrt.pop %v3375
        %v3401 = vrsqrt.pop %v3376
        %v3402 = vrsqrt.pop %v3377
        %v3403 = vrsqrt.pop %v3378
        %v3404 = vrsqrt.pop %v3379
        %v3405 = vrsqrt.pop %v3380
        %v3406 = vsub.f32 %v2883, %v3231
        %v3407 = vsub.f32 %v2885, %v3231
        %v3408 = vsub.f32 %v2889, %v3232
        %v3409 = vsub.f32 %v2891, %v3232
        %v3410 = vsub.f32 %v2895, %v3233
        %v3411 = vsub.f32 %v2897, %v3233
        %v3412 = vsub.f32 %v2901, %v3234
        %v3413 = vsub.f32 %v2903, %v3234
        %v3414 = vsub.f32 %v2907, %v3235
        %v3415 = vsub.f32 %v2909, %v3235
        %v3416 = vsub.f32 %v2913, %v3236
        %v3417 = vsub.f32 %v2915, %v3236
        %v3418 = vsub.f32 %v2919, %v3237
        %v3419 = vsub.f32 %v2921, %v3237
        %v3420 = vsub.f32 %v2925, %v3238
        %v3421 = vsub.f32 %v2927, %v3238
        %v3422 = vsub.f32 %v2931, %v3239
        %v3423 = vsub.f32 %v2933, %v3239
        %v3424 = vsub.f32 %v2937, %v3240
        %v3425 = vsub.f32 %v2939, %v3240
        %v3426 = vsub.f32 %v2943, %v3241
        %v3427 = vsub.f32 %v2945, %v3241
        %v3428 = vsub.f32 %v2949, %v3242
        %v3429 = vsub.f32 %v2951, %v3242
        %v3430 = vsub.f32 %v2955, %v3243
        %v3431 = vsub.f32 %v2957, %v3243
        %v3432 = vsub.f32 %v2961, %v3244
        %v3433 = vsub.f32 %v2963, %v3244
        %v3434 = vsub.f32 %v2967, %v3245
        %v3435 = vsub.f32 %v2969, %v3245
        %v3436 = vsub.f32 %v2973, %v3246
        %v3437 = vsub.f32 %v2975, %v3246
        %v3438 = vsub.f32 %v2979, %v3247
        %v3439 = vsub.f32 %v2981, %v3247
        %v3440 = vsub.f32 %v2985, %v3248
        %v3441 = vsub.f32 %v2987, %v3248
        %v3442 = vsub.f32 %v2991, %v3249
        %v3443 = vsub.f32 %v2993, %v3249
        %v3444 = vsub.f32 %v2997, %v3250
        %v3445 = vsub.f32 %v2999, %v3250
        %v3446 = vsub.f32 %v3003, %v3251
        %v3447 = vsub.f32 %v3005, %v3251
        %v3448 = vsub.f32 %v3009, %v3252
        %v3449 = vsub.f32 %v3011, %v3252
        %v3450 = vsub.f32 %v3015, %v3253
        %v3451 = vsub.f32 %v3017, %v3253
        %v3452 = vsub.f32 %v3021, %v3254
        %v3453 = vsub.f32 %v3023, %v3254
        %v3454 = vsub.f32 %v3027, %v3255
        %v3455 = vsub.f32 %v3029, %v3255
        %v3456 = vmul.f32 %v3406, %v3381
        %v3457 = vmul.f32 %v3407, %v3381
        %v3458 = vmul.f32 %v3408, %v3382
        %v3459 = vmul.f32 %v3409, %v3382
        %v3460 = vmul.f32 %v3410, %v3383
        %v3461 = vmul.f32 %v3411, %v3383
        %v3462 = vmul.f32 %v3412, %v3384
        %v3463 = vmul.f32 %v3413, %v3384
        %v3464 = vmul.f32 %v3414, %v3385
        %v3465 = vmul.f32 %v3415, %v3385
        %v3466 = vmul.f32 %v3416, %v3386
        %v3467 = vmul.f32 %v3417, %v3386
        %v3468 = vmul.f32 %v3418, %v3387
        %v3469 = vmul.f32 %v3419, %v3387
        %v3470 = vmul.f32 %v3420, %v3388
        %v3471 = vmul.f32 %v3421, %v3388
        %v3472 = vmul.f32 %v3422, %v3389
        %v3473 = vmul.f32 %v3423, %v3389
        %v3474 = vmul.f32 %v3424, %v3390
        %v3475 = vmul.f32 %v3425, %v3390
        %v3476 = vmul.f32 %v3426, %v3391
        %v3477 = vmul.f32 %v3427, %v3391
        %v3478 = vmul.f32 %v3428, %v3392
        %v3479 = vmul.f32 %v3429, %v3392
        %v3480 = vmul.f32 %v3430, %v3393
        %v3481 = vmul.f32 %v3431, %v3393
        %v3482 = vmul.f32 %v3432, %v3394
        %v3483 = vmul.f32 %v3433, %v3394
        %v3484 = vmul.f32 %v3434, %v3395
        %v3485 = vmul.f32 %v3435, %v3395
        %v3486 = vmul.f32 %v3436, %v3396
        %v3487 = vmul.f32 %v3437, %v3396
        %v3488 = vmul.f32 %v3438, %v3397
        %v3489 = vmul.f32 %v3439, %v3397
        %v3490 = vmul.f32 %v3440, %v3398
        %v3491 = vmul.f32 %v3441, %v3398
        %v3492 = vmul.f32 %v3442, %v3399
        %v3493 = vmul.f32 %v3443, %v3399
        %v3494 = vmul.f32 %v3444, %v3400
        %v3495 = vmul.f32 %v3445, %v3400
        %v3496 = vmul.f32 %v3446, %v3401
        %v3497 = vmul.f32 %v3447, %v3401
        %v3498 = vmul.f32 %v3448, %v3402
        %v3499 = vmul.f32 %v3449, %v3402
        %v3500 = vmul.f32 %v3450, %v3403
        %v3501 = vmul.f32 %v3451, %v3403
        %v3502 = vmul.f32 %v3452, %v3404
        %v3503 = vmul.f32 %v3453, %v3404
        %v3504 = vmul.f32 %v3454, %v3405
        %v3505 = vmul.f32 %v3455, %v3405
        %v3506 = vmul.f32 %v3456, 0.5
        %v3507 = vmul.f32 %v3457, 0.5
        %v3508 = vmul.f32 %v3458, 0.5
        %v3509 = vmul.f32 %v3459, 0.5
        %v3510 = vmul.f32 %v3460, 0.5
        %v3511 = vmul.f32 %v3461, 0.5
        %v3512 = vmul.f32 %v3462, 0.5
        %v3513 = vmul.f32 %v3463, 0.5
        %v3514 = vmul.f32 %v3464, 0.5
        %v3515 = vmul.f32 %v3465, 0.5
        %v3516 = vmul.f32 %v3466, 0.5
        %v3517 = vmul.f32 %v3467, 0.5
        %v3518 = vmul.f32 %v3468, 0.5
        %v3519 = vmul.f32 %v3469, 0.5
        %v3520 = vmul.f32 %v3470, 0.5
        %v3521 = vmul.f32 %v3471, 0.5
        %v3522 = vmul.f32 %v3472, 0.5
        %v3523 = vmul.f32 %v3473, 0.5
        %v3524 = vmul.f32 %v3474, 0.5
        %v3525 = vmul.f32 %v3475, 0.5
        %v3526 = vmul.f32 %v3476, 0.5
        %v3527 = vmul.f32 %v3477, 0.5
        %v3528 = vmul.f32 %v3478, 0.5
        %v3529 = vmul.f32 %v3479, 0.5
        %v3530 = vmul.f32 %v3480, 0.5
        %v3531 = vmul.f32 %v3481, 0.5
        %v3532 = vmul.f32 %v3482, 0.5
        %v3533 = vmul.f32 %v3483, 0.5
        %v3534 = vmul.f32 %v3484, 0.5
        %v3535 = vmul.f32 %v3485, 0.5
        %v3536 = vmul.f32 %v3486, 0.5
        %v3537 = vmul.f32 %v3487, 0.5
        %v3538 = vmul.f32 %v3488, 0.5
        %v3539 = vmul.f32 %v3489, 0.5
        %v3540 = vmul.f32 %v3490, 0.5
        %v3541 = vmul.f32 %v3491, 0.5
        %v3542 = vmul.f32 %v3492, 0.5
        %v3543 = vmul.f32 %v3493, 0.5
        %v3544 = vmul.f32 %v3494, 0.5
        %v3545 = vmul.f32 %v3495, 0.5
        %v3546 = vmul.f32 %v3496, 0.5
        %v3547 = vmul.f32 %v3497, 0.5
        %v3548 = vmul.f32 %v3498, 0.5
        %v3549 = vmul.f32 %v3499, 0.5
        %v3550 = vmul.f32 %v3500, 0.5
        %v3551 = vmul.f32 %v3501, 0.5
        %v3552 = vmul.f32 %v3502, 0.5
        %v3553 = vmul.f32 %v3503, 0.5
        %v3554 = vmul.f32 %v3504, 0.5
        %v3555 = vmul.f32 %v3505, 0.5
        %v3556 = vmul.f32 %v3456, 0.70710677
        %v3557 = vmul.f32 %v3457, 0.70710677
        %v3558 = vmul.f32 %v3458, 0.70710677
        %v3559 = vmul.f32 %v3459, 0.70710677
        %v3560 = vmul.f32 %v3460, 0.70710677
        %v3561 = vmul.f32 %v3461, 0.70710677
        %v3562 = vmul.f32 %v3462, 0.70710677
        %v3563 = vmul.f32 %v3463, 0.70710677
        %v3564 = vmul.f32 %v3464, 0.70710677
        %v3565 = vmul.f32 %v3465, 0.70710677
        %v3566 = vmul.f32 %v3466, 0.70710677
        %v3567 = vmul.f32 %v3467, 0.70710677
        %v3568 = vmul.f32 %v3468, 0.70710677
        %v3569 = vmul.f32 %v3469, 0.70710677
        %v3570 = vmul.f32 %v3470, 0.70710677
        %v3571 = vmul.f32 %v3471, 0.70710677
        %v3572 = vmul.f32 %v3472, 0.70710677
        %v3573 = vmul.f32 %v3473, 0.70710677
        %v3574 = vmul.f32 %v3474, 0.70710677
        %v3575 = vmul.f32 %v3475, 0.70710677
        %v3576 = vmul.f32 %v3476, 0.70710677
        %v3577 = vmul.f32 %v3477, 0.70710677
        %v3578 = vmul.f32 %v3478, 0.70710677
        %v3579 = vmul.f32 %v3479, 0.70710677
        %v3580 = vmul.f32 %v3480, 0.70710677
        %v3581 = vmul.f32 %v3481, 0.70710677
        %v3582 = vmul.f32 %v3482, 0.70710677
        %v3583 = vmul.f32 %v3483, 0.70710677
        %v3584 = vmul.f32 %v3484, 0.70710677
        %v3585 = vmul.f32 %v3485, 0.70710677
        %v3586 = vmul.f32 %v3486, 0.70710677
        %v3587 = vmul.f32 %v3487, 0.70710677
        %v3588 = vmul.f32 %v3488, 0.70710677
        %v3589 = vmul.f32 %v3489, 0.70710677
        %v3590 = vmul.f32 %v3490, 0.70710677
        %v3591 = vmul.f32 %v3491, 0.70710677
        %v3592 = vmul.f32 %v3492, 0.70710677
        %v3593 = vmul.f32 %v3493, 0.70710677
        %v3594 = vmul.f32 %v3494, 0.70710677
        %v3595 = vmul.f32 %v3495, 0.70710677
        %v3596 = vmul.f32 %v3496, 0.70710677
        %v3597 = vmul.f32 %v3497, 0.70710677
        %v3598 = vmul.f32 %v3498, 0.70710677
        %v3599 = vmul.f32 %v3499, 0.70710677
        %v3600 = vmul.f32 %v3500, 0.70710677
        %v3601 = vmul.f32 %v3501, 0.70710677
        %v3602 = vmul.f32 %v3502, 0.70710677
        %v3603 = vmul.f32 %v3503, 0.70710677
        %v3604 = vmul.f32 %v3504, 0.70710677
        %v3605 = vmul.f32 %v3505, 0.70710677
        %v3606 = vand.u32 2147483647, %v3556
        %v3607 = vand.u32 2147483647, %v3557
        %v3608 = vand.u32 2147483647, %v3558
        %v3609 = vand.u32 2147483647, %v3559
        %v3610 = vand.u32 2147483647, %v3560
        %v3611 = vand.u32 2147483647, %v3561
        %v3612 = vand.u32 2147483647, %v3562
        %v3613 = vand.u32 2147483647, %v3563
        %v3614 = vand.u32 2147483647, %v3564
        %v3615 = vand.u32 2147483647, %v3565
        %v3616 = vand.u32 2147483647, %v3566
        %v3617 = vand.u32 2147483647, %v3567
        %v3618 = vand.u32 2147483647, %v3568
        %v3619 = vand.u32 2147483647, %v3569
        %v3620 = vand.u32 2147483647, %v3570
        %v3621 = vand.u32 2147483647, %v3571
        %v3622 = vand.u32 2147483647, %v3572
        %v3623 = vand.u32 2147483647, %v3573
        %v3624 = vand.u32 2147483647, %v3574
        %v3625 = vand.u32 2147483647, %v3575
        %v3626 = vand.u32 2147483647, %v3576
        %v3627 = vand.u32 2147483647, %v3577
        %v3628 = vand.u32 2147483647, %v3578
        %v3629 = vand.u32 2147483647, %v3579
        %v3630 = vand.u32 2147483647, %v3580
        %v3631 = vand.u32 2147483647, %v3581
        %v3632 = vand.u32 2147483647, %v3582
        %v3633 = vand.u32 2147483647, %v3583
        %v3634 = vand.u32 2147483647, %v3584
        %v3635 = vand.u32 2147483647, %v3585
        %v3636 = vand.u32 2147483647, %v3586
        %v3637 = vand.u32 2147483647, %v3587
        %v3638 = vand.u32 2147483647, %v3588
        %v3639 = vand.u32 2147483647, %v3589
        %v3640 = vand.u32 2147483647, %v3590
        %v3641 = vand.u32 2147483647, %v3591
        %v3642 = vand.u32 2147483647, %v3592
        %v3643 = vand.u32 2147483647, %v3593
        %v3644 = vand.u32 2147483647, %v3594
        %v3645 = vand.u32 2147483647, %v3595
        %v3646 = vand.u32 2147483647, %v3596
        %v3647 = vand.u32 2147483647, %v3597
        %v3648 = vand.u32 2147483647, %v3598
        %v3649 = vand.u32 2147483647, %v3599
        %v3650 = vand.u32 2147483647, %v3600
        %v3651 = vand.u32 2147483647, %v3601
        %v3652 = vand.u32 2147483647, %v3602
        %v3653 = vand.u32 2147483647, %v3603
        %v3654 = vand.u32 2147483647, %v3604
        %v3655 = vand.u32 2147483647, %v3605
        %v3656 = vmul.f32 %v3606, 0.3275911
        %v3657 = vmul.f32 %v3607, 0.3275911
        %v3658 = vmul.f32 %v3608, 0.3275911
        %v3659 = vmul.f32 %v3609, 0.3275911
        %v3660 = vmul.f32 %v3610, 0.3275911
        %v3661 = vmul.f32 %v3611, 0.3275911
        %v3662 = vmul.f32 %v3612, 0.3275911
        %v3663 = vmul.f32 %v3613, 0.3275911
        %v3664 = vmul.f32 %v3614, 0.3275911
        %v3665 = vmul.f32 %v3615, 0.3275911
        %v3666 = vmul.f32 %v3616, 0.3275911
        %v3667 = vmul.f32 %v3617, 0.3275911
        %v3668 = vmul.f32 %v3618, 0.3275911
        %v3669 = vmul.f32 %v3619, 0.3275911
        %v3670 = vmul.f32 %v3620, 0.3275911
        %v3671 = vmul.f32 %v3621, 0.3275911
        %v3672 = vmul.f32 %v3622, 0.3275911
        %v3673 = vmul.f32 %v3623, 0.3275911
        %v3674 = vmul.f32 %v3624, 0.3275911
        %v3675 = vmul.f32 %v3625, 0.3275911
        %v3676 = vmul.f32 %v3626, 0.3275911
        %v3677 = vmul.f32 %v3627, 0.3275911
        %v3678 = vmul.f32 %v3628, 0.3275911
        %v3679 = vmul.f32 %v3629, 0.3275911
        %v3680 = vmul.f32 %v3630, 0.3275911
        %v3681 = vmul.f32 %v3631, 0.3275911
        %v3682 = vmul.f32 %v3632, 0.3275911
        %v3683 = vmul.f32 %v3633, 0.3275911
        %v3684 = vmul.f32 %v3634, 0.3275911
        %v3685 = vmul.f32 %v3635, 0.3275911
        %v3686 = vmul.f32 %v3636, 0.3275911
        %v3687 = vmul.f32 %v3637, 0.3275911
        %v3688 = vmul.f32 %v3638, 0.3275911
        %v3689 = vmul.f32 %v3639, 0.3275911
        %v3690 = vmul.f32 %v3640, 0.3275911
        %v3691 = vmul.f32 %v3641, 0.3275911
        %v3692 = vmul.f32 %v3642, 0.3275911
        %v3693 = vmul.f32 %v3643, 0.3275911
        %v3694 = vmul.f32 %v3644, 0.3275911
        %v3695 = vmul.f32 %v3645, 0.3275911
        %v3696 = vmul.f32 %v3646, 0.3275911
        %v3697 = vmul.f32 %v3647, 0.3275911
        %v3698 = vmul.f32 %v3648, 0.3275911
        %v3699 = vmul.f32 %v3649, 0.3275911
        %v3700 = vmul.f32 %v3650, 0.3275911
        %v3701 = vmul.f32 %v3651, 0.3275911
        %v3702 = vmul.f32 %v3652, 0.3275911
        %v3703 = vmul.f32 %v3653, 0.3275911
        %v3704 = vmul.f32 %v3654, 0.3275911
        %v3705 = vmul.f32 %v3655, 0.3275911
        %v3706 = vadd.f32 %v3656, 1.0
        %v3707 = vadd.f32 %v3657, 1.0
        %v3708 = vadd.f32 %v3658, 1.0
        %v3709 = vadd.f32 %v3659, 1.0
        %v3710 = vadd.f32 %v3660, 1.0
        %v3711 = vadd.f32 %v3661, 1.0
        %v3712 = vadd.f32 %v3662, 1.0
        %v3713 = vadd.f32 %v3663, 1.0
        %v3714 = vadd.f32 %v3664, 1.0
        %v3715 = vadd.f32 %v3665, 1.0
        %v3716 = vadd.f32 %v3666, 1.0
        %v3717 = vadd.f32 %v3667, 1.0
        %v3718 = vadd.f32 %v3668, 1.0
        %v3719 = vadd.f32 %v3669, 1.0
        %v3720 = vadd.f32 %v3670, 1.0
        %v3721 = vadd.f32 %v3671, 1.0
        %v3722 = vadd.f32 %v3672, 1.0
        %v3723 = vadd.f32 %v3673, 1.0
        %v3724 = vadd.f32 %v3674, 1.0
        %v3725 = vadd.f32 %v3675, 1.0
        %v3726 = vadd.f32 %v3676, 1.0
        %v3727 = vadd.f32 %v3677, 1.0
        %v3728 = vadd.f32 %v3678, 1.0
        %v3729 = vadd.f32 %v3679, 1.0
        %v3730 = vadd.f32 %v3680, 1.0
        %v3731 = vadd.f32 %v3681, 1.0
        %v3732 = vadd.f32 %v3682, 1.0
        %v3733 = vadd.f32 %v3683, 1.0
        %v3734 = vadd.f32 %v3684, 1.0
        %v3735 = vadd.f32 %v3685, 1.0
        %v3736 = vadd.f32 %v3686, 1.0
        %v3737 = vadd.f32 %v3687, 1.0
        %v3738 = vadd.f32 %v3688, 1.0
        %v3739 = vadd.f32 %v3689, 1.0
        %v3740 = vadd.f32 %v3690, 1.0
        %v3741 = vadd.f32 %v3691, 1.0
        %v3742 = vadd.f32 %v3692, 1.0
        %v3743 = vadd.f32 %v3693, 1.0
        %v3744 = vadd.f32 %v3694, 1.0
        %v3745 = vadd.f32 %v3695, 1.0
        %v3746 = vadd.f32 %v3696, 1.0
        %v3747 = vadd.f32 %v3697, 1.0
        %v3748 = vadd.f32 %v3698, 1.0
        %v3749 = vadd.f32 %v3699, 1.0
        %v3750 = vadd.f32 %v3700, 1.0
        %v3751 = vadd.f32 %v3701, 1.0
        %v3752 = vadd.f32 %v3702, 1.0
        %v3753 = vadd.f32 %v3703, 1.0
        %v3754 = vadd.f32 %v3704, 1.0
        %v3755 = vadd.f32 %v3705, 1.0
        %v3756 = vrcp.pop %v3706
        %v3757 = vmul.f32 1.0, %v3756
        %v3758 = vrcp.pop %v3707
        %v3759 = vmul.f32 1.0, %v3758
        %v3760 = vrcp.pop %v3708
        %v3761 = vmul.f32 1.0, %v3760
        %v3762 = vrcp.pop %v3709
        %v3763 = vmul.f32 1.0, %v3762
        %v3764 = vrcp.pop %v3710
        %v3765 = vmul.f32 1.0, %v3764
        %v3766 = vrcp.pop %v3711
        %v3767 = vmul.f32 1.0, %v3766
        %v3768 = vrcp.pop %v3712
        %v3769 = vmul.f32 1.0, %v3768
        %v3770 = vrcp.pop %v3713
        %v3771 = vmul.f32 1.0, %v3770
        %v3772 = vrcp.pop %v3714
        %v3773 = vmul.f32 1.0, %v3772
        %v3774 = vrcp.pop %v3715
        %v3775 = vmul.f32 1.0, %v3774
        %v3776 = vrcp.pop %v3716
        %v3777 = vmul.f32 1.0, %v3776
        %v3778 = vrcp.pop %v3717
        %v3779 = vmul.f32 1.0, %v3778
        %v3780 = vrcp.pop %v3718
        %v3781 = vmul.f32 1.0, %v3780
        %v3782 = vrcp.pop %v3719
        %v3783 = vmul.f32 1.0, %v3782
        %v3784 = vrcp.pop %v3720
        %v3785 = vmul.f32 1.0, %v3784
        %v3786 = vrcp.pop %v3721
        %v3787 = vmul.f32 1.0, %v3786
        %v3788 = vrcp.pop %v3722
        %v3789 = vmul.f32 1.0, %v3788
        %v3790 = vrcp.pop %v3723
        %v3791 = vmul.f32 1.0, %v3790
        %v3792 = vrcp.pop %v3724
        %v3793 = vmul.f32 1.0, %v3792
        %v3794 = vrcp.pop %v3725
        %v3795 = vmul.f32 1.0, %v3794
        %v3796 = vrcp.pop %v3726
        %v3797 = vmul.f32 1.0, %v3796
        %v3798 = vrcp.pop %v3727
        %v3799 = vmul.f32 1.0, %v3798
        %v3800 = vrcp.pop %v3728
        %v3801 = vmul.f32 1.0, %v3800
        %v3802 = vrcp.pop %v3729
        %v3803 = vmul.f32 1.0, %v3802
        %v3804 = vrcp.pop %v3730
        %v3805 = vmul.f32 1.0, %v3804
        %v3806 = vrcp.pop %v3731
        %v3807 = vmul.f32 1.0, %v3806
        %v3808 = vrcp.pop %v3732
        %v3809 = vmul.f32 1.0, %v3808
        %v3810 = vrcp.pop %v3733
        %v3811 = vmul.f32 1.0, %v3810
        %v3812 = vrcp.pop %v3734
        %v3813 = vmul.f32 1.0, %v3812
        %v3814 = vrcp.pop %v3735
        %v3815 = vmul.f32 1.0, %v3814
        %v3816 = vrcp.pop %v3736
        %v3817 = vmul.f32 1.0, %v3816
        %v3818 = vrcp.pop %v3737
        %v3819 = vmul.f32 1.0, %v3818
        %v3820 = vrcp.pop %v3738
        %v3821 = vmul.f32 1.0, %v3820
        %v3822 = vrcp.pop %v3739
        %v3823 = vmul.f32 1.0, %v3822
        %v3824 = vrcp.pop %v3740
        %v3825 = vmul.f32 1.0, %v3824
        %v3826 = vrcp.pop %v3741
        %v3827 = vmul.f32 1.0, %v3826
        %v3828 = vrcp.pop %v3742
        %v3829 = vmul.f32 1.0, %v3828
        %v3830 = vrcp.pop %v3743
        %v3831 = vmul.f32 1.0, %v3830
        %v3832 = vrcp.pop %v3744
        %v3833 = vmul.f32 1.0, %v3832
        %v3834 = vrcp.pop %v3745
        %v3835 = vmul.f32 1.0, %v3834
        %v3836 = vrcp.pop %v3746
        %v3837 = vmul.f32 1.0, %v3836
        %v3838 = vrcp.pop %v3747
        %v3839 = vmul.f32 1.0, %v3838
        %v3840 = vrcp.pop %v3748
        %v3841 = vmul.f32 1.0, %v3840
        %v3842 = vrcp.pop %v3749
        %v3843 = vmul.f32 1.0, %v3842
        %v3844 = vrcp.pop %v3750
        %v3845 = vmul.f32 1.0, %v3844
        %v3846 = vrcp.pop %v3751
        %v3847 = vmul.f32 1.0, %v3846
        %v3848 = vrcp.pop %v3752
        %v3849 = vmul.f32 1.0, %v3848
        %v3850 = vrcp.pop %v3753
        %v3851 = vmul.f32 1.0, %v3850
        %v3852 = vrcp.pop %v3754
        %v3853 = vmul.f32 1.0, %v3852
        %v3854 = vrcp.pop %v3755
        %v3855 = vmul.f32 1.0, %v3854
        %v3856 = vmul.f32 %v3757, 1.0614054
        %v3857 = vmul.f32 %v3759, 1.0614054
        %v3858 = vmul.f32 %v3761, 1.0614054
        %v3859 = vmul.f32 %v3763, 1.0614054
        %v3860 = vmul.f32 %v3765, 1.0614054
        %v3861 = vmul.f32 %v3767, 1.0614054
        %v3862 = vmul.f32 %v3769, 1.0614054
        %v3863 = vmul.f32 %v3771, 1.0614054
        %v3864 = vmul.f32 %v3773, 1.0614054
        %v3865 = vmul.f32 %v3775, 1.0614054
        %v3866 = vmul.f32 %v3777, 1.0614054
        %v3867 = vmul.f32 %v3779, 1.0614054
        %v3868 = vmul.f32 %v3781, 1.0614054
        %v3869 = vmul.f32 %v3783, 1.0614054
        %v3870 = vmul.f32 %v3785, 1.0614054
        %v3871 = vmul.f32 %v3787, 1.0614054
        %v3872 = vmul.f32 %v3789, 1.0614054
        %v3873 = vmul.f32 %v3791, 1.0614054
        %v3874 = vmul.f32 %v3793, 1.0614054
        %v3875 = vmul.f32 %v3795, 1.0614054
        %v3876 = vmul.f32 %v3797, 1.0614054
        %v3877 = vmul.f32 %v3799, 1.0614054
        %v3878 = vmul.f32 %v3801, 1.0614054
        %v3879 = vmul.f32 %v3803, 1.0614054
        %v3880 = vmul.f32 %v3805, 1.0614054
        %v3881 = vmul.f32 %v3807, 1.0614054
        %v3882 = vmul.f32 %v3809, 1.0614054
        %v3883 = vmul.f32 %v3811, 1.0614054
        %v3884 = vmul.f32 %v3813, 1.0614054
        %v3885 = vmul.f32 %v3815, 1.0614054
        %v3886 = vmul.f32 %v3817, 1.0614054
        %v3887 = vmul.f32 %v3819, 1.0614054
        %v3888 = vmul.f32 %v3821, 1.0614054
        %v3889 = vmul.f32 %v3823, 1.0614054
        %v3890 = vmul.f32 %v3825, 1.0614054
        %v3891 = vmul.f32 %v3827, 1.0614054
        %v3892 = vmul.f32 %v3829, 1.0614054
        %v3893 = vmul.f32 %v3831, 1.0614054
        %v3894 = vmul.f32 %v3833, 1.0614054
        %v3895 = vmul.f32 %v3835, 1.0614054
        %v3896 = vmul.f32 %v3837, 1.0614054
        %v3897 = vmul.f32 %v3839, 1.0614054
        %v3898 = vmul.f32 %v3841, 1.0614054
        %v3899 = vmul.f32 %v3843, 1.0614054
        %v3900 = vmul.f32 %v3845, 1.0614054
        %v3901 = vmul.f32 %v3847, 1.0614054
        %v3902 = vmul.f32 %v3849, 1.0614054
        %v3903 = vmul.f32 %v3851, 1.0614054
        %v3904 = vmul.f32 %v3853, 1.0614054
        %v3905 = vmul.f32 %v3855, 1.0614054
        %v3906 = vadd.f32 %v3856, -1.4531521
        %v3907 = vadd.f32 %v3857, -1.4531521
        %v3908 = vadd.f32 %v3858, -1.4531521
        %v3909 = vadd.f32 %v3859, -1.4531521
        %v3910 = vadd.f32 %v3860, -1.4531521
        %v3911 = vadd.f32 %v3861, -1.4531521
        %v3912 = vadd.f32 %v3862, -1.4531521
        %v3913 = vadd.f32 %v3863, -1.4531521
        %v3914 = vadd.f32 %v3864, -1.4531521
        %v3915 = vadd.f32 %v3865, -1.4531521
        %v3916 = vadd.f32 %v3866, -1.4531521
        %v3917 = vadd.f32 %v3867, -1.4531521
        %v3918 = vadd.f32 %v3868, -1.4531521
        %v3919 = vadd.f32 %v3869, -1.4531521
        %v3920 = vadd.f32 %v3870, -1.4531521
        %v3921 = vadd.f32 %v3871, -1.4531521
        %v3922 = vadd.f32 %v3872, -1.4531521
        %v3923 = vadd.f32 %v3873, -1.4531521
        %v3924 = vadd.f32 %v3874, -1.4531521
        %v3925 = vadd.f32 %v3875, -1.4531521
        %v3926 = vadd.f32 %v3876, -1.4531521
        %v3927 = vadd.f32 %v3877, -1.4531521
        %v3928 = vadd.f32 %v3878, -1.4531521
        %v3929 = vadd.f32 %v3879, -1.4531521
        %v3930 = vadd.f32 %v3880, -1.4531521
        %v3931 = vadd.f32 %v3881, -1.4531521
        %v3932 = vadd.f32 %v3882, -1.4531521
        %v3933 = vadd.f32 %v3883, -1.4531521
        %v3934 = vadd.f32 %v3884, -1.4531521
        %v3935 = vadd.f32 %v3885, -1.4531521
        %v3936 = vadd.f32 %v3886, -1.4531521
        %v3937 = vadd.f32 %v3887, -1.4531521
        %v3938 = vadd.f32 %v3888, -1.4531521
        %v3939 = vadd.f32 %v3889, -1.4531521
        %v3940 = vadd.f32 %v3890, -1.4531521
        %v3941 = vadd.f32 %v3891, -1.4531521
        %v3942 = vadd.f32 %v3892, -1.4531521
        %v3943 = vadd.f32 %v3893, -1.4531521
        %v3944 = vadd.f32 %v3894, -1.4531521
        %v3945 = vadd.f32 %v3895, -1.4531521
        %v3946 = vadd.f32 %v3896, -1.4531521
        %v3947 = vadd.f32 %v3897, -1.4531521
        %v3948 = vadd.f32 %v3898, -1.4531521
        %v3949 = vadd.f32 %v3899, -1.4531521
        %v3950 = vadd.f32 %v3900, -1.4531521
        %v3951 = vadd.f32 %v3901, -1.4531521
        %v3952 = vadd.f32 %v3902, -1.4531521
        %v3953 = vadd.f32 %v3903, -1.4531521
        %v3954 = vadd.f32 %v3904, -1.4531521
        %v3955 = vadd.f32 %v3905, -1.4531521
        %v3956 = vmul.f32 %v3906, %v3757
        %v3957 = vmul.f32 %v3907, %v3759
        %v3958 = vmul.f32 %v3908, %v3761
        %v3959 = vmul.f32 %v3909, %v3763
        %v3960 = vmul.f32 %v3910, %v3765
        %v3961 = vmul.f32 %v3911, %v3767
        %v3962 = vmul.f32 %v3912, %v3769
        %v3963 = vmul.f32 %v3913, %v3771
        %v3964 = vmul.f32 %v3914, %v3773
        %v3965 = vmul.f32 %v3915, %v3775
        %v3966 = vmul.f32 %v3916, %v3777
        %v3967 = vmul.f32 %v3917, %v3779
        %v3968 = vmul.f32 %v3918, %v3781
        %v3969 = vmul.f32 %v3919, %v3783
        %v3970 = vmul.f32 %v3920, %v3785
        %v3971 = vmul.f32 %v3921, %v3787
        %v3972 = vmul.f32 %v3922, %v3789
        %v3973 = vmul.f32 %v3923, %v3791
        %v3974 = vmul.f32 %v3924, %v3793
        %v3975 = vmul.f32 %v3925, %v3795
        %v3976 = vmul.f32 %v3926, %v3797
        %v3977 = vmul.f32 %v3927, %v3799
        %v3978 = vmul.f32 %v3928, %v3801
        %v3979 = vmul.f32 %v3929, %v3803
        %v3980 = vmul.f32 %v3930, %v3805
        %v3981 = vmul.f32 %v3931, %v3807
        %v3982 = vmul.f32 %v3932, %v3809
        %v3983 = vmul.f32 %v3933, %v3811
        %v3984 = vmul.f32 %v3934, %v3813
        %v3985 = vmul.f32 %v3935, %v3815
        %v3986 = vmul.f32 %v3936, %v3817
        %v3987 = vmul.f32 %v3937, %v3819
        %v3988 = vmul.f32 %v3938, %v3821
        %v3989 = vmul.f32 %v3939, %v3823
        %v3990 = vmul.f32 %v3940, %v3825
        %v3991 = vmul.f32 %v3941, %v3827
        %v3992 = vmul.f32 %v3942, %v3829
        %v3993 = vmul.f32 %v3943, %v3831
        %v3994 = vmul.f32 %v3944, %v3833
        %v3995 = vmul.f32 %v3945, %v3835
        %v3996 = vmul.f32 %v3946, %v3837
        %v3997 = vmul.f32 %v3947, %v3839
        %v3998 = vmul.f32 %v3948, %v3841
        %v3999 = vmul.f32 %v3949, %v3843
        %v4000 = vmul.f32 %v3950, %v3845
        %v4001 = vmul.f32 %v3951, %v3847
        %v4002 = vmul.f32 %v3952, %v3849
        %v4003 = vmul.f32 %v3953, %v3851
        %v4004 = vmul.f32 %v3954, %v3853
        %v4005 = vmul.f32 %v3955, %v3855
        %v4006 = vadd.f32 %v3956, 1.4214138
        %v4007 = vadd.f32 %v3957, 1.4214138
        %v4008 = vadd.f32 %v3958, 1.4214138
        %v4009 = vadd.f32 %v3959, 1.4214138
        %v4010 = vadd.f32 %v3960, 1.4214138
        %v4011 = vadd.f32 %v3961, 1.4214138
        %v4012 = vadd.f32 %v3962, 1.4214138
        %v4013 = vadd.f32 %v3963, 1.4214138
        %v4014 = vadd.f32 %v3964, 1.4214138
        %v4015 = vadd.f32 %v3965, 1.4214138
        %v4016 = vadd.f32 %v3966, 1.4214138
        %v4017 = vadd.f32 %v3967, 1.4214138
        %v4018 = vadd.f32 %v3968, 1.4214138
        %v4019 = vadd.f32 %v3969, 1.4214138
        %v4020 = vadd.f32 %v3970, 1.4214138
        %v4021 = vadd.f32 %v3971, 1.4214138
        %v4022 = vadd.f32 %v3972, 1.4214138
        %v4023 = vadd.f32 %v3973, 1.4214138
        %v4024 = vadd.f32 %v3974, 1.4214138
        %v4025 = vadd.f32 %v3975, 1.4214138
        %v4026 = vadd.f32 %v3976, 1.4214138
        %v4027 = vadd.f32 %v3977, 1.4214138
        %v4028 = vadd.f32 %v3978, 1.4214138
        %v4029 = vadd.f32 %v3979, 1.4214138
        %v4030 = vadd.f32 %v3980, 1.4214138
        %v4031 = vadd.f32 %v3981, 1.4214138
        %v4032 = vadd.f32 %v3982, 1.4214138
        %v4033 = vadd.f32 %v3983, 1.4214138
        %v4034 = vadd.f32 %v3984, 1.4214138
        %v4035 = vadd.f32 %v3985, 1.4214138
        %v4036 = vadd.f32 %v3986, 1.4214138
        %v4037 = vadd.f32 %v3987, 1.4214138
        %v4038 = vadd.f32 %v3988, 1.4214138
        %v4039 = vadd.f32 %v3989, 1.4214138
        %v4040 = vadd.f32 %v3990, 1.4214138
        %v4041 = vadd.f32 %v3991, 1.4214138
        %v4042 = vadd.f32 %v3992, 1.4214138
        %v4043 = vadd.f32 %v3993, 1.4214138
        %v4044 = vadd.f32 %v3994, 1.4214138
        %v4045 = vadd.f32 %v3995, 1.4214138
        %v4046 = vadd.f32 %v3996, 1.4214138
        %v4047 = vadd.f32 %v3997, 1.4214138
        %v4048 = vadd.f32 %v3998, 1.4214138
        %v4049 = vadd.f32 %v3999, 1.4214138
        %v4050 = vadd.f32 %v4000, 1.4214138
        %v4051 = vadd.f32 %v4001, 1.4214138
        %v4052 = vadd.f32 %v4002, 1.4214138
        %v4053 = vadd.f32 %v4003, 1.4214138
        %v4054 = vadd.f32 %v4004, 1.4214138
        %v4055 = vadd.f32 %v4005, 1.4214138
        %v4056 = vmul.f32 %v4006, %v3757
        %v4057 = vmul.f32 %v4007, %v3759
        %v4058 = vmul.f32 %v4008, %v3761
        %v4059 = vmul.f32 %v4009, %v3763
        %v4060 = vmul.f32 %v4010, %v3765
        %v4061 = vmul.f32 %v4011, %v3767
        %v4062 = vmul.f32 %v4012, %v3769
        %v4063 = vmul.f32 %v4013, %v3771
        %v4064 = vmul.f32 %v4014, %v3773
        %v4065 = vmul.f32 %v4015, %v3775
        %v4066 = vmul.f32 %v4016, %v3777
        %v4067 = vmul.f32 %v4017, %v3779
        %v4068 = vmul.f32 %v4018, %v3781
        %v4069 = vmul.f32 %v4019, %v3783
        %v4070 = vmul.f32 %v4020, %v3785
        %v4071 = vmul.f32 %v4021, %v3787
        %v4072 = vmul.f32 %v4022, %v3789
        %v4073 = vmul.f32 %v4023, %v3791
        %v4074 = vmul.f32 %v4024, %v3793
        %v4075 = vmul.f32 %v4025, %v3795
        %v4076 = vmul.f32 %v4026, %v3797
        %v4077 = vmul.f32 %v4027, %v3799
        %v4078 = vmul.f32 %v4028, %v3801
        %v4079 = vmul.f32 %v4029, %v3803
        %v4080 = vmul.f32 %v4030, %v3805
        %v4081 = vmul.f32 %v4031, %v3807
        %v4082 = vmul.f32 %v4032, %v3809
        %v4083 = vmul.f32 %v4033, %v3811
        %v4084 = vmul.f32 %v4034, %v3813
        %v4085 = vmul.f32 %v4035, %v3815
        %v4086 = vmul.f32 %v4036, %v3817
        %v4087 = vmul.f32 %v4037, %v3819
        %v4088 = vmul.f32 %v4038, %v3821
        %v4089 = vmul.f32 %v4039, %v3823
        %v4090 = vmul.f32 %v4040, %v3825
        %v4091 = vmul.f32 %v4041, %v3827
        %v4092 = vmul.f32 %v4042, %v3829
        %v4093 = vmul.f32 %v4043, %v3831
        %v4094 = vmul.f32 %v4044, %v3833
        %v4095 = vmul.f32 %v4045, %v3835
        %v4096 = vmul.f32 %v4046, %v3837
        %v4097 = vmul.f32 %v4047, %v3839
        %v4098 = vmul.f32 %v4048, %v3841
        %v4099 = vmul.f32 %v4049, %v3843
        %v4100 = vmul.f32 %v4050, %v3845
        %v4101 = vmul.f32 %v4051, %v3847
        %v4102 = vmul.f32 %v4052, %v3849
        %v4103 = vmul.f32 %v4053, %v3851
        %v4104 = vmul.f32 %v4054, %v3853
        %v4105 = vmul.f32 %v4055, %v3855
        %v4106 = vadd.f32 %v4056, -0.28449672
        %v4107 = vadd.f32 %v4057, -0.28449672
        %v4108 = vadd.f32 %v4058, -0.28449672
        %v4109 = vadd.f32 %v4059, -0.28449672
        %v4110 = vadd.f32 %v4060, -0.28449672
        %v4111 = vadd.f32 %v4061, -0.28449672
        %v4112 = vadd.f32 %v4062, -0.28449672
        %v4113 = vadd.f32 %v4063, -0.28449672
        %v4114 = vadd.f32 %v4064, -0.28449672
        %v4115 = vadd.f32 %v4065, -0.28449672
        %v4116 = vadd.f32 %v4066, -0.28449672
        %v4117 = vadd.f32 %v4067, -0.28449672
        %v4118 = vadd.f32 %v4068, -0.28449672
        %v4119 = vadd.f32 %v4069, -0.28449672
        %v4120 = vadd.f32 %v4070, -0.28449672
        %v4121 = vadd.f32 %v4071, -0.28449672
        %v4122 = vadd.f32 %v4072, -0.28449672
        %v4123 = vadd.f32 %v4073, -0.28449672
        %v4124 = vadd.f32 %v4074, -0.28449672
        %v4125 = vadd.f32 %v4075, -0.28449672
        %v4126 = vadd.f32 %v4076, -0.28449672
        %v4127 = vadd.f32 %v4077, -0.28449672
        %v4128 = vadd.f32 %v4078, -0.28449672
        %v4129 = vadd.f32 %v4079, -0.28449672
        %v4130 = vadd.f32 %v4080, -0.28449672
        %v4131 = vadd.f32 %v4081, -0.28449672
        %v4132 = vadd.f32 %v4082, -0.28449672
        %v4133 = vadd.f32 %v4083, -0.28449672
        %v4134 = vadd.f32 %v4084, -0.28449672
        %v4135 = vadd.f32 %v4085, -0.28449672
        %v4136 = vadd.f32 %v4086, -0.28449672
        %v4137 = vadd.f32 %v4087, -0.28449672
        %v4138 = vadd.f32 %v4088, -0.28449672
        %v4139 = vadd.f32 %v4089, -0.28449672
        %v4140 = vadd.f32 %v4090, -0.28449672
        %v4141 = vadd.f32 %v4091, -0.28449672
        %v4142 = vadd.f32 %v4092, -0.28449672
        %v4143 = vadd.f32 %v4093, -0.28449672
        %v4144 = vadd.f32 %v4094, -0.28449672
        %v4145 = vadd.f32 %v4095, -0.28449672
        %v4146 = vadd.f32 %v4096, -0.28449672
        %v4147 = vadd.f32 %v4097, -0.28449672
        %v4148 = vadd.f32 %v4098, -0.28449672
        %v4149 = vadd.f32 %v4099, -0.28449672
        %v4150 = vadd.f32 %v4100, -0.28449672
        %v4151 = vadd.f32 %v4101, -0.28449672
        %v4152 = vadd.f32 %v4102, -0.28449672
        %v4153 = vadd.f32 %v4103, -0.28449672
        %v4154 = vadd.f32 %v4104, -0.28449672
        %v4155 = vadd.f32 %v4105, -0.28449672
        %v4156 = vmul.f32 %v4106, %v3757
        %v4157 = vmul.f32 %v4107, %v3759
        %v4158 = vmul.f32 %v4108, %v3761
        %v4159 = vmul.f32 %v4109, %v3763
        %v4160 = vmul.f32 %v4110, %v3765
        %v4161 = vmul.f32 %v4111, %v3767
        %v4162 = vmul.f32 %v4112, %v3769
        %v4163 = vmul.f32 %v4113, %v3771
        %v4164 = vmul.f32 %v4114, %v3773
        %v4165 = vmul.f32 %v4115, %v3775
        %v4166 = vmul.f32 %v4116, %v3777
        %v4167 = vmul.f32 %v4117, %v3779
        %v4168 = vmul.f32 %v4118, %v3781
        %v4169 = vmul.f32 %v4119, %v3783
        %v4170 = vmul.f32 %v4120, %v3785
        %v4171 = vmul.f32 %v4121, %v3787
        %v4172 = vmul.f32 %v4122, %v3789
        %v4173 = vmul.f32 %v4123, %v3791
        %v4174 = vmul.f32 %v4124, %v3793
        %v4175 = vmul.f32 %v4125, %v3795
        %v4176 = vmul.f32 %v4126, %v3797
        %v4177 = vmul.f32 %v4127, %v3799
        %v4178 = vmul.f32 %v4128, %v3801
        %v4179 = vmul.f32 %v4129, %v3803
        %v4180 = vmul.f32 %v4130, %v3805
        %v4181 = vmul.f32 %v4131, %v3807
        %v4182 = vmul.f32 %v4132, %v3809
        %v4183 = vmul.f32 %v4133, %v3811
        %v4184 = vmul.f32 %v4134, %v3813
        %v4185 = vmul.f32 %v4135, %v3815
        %v4186 = vmul.f32 %v4136, %v3817
        %v4187 = vmul.f32 %v4137, %v3819
        %v4188 = vmul.f32 %v4138, %v3821
        %v4189 = vmul.f32 %v4139, %v3823
        %v4190 = vmul.f32 %v4140, %v3825
        %v4191 = vmul.f32 %v4141, %v3827
        %v4192 = vmul.f32 %v4142, %v3829
        %v4193 = vmul.f32 %v4143, %v3831
        %v4194 = vmul.f32 %v4144, %v3833
        %v4195 = vmul.f32 %v4145, %v3835
        %v4196 = vmul.f32 %v4146, %v3837
        %v4197 = vmul.f32 %v4147, %v3839
        %v4198 = vmul.f32 %v4148, %v3841
        %v4199 = vmul.f32 %v4149, %v3843
        %v4200 = vmul.f32 %v4150, %v3845
        %v4201 = vmul.f32 %v4151, %v3847
        %v4202 = vmul.f32 %v4152, %v3849
        %v4203 = vmul.f32 %v4153, %v3851
        %v4204 = vmul.f32 %v4154, %v3853
        %v4205 = vmul.f32 %v4155, %v3855
        %v4206 = vadd.f32 %v4156, 0.2548296
        %v4207 = vadd.f32 %v4157, 0.2548296
        %v4208 = vadd.f32 %v4158, 0.2548296
        %v4209 = vadd.f32 %v4159, 0.2548296
        %v4210 = vadd.f32 %v4160, 0.2548296
        %v4211 = vadd.f32 %v4161, 0.2548296
        %v4212 = vadd.f32 %v4162, 0.2548296
        %v4213 = vadd.f32 %v4163, 0.2548296
        %v4214 = vadd.f32 %v4164, 0.2548296
        %v4215 = vadd.f32 %v4165, 0.2548296
        %v4216 = vadd.f32 %v4166, 0.2548296
        %v4217 = vadd.f32 %v4167, 0.2548296
        %v4218 = vadd.f32 %v4168, 0.2548296
        %v4219 = vadd.f32 %v4169, 0.2548296
        %v4220 = vadd.f32 %v4170, 0.2548296
        %v4221 = vadd.f32 %v4171, 0.2548296
        %v4222 = vadd.f32 %v4172, 0.2548296
        %v4223 = vadd.f32 %v4173, 0.2548296
        %v4224 = vadd.f32 %v4174, 0.2548296
        %v4225 = vadd.f32 %v4175, 0.2548296
        %v4226 = vadd.f32 %v4176, 0.2548296
        %v4227 = vadd.f32 %v4177, 0.2548296
        %v4228 = vadd.f32 %v4178, 0.2548296
        %v4229 = vadd.f32 %v4179, 0.2548296
        %v4230 = vadd.f32 %v4180, 0.2548296
        %v4231 = vadd.f32 %v4181, 0.2548296
        %v4232 = vadd.f32 %v4182, 0.2548296
        %v4233 = vadd.f32 %v4183, 0.2548296
        %v4234 = vadd.f32 %v4184, 0.2548296
        %v4235 = vadd.f32 %v4185, 0.2548296
        %v4236 = vadd.f32 %v4186, 0.2548296
        %v4237 = vadd.f32 %v4187, 0.2548296
        %v4238 = vadd.f32 %v4188, 0.2548296
        %v4239 = vadd.f32 %v4189, 0.2548296
        %v4240 = vadd.f32 %v4190, 0.2548296
        %v4241 = vadd.f32 %v4191, 0.2548296
        %v4242 = vadd.f32 %v4192, 0.2548296
        %v4243 = vadd.f32 %v4193, 0.2548296
        %v4244 = vadd.f32 %v4194, 0.2548296
        %v4245 = vadd.f32 %v4195, 0.2548296
        %v4246 = vadd.f32 %v4196, 0.2548296
        %v4247 = vadd.f32 %v4197, 0.2548296
        %v4248 = vadd.f32 %v4198, 0.2548296
        %v4249 = vadd.f32 %v4199, 0.2548296
        %v4250 = vadd.f32 %v4200, 0.2548296
        %v4251 = vadd.f32 %v4201, 0.2548296
        %v4252 = vadd.f32 %v4202, 0.2548296
        %v4253 = vadd.f32 %v4203, 0.2548296
        %v4254 = vadd.f32 %v4204, 0.2548296
        %v4255 = vadd.f32 %v4205, 0.2548296
        %v4256 = vmul.f32 %v4206, %v3757
        %v4257 = vmul.f32 %v4207, %v3759
        %v4258 = vmul.f32 %v4208, %v3761
        %v4259 = vmul.f32 %v4209, %v3763
        %v4260 = vmul.f32 %v4210, %v3765
        %v4261 = vmul.f32 %v4211, %v3767
        %v4262 = vmul.f32 %v4212, %v3769
        %v4263 = vmul.f32 %v4213, %v3771
        %v4264 = vmul.f32 %v4214, %v3773
        %v4265 = vmul.f32 %v4215, %v3775
        %v4266 = vmul.f32 %v4216, %v3777
        %v4267 = vmul.f32 %v4217, %v3779
        %v4268 = vmul.f32 %v4218, %v3781
        %v4269 = vmul.f32 %v4219, %v3783
        %v4270 = vmul.f32 %v4220, %v3785
        %v4271 = vmul.f32 %v4221, %v3787
        %v4272 = vmul.f32 %v4222, %v3789
        %v4273 = vmul.f32 %v4223, %v3791
        %v4274 = vmul.f32 %v4224, %v3793
        %v4275 = vmul.f32 %v4225, %v3795
        %v4276 = vmul.f32 %v4226, %v3797
        %v4277 = vmul.f32 %v4227, %v3799
        %v4278 = vmul.f32 %v4228, %v3801
        %v4279 = vmul.f32 %v4229, %v3803
        %v4280 = vmul.f32 %v4230, %v3805
        %v4281 = vmul.f32 %v4231, %v3807
        %v4282 = vmul.f32 %v4232, %v3809
        %v4283 = vmul.f32 %v4233, %v3811
        %v4284 = vmul.f32 %v4234, %v3813
        %v4285 = vmul.f32 %v4235, %v3815
        %v4286 = vmul.f32 %v4236, %v3817
        %v4287 = vmul.f32 %v4237, %v3819
        %v4288 = vmul.f32 %v4238, %v3821
        %v4289 = vmul.f32 %v4239, %v3823
        %v4290 = vmul.f32 %v4240, %v3825
        %v4291 = vmul.f32 %v4241, %v3827
        %v4292 = vmul.f32 %v4242, %v3829
        %v4293 = vmul.f32 %v4243, %v3831
        %v4294 = vmul.f32 %v4244, %v3833
        %v4295 = vmul.f32 %v4245, %v3835
        %v4296 = vmul.f32 %v4246, %v3837
        %v4297 = vmul.f32 %v4247, %v3839
        %v4298 = vmul.f32 %v4248, %v3841
        %v4299 = vmul.f32 %v4249, %v3843
        %v4300 = vmul.f32 %v4250, %v3845
        %v4301 = vmul.f32 %v4251, %v3847
        %v4302 = vmul.f32 %v4252, %v3849
        %v4303 = vmul.f32 %v4253, %v3851
        %v4304 = vmul.f32 %v4254, %v3853
        %v4305 = vmul.f32 %v4255, %v3855
        %v4306 = vsub.f32 0.0, %v3606
        %v4307 = vsub.f32 0.0, %v3607
        %v4308 = vsub.f32 0.0, %v3608
        %v4309 = vsub.f32 0.0, %v3609
        %v4310 = vsub.f32 0.0, %v3610
        %v4311 = vsub.f32 0.0, %v3611
        %v4312 = vsub.f32 0.0, %v3612
        %v4313 = vsub.f32 0.0, %v3613
        %v4314 = vsub.f32 0.0, %v3614
        %v4315 = vsub.f32 0.0, %v3615
        %v4316 = vsub.f32 0.0, %v3616
        %v4317 = vsub.f32 0.0, %v3617
        %v4318 = vsub.f32 0.0, %v3618
        %v4319 = vsub.f32 0.0, %v3619
        %v4320 = vsub.f32 0.0, %v3620
        %v4321 = vsub.f32 0.0, %v3621
        %v4322 = vsub.f32 0.0, %v3622
        %v4323 = vsub.f32 0.0, %v3623
        %v4324 = vsub.f32 0.0, %v3624
        %v4325 = vsub.f32 0.0, %v3625
        %v4326 = vsub.f32 0.0, %v3626
        %v4327 = vsub.f32 0.0, %v3627
        %v4328 = vsub.f32 0.0, %v3628
        %v4329 = vsub.f32 0.0, %v3629
        %v4330 = vsub.f32 0.0, %v3630
        %v4331 = vsub.f32 0.0, %v3631
        %v4332 = vsub.f32 0.0, %v3632
        %v4333 = vsub.f32 0.0, %v3633
        %v4334 = vsub.f32 0.0, %v3634
        %v4335 = vsub.f32 0.0, %v3635
        %v4336 = vsub.f32 0.0, %v3636
        %v4337 = vsub.f32 0.0, %v3637
        %v4338 = vsub.f32 0.0, %v3638
        %v4339 = vsub.f32 0.0, %v3639
        %v4340 = vsub.f32 0.0, %v3640
        %v4341 = vsub.f32 0.0, %v3641
        %v4342 = vsub.f32 0.0, %v3642
        %v4343 = vsub.f32 0.0, %v3643
        %v4344 = vsub.f32 0.0, %v3644
        %v4345 = vsub.f32 0.0, %v3645
        %v4346 = vsub.f32 0.0, %v3646
        %v4347 = vsub.f32 0.0, %v3647
        %v4348 = vsub.f32 0.0, %v3648
        %v4349 = vsub.f32 0.0, %v3649
        %v4350 = vsub.f32 0.0, %v3650
        %v4351 = vsub.f32 0.0, %v3651
        %v4352 = vsub.f32 0.0, %v3652
        %v4353 = vsub.f32 0.0, %v3653
        %v4354 = vsub.f32 0.0, %v3654
        %v4355 = vsub.f32 0.0, %v3655
        %v4356 = vmul.f32 %v4306, %v3606
        %v4357 = vmul.f32 %v4307, %v3607
        %v4358 = vmul.f32 %v4308, %v3608
        %v4359 = vmul.f32 %v4309, %v3609
        %v4360 = vmul.f32 %v4310, %v3610
        %v4361 = vmul.f32 %v4311, %v3611
        %v4362 = vmul.f32 %v4312, %v3612
        %v4363 = vmul.f32 %v4313, %v3613
        %v4364 = vmul.f32 %v4314, %v3614
        %v4365 = vmul.f32 %v4315, %v3615
        %v4366 = vmul.f32 %v4316, %v3616
        %v4367 = vmul.f32 %v4317, %v3617
        %v4368 = vmul.f32 %v4318, %v3618
        %v4369 = vmul.f32 %v4319, %v3619
        %v4370 = vmul.f32 %v4320, %v3620
        %v4371 = vmul.f32 %v4321, %v3621
        %v4372 = vmul.f32 %v4322, %v3622
        %v4373 = vmul.f32 %v4323, %v3623
        %v4374 = vmul.f32 %v4324, %v3624
        %v4375 = vmul.f32 %v4325, %v3625
        %v4376 = vmul.f32 %v4326, %v3626
        %v4377 = vmul.f32 %v4327, %v3627
        %v4378 = vmul.f32 %v4328, %v3628
        %v4379 = vmul.f32 %v4329, %v3629
        %v4380 = vmul.f32 %v4330, %v3630
        %v4381 = vmul.f32 %v4331, %v3631
        %v4382 = vmul.f32 %v4332, %v3632
        %v4383 = vmul.f32 %v4333, %v3633
        %v4384 = vmul.f32 %v4334, %v3634
        %v4385 = vmul.f32 %v4335, %v3635
        %v4386 = vmul.f32 %v4336, %v3636
        %v4387 = vmul.f32 %v4337, %v3637
        %v4388 = vmul.f32 %v4338, %v3638
        %v4389 = vmul.f32 %v4339, %v3639
        %v4390 = vmul.f32 %v4340, %v3640
        %v4391 = vmul.f32 %v4341, %v3641
        %v4392 = vmul.f32 %v4342, %v3642
        %v4393 = vmul.f32 %v4343, %v3643
        %v4394 = vmul.f32 %v4344, %v3644
        %v4395 = vmul.f32 %v4345, %v3645
        %v4396 = vmul.f32 %v4346, %v3646
        %v4397 = vmul.f32 %v4347, %v3647
        %v4398 = vmul.f32 %v4348, %v3648
        %v4399 = vmul.f32 %v4349, %v3649
        %v4400 = vmul.f32 %v4350, %v3650
        %v4401 = vmul.f32 %v4351, %v3651
        %v4402 = vmul.f32 %v4352, %v3652
        %v4403 = vmul.f32 %v4353, %v3653
        %v4404 = vmul.f32 %v4354, %v3654
        %v4405 = vmul.f32 %v4355, %v3655
        %v4406 = vmul.f32 %v4356, 1.442695
        %v4407 = vpow.pop %v4406
        %v4408 = vmul.f32 %v4357, 1.442695
        %v4409 = vpow.pop %v4408
        %v4410 = vmul.f32 %v4358, 1.442695
        %v4411 = vpow.pop %v4410
        %v4412 = vmul.f32 %v4359, 1.442695
        %v4413 = vpow.pop %v4412
        %v4414 = vmul.f32 %v4360, 1.442695
        %v4415 = vpow.pop %v4414
        %v4416 = vmul.f32 %v4361, 1.442695
        %v4417 = vpow.pop %v4416
        %v4418 = vmul.f32 %v4362, 1.442695
        %v4419 = vpow.pop %v4418
        %v4420 = vmul.f32 %v4363, 1.442695
        %v4421 = vpow.pop %v4420
        %v4422 = vmul.f32 %v4364, 1.442695
        %v4423 = vpow.pop %v4422
        %v4424 = vmul.f32 %v4365, 1.442695
        %v4425 = vpow.pop %v4424
        %v4426 = vmul.f32 %v4366, 1.442695
        %v4427 = vpow.pop %v4426
        %v4428 = vmul.f32 %v4367, 1.442695
        %v4429 = vpow.pop %v4428
        %v4430 = vmul.f32 %v4368, 1.442695
        %v4431 = vpow.pop %v4430
        %v4432 = vmul.f32 %v4369, 1.442695
        %v4433 = vpow.pop %v4432
        %v4434 = vmul.f32 %v4370, 1.442695
        %v4435 = vpow.pop %v4434
        %v4436 = vmul.f32 %v4371, 1.442695
        %v4437 = vpow.pop %v4436
        %v4438 = vmul.f32 %v4372, 1.442695
        %v4439 = vpow.pop %v4438
        %v4440 = vmul.f32 %v4373, 1.442695
        %v4441 = vpow.pop %v4440
        %v4442 = vmul.f32 %v4374, 1.442695
        %v4443 = vpow.pop %v4442
        %v4444 = vmul.f32 %v4375, 1.442695
        %v4445 = vpow.pop %v4444
        %v4446 = vmul.f32 %v4376, 1.442695
        %v4447 = vpow.pop %v4446
        %v4448 = vmul.f32 %v4377, 1.442695
        %v4449 = vpow.pop %v4448
        %v4450 = vmul.f32 %v4378, 1.442695
        %v4451 = vpow.pop %v4450
        %v4452 = vmul.f32 %v4379, 1.442695
        %v4453 = vpow.pop %v4452
        %v4454 = vmul.f32 %v4380, 1.442695
        %v4455 = vpow.pop %v4454
        %v4456 = vmul.f32 %v4381, 1.442695
        %v4457 = vpow.pop %v4456
        %v4458 = vmul.f32 %v4382, 1.442695
        %v4459 = vpow.pop %v4458
        %v4460 = vmul.f32 %v4383, 1.442695
        %v4461 = vpow.pop %v4460
        %v4462 = vmul.f32 %v4384, 1.442695
        %v4463 = vpow.pop %v4462
        %v4464 = vmul.f32 %v4385, 1.442695
        %v4465 = vpow.pop %v4464
        %v4466 = vmul.f32 %v4386, 1.442695
        %v4467 = vpow.pop %v4466
        %v4468 = vmul.f32 %v4387, 1.442695
        %v4469 = vpow.pop %v4468
        %v4470 = vmul.f32 %v4388, 1.442695
        %v4471 = vpow.pop %v4470
        %v4472 = vmul.f32 %v4389, 1.442695
        %v4473 = vpow.pop %v4472
        %v4474 = vmul.f32 %v4390, 1.442695
        %v4475 = vpow.pop %v4474
        %v4476 = vmul.f32 %v4391, 1.442695
        %v4477 = vpow.pop %v4476
        %v4478 = vmul.f32 %v4392, 1.442695
        %v4479 = vpow.pop %v4478
        %v4480 = vmul.f32 %v4393, 1.442695
        %v4481 = vpow.pop %v4480
        %v4482 = vmul.f32 %v4394, 1.442695
        %v4483 = vpow.pop %v4482
        %v4484 = vmul.f32 %v4395, 1.442695
        %v4485 = vpow.pop %v4484
        %v4486 = vmul.f32 %v4396, 1.442695
        %v4487 = vpow.pop %v4486
        %v4488 = vmul.f32 %v4397, 1.442695
        %v4489 = vpow.pop %v4488
        %v4490 = vmul.f32 %v4398, 1.442695
        %v4491 = vpow.pop %v4490
        %v4492 = vmul.f32 %v4399, 1.442695
        %v4493 = vpow.pop %v4492
        %v4494 = vmul.f32 %v4400, 1.442695
        %v4495 = vpow.pop %v4494
        %v4496 = vmul.f32 %v4401, 1.442695
        %v4497 = vpow.pop %v4496
        %v4498 = vmul.f32 %v4402, 1.442695
        %v4499 = vpow.pop %v4498
        %v4500 = vmul.f32 %v4403, 1.442695
        %v4501 = vpow.pop %v4500
        %v4502 = vmul.f32 %v4404, 1.442695
        %v4503 = vpow.pop %v4502
        %v4504 = vmul.f32 %v4405, 1.442695
        %v4505 = vpow.pop %v4504
        %v4506 = vmul.f32 %v4256, %v4407
        %v4507 = vmul.f32 %v4257, %v4409
        %v4508 = vmul.f32 %v4258, %v4411
        %v4509 = vmul.f32 %v4259, %v4413
        %v4510 = vmul.f32 %v4260, %v4415
        %v4511 = vmul.f32 %v4261, %v4417
        %v4512 = vmul.f32 %v4262, %v4419
        %v4513 = vmul.f32 %v4263, %v4421
        %v4514 = vmul.f32 %v4264, %v4423
        %v4515 = vmul.f32 %v4265, %v4425
        %v4516 = vmul.f32 %v4266, %v4427
        %v4517 = vmul.f32 %v4267, %v4429
        %v4518 = vmul.f32 %v4268, %v4431
        %v4519 = vmul.f32 %v4269, %v4433
        %v4520 = vmul.f32 %v4270, %v4435
        %v4521 = vmul.f32 %v4271, %v4437
        %v4522 = vmul.f32 %v4272, %v4439
        %v4523 = vmul.f32 %v4273, %v4441
        %v4524 = vmul.f32 %v4274, %v4443
        %v4525 = vmul.f32 %v4275, %v4445
        %v4526 = vmul.f32 %v4276, %v4447
        %v4527 = vmul.f32 %v4277, %v4449
        %v4528 = vmul.f32 %v4278, %v4451
        %v4529 = vmul.f32 %v4279, %v4453
        %v4530 = vmul.f32 %v4280, %v4455
        %v4531 = vmul.f32 %v4281, %v4457
        %v4532 = vmul.f32 %v4282, %v4459
        %v4533 = vmul.f32 %v4283, %v4461
        %v4534 = vmul.f32 %v4284, %v4463
        %v4535 = vmul.f32 %v4285, %v4465
        %v4536 = vmul.f32 %v4286, %v4467
        %v4537 = vmul.f32 %v4287, %v4469
        %v4538 = vmul.f32 %v4288, %v4471
        %v4539 = vmul.f32 %v4289, %v4473
        %v4540 = vmul.f32 %v4290, %v4475
        %v4541 = vmul.f32 %v4291, %v4477
        %v4542 = vmul.f32 %v4292, %v4479
        %v4543 = vmul.f32 %v4293, %v4481
        %v4544 = vmul.f32 %v4294, %v4483
        %v4545 = vmul.f32 %v4295, %v4485
        %v4546 = vmul.f32 %v4296, %v4487
        %v4547 = vmul.f32 %v4297, %v4489
        %v4548 = vmul.f32 %v4298, %v4491
        %v4549 = vmul.f32 %v4299, %v4493
        %v4550 = vmul.f32 %v4300, %v4495
        %v4551 = vmul.f32 %v4301, %v4497
        %v4552 = vmul.f32 %v4302, %v4499
        %v4553 = vmul.f32 %v4303, %v4501
        %v4554 = vmul.f32 %v4304, %v4503
        %v4555 = vmul.f32 %v4305, %v4505
        %v4556 = vsub.f32 1.0, %v4506
        %v4557 = vsub.f32 1.0, %v4507
        %v4558 = vsub.f32 1.0, %v4508
        %v4559 = vsub.f32 1.0, %v4509
        %v4560 = vsub.f32 1.0, %v4510
        %v4561 = vsub.f32 1.0, %v4511
        %v4562 = vsub.f32 1.0, %v4512
        %v4563 = vsub.f32 1.0, %v4513
        %v4564 = vsub.f32 1.0, %v4514
        %v4565 = vsub.f32 1.0, %v4515
        %v4566 = vsub.f32 1.0, %v4516
        %v4567 = vsub.f32 1.0, %v4517
        %v4568 = vsub.f32 1.0, %v4518
        %v4569 = vsub.f32 1.0, %v4519
        %v4570 = vsub.f32 1.0, %v4520
        %v4571 = vsub.f32 1.0, %v4521
        %v4572 = vsub.f32 1.0, %v4522
        %v4573 = vsub.f32 1.0, %v4523
        %v4574 = vsub.f32 1.0, %v4524
        %v4575 = vsub.f32 1.0, %v4525
        %v4576 = vsub.f32 1.0, %v4526
        %v4577 = vsub.f32 1.0, %v4527
        %v4578 = vsub.f32 1.0, %v4528
        %v4579 = vsub.f32 1.0, %v4529
        %v4580 = vsub.f32 1.0, %v4530
        %v4581 = vsub.f32 1.0, %v4531
        %v4582 = vsub.f32 1.0, %v4532
        %v4583 = vsub.f32 1.0, %v4533
        %v4584 = vsub.f32 1.0, %v4534
        %v4585 = vsub.f32 1.0, %v4535
        %v4586 = vsub.f32 1.0, %v4536
        %v4587 = vsub.f32 1.0, %v4537
        %v4588 = vsub.f32 1.0, %v4538
        %v4589 = vsub.f32 1.0, %v4539
        %v4590 = vsub.f32 1.0, %v4540
        %v4591 = vsub.f32 1.0, %v4541
        %v4592 = vsub.f32 1.0, %v4542
        %v4593 = vsub.f32 1.0, %v4543
        %v4594 = vsub.f32 1.0, %v4544
        %v4595 = vsub.f32 1.0, %v4545
        %v4596 = vsub.f32 1.0, %v4546
        %v4597 = vsub.f32 1.0, %v4547
        %v4598 = vsub.f32 1.0, %v4548
        %v4599 = vsub.f32 1.0, %v4549
        %v4600 = vsub.f32 1.0, %v4550
        %v4601 = vsub.f32 1.0, %v4551
        %v4602 = vsub.f32 1.0, %v4552
        %v4603 = vsub.f32 1.0, %v4553
        %v4604 = vsub.f32 1.0, %v4554
        %v4605 = vsub.f32 1.0, %v4555
        %vm4606 = vcmp.lt.f32.partialorder %v3556, 0.0
        %vm4607 = vcmp.lt.f32.partialorder %v3557, 0.0
        %vm4608 = vcmp.lt.f32.partialorder %v3558, 0.0
        %vm4609 = vcmp.lt.f32.partialorder %v3559, 0.0
        %vm4610 = vcmp.lt.f32.partialorder %v3560, 0.0
        %vm4611 = vcmp.lt.f32.partialorder %v3561, 0.0
        %vm4612 = vcmp.lt.f32.partialorder %v3562, 0.0
        %vm4613 = vcmp.lt.f32.partialorder %v3563, 0.0
        %vm4614 = vcmp.lt.f32.partialorder %v3564, 0.0
        %vm4615 = vcmp.lt.f32.partialorder %v3565, 0.0
        %vm4616 = vcmp.lt.f32.partialorder %v3566, 0.0
        %vm4617 = vcmp.lt.f32.partialorder %v3567, 0.0
        %vm4618 = vcmp.lt.f32.partialorder %v3568, 0.0
        %vm4619 = vcmp.lt.f32.partialorder %v3569, 0.0
        %vm4620 = vcmp.lt.f32.partialorder %v3570, 0.0
        %vm4621 = vcmp.lt.f32.partialorder %v3571, 0.0
        %vm4622 = vcmp.lt.f32.partialorder %v3572, 0.0
        %vm4623 = vcmp.lt.f32.partialorder %v3573, 0.0
        %vm4624 = vcmp.lt.f32.partialorder %v3574, 0.0
        %vm4625 = vcmp.lt.f32.partialorder %v3575, 0.0
        %vm4626 = vcmp.lt.f32.partialorder %v3576, 0.0
        %vm4627 = vcmp.lt.f32.partialorder %v3577, 0.0
        %vm4628 = vcmp.lt.f32.partialorder %v3578, 0.0
        %vm4629 = vcmp.lt.f32.partialorder %v3579, 0.0
        %vm4630 = vcmp.lt.f32.partialorder %v3580, 0.0
        %vm4631 = vcmp.lt.f32.partialorder %v3581, 0.0
        %vm4632 = vcmp.lt.f32.partialorder %v3582, 0.0
        %vm4633 = vcmp.lt.f32.partialorder %v3583, 0.0
        %vm4634 = vcmp.lt.f32.partialorder %v3584, 0.0
        %vm4635 = vcmp.lt.f32.partialorder %v3585, 0.0
        %vm4636 = vcmp.lt.f32.partialorder %v3586, 0.0
        %vm4637 = vcmp.lt.f32.partialorder %v3587, 0.0
        %vm4638 = vcmp.lt.f32.partialorder %v3588, 0.0
        %vm4639 = vcmp.lt.f32.partialorder %v3589, 0.0
        %vm4640 = vcmp.lt.f32.partialorder %v3590, 0.0
        %vm4641 = vcmp.lt.f32.partialorder %v3591, 0.0
        %vm4642 = vcmp.lt.f32.partialorder %v3592, 0.0
        %vm4643 = vcmp.lt.f32.partialorder %v3593, 0.0
        %vm4644 = vcmp.lt.f32.partialorder %v3594, 0.0
        %vm4645 = vcmp.lt.f32.partialorder %v3595, 0.0
        %vm4646 = vcmp.lt.f32.partialorder %v3596, 0.0
        %vm4647 = vcmp.lt.f32.partialorder %v3597, 0.0
        %vm4648 = vcmp.lt.f32.partialorder %v3598, 0.0
        %vm4649 = vcmp.lt.f32.partialorder %v3599, 0.0
        %vm4650 = vcmp.lt.f32.partialorder %v3600, 0.0
        %vm4651 = vcmp.lt.f32.partialorder %v3601, 0.0
        %vm4652 = vcmp.lt.f32.partialorder %v3602, 0.0
        %vm4653 = vcmp.lt.f32.partialorder %v3603, 0.0
        %vm4654 = vcmp.lt.f32.partialorder %v3604, 0.0
        %vm4655 = vcmp.lt.f32.partialorder %v3605, 0.0
        %v4656 = vsub.f32 0.0, %v4556
        %v4657 = vsub.f32 0.0, %v4557
        %v4658 = vsub.f32 0.0, %v4558
        %v4659 = vsub.f32 0.0, %v4559
        %v4660 = vsub.f32 0.0, %v4560
        %v4661 = vsub.f32 0.0, %v4561
        %v4662 = vsub.f32 0.0, %v4562
        %v4663 = vsub.f32 0.0, %v4563
        %v4664 = vsub.f32 0.0, %v4564
        %v4665 = vsub.f32 0.0, %v4565
        %v4666 = vsub.f32 0.0, %v4566
        %v4667 = vsub.f32 0.0, %v4567
        %v4668 = vsub.f32 0.0, %v4568
        %v4669 = vsub.f32 0.0, %v4569
        %v4670 = vsub.f32 0.0, %v4570
        %v4671 = vsub.f32 0.0, %v4571
        %v4672 = vsub.f32 0.0, %v4572
        %v4673 = vsub.f32 0.0, %v4573
        %v4674 = vsub.f32 0.0, %v4574
        %v4675 = vsub.f32 0.0, %v4575
        %v4676 = vsub.f32 0.0, %v4576
        %v4677 = vsub.f32 0.0, %v4577
        %v4678 = vsub.f32 0.0, %v4578
        %v4679 = vsub.f32 0.0, %v4579
        %v4680 = vsub.f32 0.0, %v4580
        %v4681 = vsub.f32 0.0, %v4581
        %v4682 = vsub.f32 0.0, %v4582
        %v4683 = vsub.f32 0.0, %v4583
        %v4684 = vsub.f32 0.0, %v4584
        %v4685 = vsub.f32 0.0, %v4585
        %v4686 = vsub.f32 0.0, %v4586
        %v4687 = vsub.f32 0.0, %v4587
        %v4688 = vsub.f32 0.0, %v4588
        %v4689 = vsub.f32 0.0, %v4589
        %v4690 = vsub.f32 0.0, %v4590
        %v4691 = vsub.f32 0.0, %v4591
        %v4692 = vsub.f32 0.0, %v4592
        %v4693 = vsub.f32 0.0, %v4593
        %v4694 = vsub.f32 0.0, %v4594
        %v4695 = vsub.f32 0.0, %v4595
        %v4696 = vsub.f32 0.0, %v4596
        %v4697 = vsub.f32 0.0, %v4597
        %v4698 = vsub.f32 0.0, %v4598
        %v4699 = vsub.f32 0.0, %v4599
        %v4700 = vsub.f32 0.0, %v4600
        %v4701 = vsub.f32 0.0, %v4601
        %v4702 = vsub.f32 0.0, %v4602
        %v4703 = vsub.f32 0.0, %v4603
        %v4704 = vsub.f32 0.0, %v4604
        %v4705 = vsub.f32 0.0, %v4605
        %v4706 = vsel %vm4606, %v4656, %v4556
        %v4707 = vsel %vm4607, %v4657, %v4557
        %v4708 = vsel %vm4608, %v4658, %v4558
        %v4709 = vsel %vm4609, %v4659, %v4559
        %v4710 = vsel %vm4610, %v4660, %v4560
        %v4711 = vsel %vm4611, %v4661, %v4561
        %v4712 = vsel %vm4612, %v4662, %v4562
        %v4713 = vsel %vm4613, %v4663, %v4563
        %v4714 = vsel %vm4614, %v4664, %v4564
        %v4715 = vsel %vm4615, %v4665, %v4565
        %v4716 = vsel %vm4616, %v4666, %v4566
        %v4717 = vsel %vm4617, %v4667, %v4567
        %v4718 = vsel %vm4618, %v4668, %v4568
        %v4719 = vsel %vm4619, %v4669, %v4569
        %v4720 = vsel %vm4620, %v4670, %v4570
        %v4721 = vsel %vm4621, %v4671, %v4571
        %v4722 = vsel %vm4622, %v4672, %v4572
        %v4723 = vsel %vm4623, %v4673, %v4573
        %v4724 = vsel %vm4624, %v4674, %v4574
        %v4725 = vsel %vm4625, %v4675, %v4575
        %v4726 = vsel %vm4626, %v4676, %v4576
        %v4727 = vsel %vm4627, %v4677, %v4577
        %v4728 = vsel %vm4628, %v4678, %v4578
        %v4729 = vsel %vm4629, %v4679, %v4579
        %v4730 = vsel %vm4630, %v4680, %v4580
        %v4731 = vsel %vm4631, %v4681, %v4581
        %v4732 = vsel %vm4632, %v4682, %v4582
        %v4733 = vsel %vm4633, %v4683, %v4583
        %v4734 = vsel %vm4634, %v4684, %v4584
        %v4735 = vsel %vm4635, %v4685, %v4585
        %v4736 = vsel %vm4636, %v4686, %v4586
        %v4737 = vsel %vm4637, %v4687, %v4587
        %v4738 = vsel %vm4638, %v4688, %v4588
        %v4739 = vsel %vm4639, %v4689, %v4589
        %v4740 = vsel %vm4640, %v4690, %v4590
        %v4741 = vsel %vm4641, %v4691, %v4591
        %v4742 = vsel %vm4642, %v4692, %v4592
        %v4743 = vsel %vm4643, %v4693, %v4593
        %v4744 = vsel %vm4644, %v4694, %v4594
        %v4745 = vsel %vm4645, %v4695, %v4595
        %v4746 = vsel %vm4646, %v4696, %v4596
        %v4747 = vsel %vm4647, %v4697, %v4597
        %v4748 = vsel %vm4648, %v4698, %v4598
        %v4749 = vsel %vm4649, %v4699, %v4599
        %v4750 = vsel %vm4650, %v4700, %v4600
        %v4751 = vsel %vm4651, %v4701, %v4601
        %v4752 = vsel %vm4652, %v4702, %v4602
        %v4753 = vsel %vm4653, %v4703, %v4603
        %v4754 = vsel %vm4654, %v4704, %v4604
        %v4755 = vsel %vm4655, %v4705, %v4605
        %v4756 = vadd.f32 %v4706, 1.0
        %v4757 = vadd.f32 %v4707, 1.0
        %v4758 = vadd.f32 %v4708, 1.0
        %v4759 = vadd.f32 %v4709, 1.0
        %v4760 = vadd.f32 %v4710, 1.0
        %v4761 = vadd.f32 %v4711, 1.0
        %v4762 = vadd.f32 %v4712, 1.0
        %v4763 = vadd.f32 %v4713, 1.0
        %v4764 = vadd.f32 %v4714, 1.0
        %v4765 = vadd.f32 %v4715, 1.0
        %v4766 = vadd.f32 %v4716, 1.0
        %v4767 = vadd.f32 %v4717, 1.0
        %v4768 = vadd.f32 %v4718, 1.0
        %v4769 = vadd.f32 %v4719, 1.0
        %v4770 = vadd.f32 %v4720, 1.0
        %v4771 = vadd.f32 %v4721, 1.0
        %v4772 = vadd.f32 %v4722, 1.0
        %v4773 = vadd.f32 %v4723, 1.0
        %v4774 = vadd.f32 %v4724, 1.0
        %v4775 = vadd.f32 %v4725, 1.0
        %v4776 = vadd.f32 %v4726, 1.0
        %v4777 = vadd.f32 %v4727, 1.0
        %v4778 = vadd.f32 %v4728, 1.0
        %v4779 = vadd.f32 %v4729, 1.0
        %v4780 = vadd.f32 %v4730, 1.0
        %v4781 = vadd.f32 %v4731, 1.0
        %v4782 = vadd.f32 %v4732, 1.0
        %v4783 = vadd.f32 %v4733, 1.0
        %v4784 = vadd.f32 %v4734, 1.0
        %v4785 = vadd.f32 %v4735, 1.0
        %v4786 = vadd.f32 %v4736, 1.0
        %v4787 = vadd.f32 %v4737, 1.0
        %v4788 = vadd.f32 %v4738, 1.0
        %v4789 = vadd.f32 %v4739, 1.0
        %v4790 = vadd.f32 %v4740, 1.0
        %v4791 = vadd.f32 %v4741, 1.0
        %v4792 = vadd.f32 %v4742, 1.0
        %v4793 = vadd.f32 %v4743, 1.0
        %v4794 = vadd.f32 %v4744, 1.0
        %v4795 = vadd.f32 %v4745, 1.0
        %v4796 = vadd.f32 %v4746, 1.0
        %v4797 = vadd.f32 %v4747, 1.0
        %v4798 = vadd.f32 %v4748, 1.0
        %v4799 = vadd.f32 %v4749, 1.0
        %v4800 = vadd.f32 %v4750, 1.0
        %v4801 = vadd.f32 %v4751, 1.0
        %v4802 = vadd.f32 %v4752, 1.0
        %v4803 = vadd.f32 %v4753, 1.0
        %v4804 = vadd.f32 %v4754, 1.0
        %v4805 = vadd.f32 %v4755, 1.0
        %v4806 = vmul.f32 %v3506, %v4756
        %v4807 = vmul.f32 %v3507, %v4757
        %v4808 = vmul.f32 %v3508, %v4758
        %v4809 = vmul.f32 %v3509, %v4759
        %v4810 = vmul.f32 %v3510, %v4760
        %v4811 = vmul.f32 %v3511, %v4761
        %v4812 = vmul.f32 %v3512, %v4762
        %v4813 = vmul.f32 %v3513, %v4763
        %v4814 = vmul.f32 %v3514, %v4764
        %v4815 = vmul.f32 %v3515, %v4765
        %v4816 = vmul.f32 %v3516, %v4766
        %v4817 = vmul.f32 %v3517, %v4767
        %v4818 = vmul.f32 %v3518, %v4768
        %v4819 = vmul.f32 %v3519, %v4769
        %v4820 = vmul.f32 %v3520, %v4770
        %v4821 = vmul.f32 %v3521, %v4771
        %v4822 = vmul.f32 %v3522, %v4772
        %v4823 = vmul.f32 %v3523, %v4773
        %v4824 = vmul.f32 %v3524, %v4774
        %v4825 = vmul.f32 %v3525, %v4775
        %v4826 = vmul.f32 %v3526, %v4776
        %v4827 = vmul.f32 %v3527, %v4777
        %v4828 = vmul.f32 %v3528, %v4778
        %v4829 = vmul.f32 %v3529, %v4779
        %v4830 = vmul.f32 %v3530, %v4780
        %v4831 = vmul.f32 %v3531, %v4781
        %v4832 = vmul.f32 %v3532, %v4782
        %v4833 = vmul.f32 %v3533, %v4783
        %v4834 = vmul.f32 %v3534, %v4784
        %v4835 = vmul.f32 %v3535, %v4785
        %v4836 = vmul.f32 %v3536, %v4786
        %v4837 = vmul.f32 %v3537, %v4787
        %v4838 = vmul.f32 %v3538, %v4788
        %v4839 = vmul.f32 %v3539, %v4789
        %v4840 = vmul.f32 %v3540, %v4790
        %v4841 = vmul.f32 %v3541, %v4791
        %v4842 = vmul.f32 %v3542, %v4792
        %v4843 = vmul.f32 %v3543, %v4793
        %v4844 = vmul.f32 %v3544, %v4794
        %v4845 = vmul.f32 %v3545, %v4795
        %v4846 = vmul.f32 %v3546, %v4796
        %v4847 = vmul.f32 %v3547, %v4797
        %v4848 = vmul.f32 %v3548, %v4798
        %v4849 = vmul.f32 %v3549, %v4799
        %v4850 = vmul.f32 %v3550, %v4800
        %v4851 = vmul.f32 %v3551, %v4801
        %v4852 = vmul.f32 %v3552, %v4802
        %v4853 = vmul.f32 %v3553, %v4803
        %v4854 = vmul.f32 %v3554, %v4804
        %v4855 = vmul.f32 %v3555, %v4805
        %4856 = vst [vmem:[%s348] sm:$0xff] %v4806
        %4857 = vst [vmem:[%s348 + $0x8] sm:$0xff] %v4807
        %4858 = vst [vmem:[%s348 + $0x10] sm:$0xff] %v4808
        %4859 = vst [vmem:[%s348 + $0x18] sm:$0xff] %v4809
        %4860 = vst [vmem:[%s348 + $0x20] sm:$0xff] %v4810
        %4861 = vst [vmem:[%s348 + $0x28] sm:$0xff] %v4811
        %4862 = vst [vmem:[%s348 + $0x30] sm:$0xff] %v4812
        %4863 = vst [vmem:[%s348 + $0x38] sm:$0xff] %v4813
        %4864 = vst [vmem:[%s348 + $0x40] sm:$0xff] %v4814
        %4865 = vst [vmem:[%s348 + $0x48] sm:$0xff] %v4815
        %4866 = vst [vmem:[%s348 + $0x50] sm:$0xff] %v4816
        %4867 = vst [vmem:[%s348 + $0x58] sm:$0xff] %v4817
        %4868 = vst [vmem:[%s348 + $0x60] sm:$0xff] %v4818
        %4869 = vst [vmem:[%s348 + $0x68] sm:$0xff] %v4819
        %4870 = vst [vmem:[%s348 + $0x70] sm:$0xff] %v4820
        %4871 = vst [vmem:[%s348 + $0x78] sm:$0xff] %v4821
        %4872 = vst [vmem:[%s348 + $0x80] sm:$0xff] %v4822
        %4873 = vst [vmem:[%s348 + $0x88] sm:$0xff] %v4823
        %4874 = vst [vmem:[%s348 + $0x90] sm:$0xff] %v4824
        %4875 = vst [vmem:[%s348 + $0x98] sm:$0xff] %v4825
        %4876 = vst [vmem:[%s348 + $0xa0] sm:$0xff] %v4826
        %4877 = vst [vmem:[%s348 + $0xa8] sm:$0xff] %v4827
        %4878 = vst [vmem:[%s348 + $0xb0] sm:$0xff] %v4828
        %4879 = vst [vmem:[%s348 + $0xb8] sm:$0xff] %v4829
        %4880 = vst [vmem:[%s348 + $0xc0] sm:$0xff] %v4830
        %4881 = vst [vmem:[%s348 + $0xc8] sm:$0xff] %v4831
        %4882 = vst [vmem:[%s348 + $0xd0] sm:$0xff] %v4832
        %4883 = vst [vmem:[%s348 + $0xd8] sm:$0xff] %v4833
        %4884 = vst [vmem:[%s348 + $0xe0] sm:$0xff] %v4834
        %4885 = vst [vmem:[%s348 + $0xe8] sm:$0xff] %v4835
        %4886 = vst [vmem:[%s348 + $0xf0] sm:$0xff] %v4836
        %4887 = vst [vmem:[%s348 + $0xf8] sm:$0xff] %v4837
        %4888 = vst [vmem:[%s348 + $0x100] sm:$0xff] %v4838
        %4889 = vst [vmem:[%s348 + $0x108] sm:$0xff] %v4839
        %4890 = vst [vmem:[%s348 + $0x110] sm:$0xff] %v4840
        %4891 = vst [vmem:[%s348 + $0x118] sm:$0xff] %v4841
        %4892 = vst [vmem:[%s348 + $0x120] sm:$0xff] %v4842
        %4893 = vst [vmem:[%s348 + $0x128] sm:$0xff] %v4843
        %4894 = vst [vmem:[%s348 + $0x130] sm:$0xff] %v4844
        %4895 = vst [vmem:[%s348 + $0x138] sm:$0xff] %v4845
        %4896 = vst [vmem:[%s348 + $0x140] sm:$0xff] %v4846
        %4897 = vst [vmem:[%s348 + $0x148] sm:$0xff] %v4847
        %4898 = vst [vmem:[%s348 + $0x150] sm:$0xff] %v4848
        %4899 = vst [vmem:[%s348 + $0x158] sm:$0xff] %v4849
        %4900 = vst [vmem:[%s348 + $0x160] sm:$0xff] %v4850
        %4901 = vst [vmem:[%s348 + $0x168] sm:$0xff] %v4851
        %4902 = vst [vmem:[%s348 + $0x170] sm:$0xff] %v4852
        %4903 = vst [vmem:[%s348 + $0x178] sm:$0xff] %v4853
        %4904 = vst [vmem:[%s348 + $0x180] sm:$0xff] %v4854
        %4905 = vst [vmem:[%s348 + $0x188] sm:$0xff] %v4855
        %p4906 = scmp.lt.s32.totalorder %s22, 1
        %s4907 = scalar_select %p4906, %s22, 1
        %s4908 = smul.addr %s4907, 16
        %s4909 = smul.addr %s4908, 8
        %s4910 = scalar_lea.vmem %s7, %s4909
        %p4911 = scmp.lt.s32.totalorder %s22, 1
        %s4912 = scalar_select %p4911, %s22, 1
        %s4913 = smul.addr %s4912, 50
        %s4914 = smul.addr %s4913, 8
        %s4915 = scalar_lea.vmem %s8, %s4914
        // Predicated region
        $region57: #{decoder_forward.1} parent=47 // pred_check
          %p4916 = pneg %p192
        $region58: #{decoder_forward.1} parent=47 // pred_check_branch
          %4918 = sbr.rel (%p4916) target = $region60
        $region59: #{decoder_forward.1} parent=47 // pred_region
          _
        $region60: #{decoder_forward.1} parent=47 // pred_fallthru
          _
        // Predicated region
        $region61: #{decoder_forward.1} parent=47 // pred_check
          %p4919 = pneg %p218
        $region62: #{decoder_forward.1} parent=47 // pred_check_branch
          %4921 = sbr.rel (%p4919) target = $region64
        $region63: #{decoder_forward.1} parent=47 // pred_region
          _
        $region64: #{decoder_forward.1} parent=47 // pred_fallthru
          _
      $region48: #{decoder_forward.1} parent=5 // pred_fallthru
        _
      %p4922 = scmp.le.s32.totalorder 2, %s17
      // Predicated region
      $region65: #{decoder_forward.1} parent=5 // pred_check
        %p4923 = pneg %p4922
      $region66: #{decoder_forward.1} parent=5 // pred_check_branch
        %4925 = sbr.rel (%p4923) target = $region68
      $region67: #{decoder_forward.1} parent=5 // pred_region
        %s4926 = ssub.s32 %s17, 2
        // Predicated region
        $region69: #{decoder_forward.1} parent=67 // pred_check
          %p4927 = pneg %p198
        $region70: #{decoder_forward.1} parent=67 // pred_check_branch
          %4929 = sbr.rel (%p4927) target = $region72
        $region71: #{decoder_forward.1} parent=67 // pred_region
          %p4930 = scmp.lt.s32.totalorder %s23, 1
          %s4931 = scalar_select %p4930, %s23, 1
          %s4932 = smul.addr %s4931, 16
          %s4933 = smul.addr %s4932, 8
          %s4934 = scalar_lea.vmem %s7, %s4933
        $region72: #{decoder_forward.1} parent=67 // pred_fallthru
          _
        // Predicated region
        $region73: #{decoder_forward.1} parent=67 // pred_check
          %p4935 = pneg %p224
        $region74: #{decoder_forward.1} parent=67 // pred_check_branch
          %4937 = sbr.rel (%p4935) target = $region76
        $region75: #{decoder_forward.1} parent=67 // pred_region
          %p4938 = scmp.lt.s32.totalorder %s23, 1
          %s4939 = scalar_select %p4938, %s23, 1
          %s4940 = smul.addr %s4939, 50
          %s4941 = smul.addr %s4940, 8
          %s4942 = scalar_lea.vmem %s8, %s4941
        $region76: #{decoder_forward.1} parent=67 // pred_fallthru
          _
      $region68: #{decoder_forward.1} parent=5 // pred_fallthru
        _
    $region6: #{decoder_forward.1} parent=1 // loop_footer
      %s21 = sadd.s32 1, %s17
    $region7: #{decoder_forward.1} parent=1 // loop_footer_branch
      %16 = sbr.rel target = $region3
    $region8: #{decoder_forward.1} parent=1 // loop_exit
      _
    %4943 = vsyncpa [#allocation3], 1
    %s4944 = scalar_lea.sflag [#allocation3], 1
    %4945 = vsyncpa %s4944, 1
    %4946 = vsyncpa [#allocation5], 1

</llo_original>
